<compile_context>
chip_gen: v5e
topology: v5e:2x2
jax: 0.10.0
libtpu: 0.0.40
codegen_flags: <defaults>
</compile_context>

<pallas_src>
import functools
import math

import jax
import jax.numpy as jnp
from jax import lax
from jax.experimental import pallas as pl
from jax.experimental.pallas import tpu as pltpu


def gated_attn_kernel(x_ref, pe_ref, w1_ref, b1_ref, w2_ref, b2_ref, o_ref,
                      *, heads, d_head, bf16_softmax):
    # x_ref : (1, C, L)   pe_ref : (C, L)
    # w1_ref: (3F, C)     b1_ref : (3F, 1)
    # w2_ref: (2C, F)     b2_ref : (2C, 1)
    # o_ref : (1, C, L)
    C, L = pe_ref.shape
    F = heads * d_head

    x = x_ref[0]                                   # (C, L) f32
    xp = x + pe_ref[...]                           # x + pos_emb

    # conv1 (kernel size 1) == channel matmul; contraction depth C is tiny,
    # keep f32 operands, f32 accumulation.
    params = jnp.dot(w1_ref[...], xp,
                     preferred_element_type=jnp.float32) + b1_ref[...]   # (3F, L)

    inv_sqrt_d = 1.0 / math.sqrt(d_head)

    # 8-sublane-aligned block slices; fold the 1/sqrt(D) scale into V in f32,
    # then cast the MXU operands to bf16 (the MXU is bf16-native on
    # v5e/v6e/v7x; f32 operands are decomposed into multiple bf16 passes).
    v = (params[0 * F:1 * F] * inv_sqrt_d).astype(jnp.bfloat16) \
        .reshape(heads, d_head, L)                               # (H, D, L)
    k = params[1 * F:2 * F].astype(jnp.bfloat16) \
        .reshape(heads, d_head, L)                               # (H, D, L)
    q = params[2 * F:3 * F].astype(jnp.bfloat16) \
        .reshape(heads, d_head, L)                               # (H, D, L)

    # Logits for all heads in one head-batched bf16 matmul, f32 accumulation:
    #   s[h, i, j] = sum_d v[h, d, i] * k[h, d, j]      -> (H, L, L) f32
    s = lax.dot_general(v, k, (((1,), (1,)), ((0,), (0,))),
                        preferred_element_type=jnp.float32)

    # Softmax over the first L axis (torch F.softmax(..., dim=2)).
    m = jnp.max(s, axis=1, keepdims=True)                 # (H, 1, L) f32
    if bf16_softmax:
        # v6e / v7x: bf16 EUP -> ~2x exp throughput, halves the live probs.
        p = jnp.exp((s - m).astype(jnp.bfloat16))          # (H, L, L) bf16
    else:
        # v5e: no bf16 VPU/EUP -> keep exp in f32, single cast for the MXU.
        p = jnp.exp(s - m).astype(jnp.bfloat16)            # (H, L, L) bf16

    # Numerator and denominator from the SAME bf16 probs in one MXU pass:
    # append a ones-row to Q so the extra output row is sum_l p[h, l, m].
    ones_row = jnp.ones((heads, 1, L), jnp.bfloat16)
    q_aug = jnp.concatenate([q, ones_row], axis=1)         # (H, D+1, L)
    a_aug = lax.dot_general(q_aug, p, (((2,), (1,)), ((0,), (0,))),
                            preferred_element_type=jnp.float32)  # (H, D+1, L)

    a_un = a_aug[:, :d_head, :]                            # (H, D, L) f32
    denom = a_aug[:, d_head:, :]                           # (H, 1, L) f32 (>= 1)
    a = a_un * pl.reciprocal(denom, approx=True)           # normalize (EUP)

    # conv2 (kernel size 1) == channel matmul on the flattened heads.
    # (The (H, D, L) -> (F, L) regroup is a tiny 8x256 sublane shuffle.)
    a2 = a.reshape(F, L)                                   # (F, L)
    y = jnp.dot(w2_ref[...], a2,
                preferred_element_type=jnp.float32) + b2_ref[...]  # (2C, L)

    # 8-row-aligned split; sigmoid goes to the EUP, multiply/add on the VPU.
    y_main = y[:C, :]
    gate = y[C:, :]
    o_ref[0] = (x + y_main * jax.nn.sigmoid(gate)).astype(o_ref.dtype)


def _default_bf16_softmax():
    # bf16 elementwise exp is only a win where the VPU/EUP are bf16-capable
    # (v6e, v7x and later).  On older parts keep the softmax math in f32.
    try:
        kind = jax.devices()[0].device_kind.lower()
    except Exception:
        return True
    return not any(tag in kind for tag in ("v2", "v3", "v4", "v5"))


def gated_attn(x, pos_emb, w1, b1, w2, b2, *, heads, bf16_softmax=None):
    """x: (B, C, H, W); pos_emb: (1, C, H, W); w1: (3F, C); b1: (3F,);
       w2: (2C, F); b2: (2C,). Returns (B, C, H, W)."""
    B, C, H, W = x.shape
    L = H * W
    filters = w1.shape[0] // 3
    d_head = filters // heads
    assert filters == C, "module is only consistent when channels == filters"
    assert filters % heads == 0
    if bf16_softmax is None:
        bf16_softmax = _default_bf16_softmax()

    x2 = x.reshape(B, C, L)
    pe2 = pos_emb.reshape(C, L)
    b1c = b1.reshape(-1, 1)
    b2c = b2.reshape(-1, 1)

    kernel = functools.partial(gated_attn_kernel, heads=heads, d_head=d_head,
                               bf16_softmax=bf16_softmax)

    # Advisory cost hint so XLA schedules/overlaps the custom call correctly.
    flops = B * (2 * (3 * filters) * C * L              # conv1
                 + 2 * heads * d_head * L * L           # logits (V^T K)
                 + 2 * heads * (d_head + 1) * L * L     # Q@P (+denominator row)
                 + 2 * (2 * C) * filters * L)           # conv2
    transcendentals = B * (heads * L * L                # exp
                           + C * L                      # sigmoid
                           + heads * L)                 # reciprocal
    bytes_accessed = 4 * (2 * B * C * L + C * L
                          + 3 * filters * C + 3 * filters
                          + 2 * C * filters + 2 * C)
    cost = pl.CostEstimate(flops=int(flops),
                           transcendentals=int(transcendentals),
                           bytes_accessed=int(bytes_accessed))

    out = pl.pallas_call(
        kernel,
        out_shape=jax.ShapeDtypeStruct((B, C, L), x.dtype),
        grid_spec=pltpu.PrefetchScalarGridSpec(
            num_scalar_prefetch=0,
            grid=(B,),
            in_specs=[
                pl.BlockSpec((1, C, L), lambda b: (b, 0, 0)),          # x
                pl.BlockSpec((C, L), lambda b: (0, 0)),                # pos_emb
                pl.BlockSpec((3 * filters, C), lambda b: (0, 0)),      # conv1 weight
                pl.BlockSpec((3 * filters, 1), lambda b: (0, 0)),      # conv1 bias
                pl.BlockSpec((2 * C, filters), lambda b: (0, 0)),      # conv2 weight
                pl.BlockSpec((2 * C, 1), lambda b: (0, 0)),            # conv2 bias
            ],
            out_specs=pl.BlockSpec((1, C, L), lambda b: (b, 0, 0)),
        ),
        # Batch steps are fully independent -> let v7x split them across its
        # two TensorCores; harmless on single-TC v5e/v6e.
        compiler_params=pltpu.CompilerParams(
            dimension_semantics=("parallel",)),
        cost_estimate=cost,
    )(x2, pe2, w1, b1c, w2, b2c)
    return out.reshape(B, C, H, W)


def gated_attn_ref(x, pos_emb, w1, b1, w2, b2, heads, *,
                   match_kernel=False, bf16_softmax=True):
    """Pure-JAX reference mirroring the PyTorch forward.

    match_kernel=True applies the same intentional bf16 rounding of V/K/Q and
    of the softmax probabilities that the kernel uses (f32 accumulation, f32
    scale fold before the cast), for a tight apples-to-apples check."""
    B, C, H, W = x.shape
    L = H * W
    filters = w1.shape[0] // 3
    D = filters // heads
    inv_sqrt_d = 1.0 / math.sqrt(D)
    xr = (x + pos_emb).reshape(B, C, L)
    params = jnp.einsum('oc,bcl->bol', w1, xr) + b1[None, :, None]
    params = params.reshape(B, 3 * heads, D, L)
    V, K, Q = params[:, :heads], params[:, heads:2 * heads], params[:, 2 * heads:]
    if match_kernel:
        Vb = (V * inv_sqrt_d).astype(jnp.bfloat16)
        Kb = K.astype(jnp.bfloat16)
        S = jnp.einsum('bhdl,bhdm->bhlm', Vb, Kb,
                       preferred_element_type=jnp.float32)
        m = jnp.max(S, axis=2, keepdims=True)
        if bf16_softmax:
            P = jnp.exp((S - m).astype(jnp.bfloat16))
        else:
            P = jnp.exp(S - m).astype(jnp.bfloat16)
        num = jnp.einsum('bhdl,bhlm->bhdm', Q.astype(jnp.bfloat16), P,
                         preferred_element_type=jnp.float32)
        denom = jnp.sum(P.astype(jnp.float32), axis=2, keepdims=True)
        A = num / denom
    else:
        S = jnp.einsum('bhdl,bhdm->bhlm', V, K) * inv_sqrt_d
        P = jax.nn.softmax(S, axis=2)
        A = jnp.einsum('bhdl,bhlm->bhdm', Q, P)
    A = A.reshape(B, C, L)
    y = jnp.einsum('of,bfl->bol', w2, A) + b2[None, :, None]
    y1, g = y[:, :C], y[:, C:]
    out = y1 * jax.nn.sigmoid(g)
    return x + out.reshape(B, C, H, W)


if __name__ == "__main__":
    B, C, H, W = 2, 8, 16, 16          # in_out_shape = (8, 16, 16)
    filters, heads = 8, 4              # filters % heads == 0, D = 2

    key = jax.random.PRNGKey(0)
    ks = jax.random.split(key, 6)
    x = jax.random.normal(ks[0], (B, C, H, W), jnp.float32)
    pos_emb = jax.random.normal(ks[1], (1, C, H, W), jnp.float32) * 0.01
    w1 = jax.random.normal(ks[2], (3 * filters, C), jnp.float32) / math.sqrt(C)
    b1 = jax.random.normal(ks[3], (3 * filters,), jnp.float32) * 0.01
    w2 = jax.random.normal(ks[4], (2 * C, filters), jnp.float32) / math.sqrt(filters)
    b2 = jax.random.normal(ks[5], (2 * C,), jnp.float32) * 0.01

    use_bf16_softmax = _default_bf16_softmax()
    out = gated_attn(x, pos_emb, w1, b1, w2, b2, heads=heads,
                     bf16_softmax=use_bf16_softmax)
    out = jax.block_until_ready(out)

    # Tight check against a reference with the same intentional bf16 rounding
    # of V/K/Q and the softmax probs (validates wiring, softmax axis, head
    # batching, deferred normalization).
    ref_match = gated_attn_ref(x, pos_emb, w1, b1, w2, b2, heads,
                               match_kernel=True, bf16_softmax=use_bf16_softmax)
    err_m = float(jnp.max(jnp.abs(out - ref_match)))
    assert jnp.allclose(out, ref_match, rtol=5e-2, atol=5e-2), \
        f"matched max_err={err_m}"

    # Loose check against the full-f32 reference; tolerance accounts for the
    # bf16 MXU operands / bf16 softmax probabilities used in the kernel.
    ref_f32 = gated_attn_ref(x, pos_emb, w1, b1, w2, b2, heads,
                             match_kernel=False)
    err_f = float(jnp.max(jnp.abs(out - ref_f32)))
    assert jnp.allclose(out, ref_f32, rtol=2e-1, atol=2e-1), \
        f"f32 max_err={err_f}"

    print("KERNEL_OK")
</pallas_src>

<mosaic_0001>
module attributes {stable_mosaic.version = 11 : i64} {
  func.func @gated_attn_kernel(%arg0: i32, %arg1: memref<1x8x256xf32, #tpu.memory_space<vmem>>, %arg2: memref<8x256xf32, #tpu.memory_space<vmem>>, %arg3: memref<24x8xf32, #tpu.memory_space<vmem>>, %arg4: memref<24x1xf32, #tpu.memory_space<vmem>>, %arg5: memref<16x8xf32, #tpu.memory_space<vmem>>, %arg6: memref<16x1xf32, #tpu.memory_space<vmem>>, %arg7: memref<1x8x256xf32, #tpu.memory_space<vmem>>) attributes {dimension_semantics = [#tpu.dimension_semantics<parallel>], iteration_bounds = array<i64: 2>, scalar_prefetch = 0 : i64, scratch_operands = 0 : i64, tpu.core_type = #tpu.core_type<tc>, window_params = [{transform_indices = @transform_0, window_bounds = array<i64: 1, 8, 256>}, {pipeline_mode = #tpu.pipeline_mode<synchronous>, transform_indices = @transform_1, window_bounds = array<i64: 8, 256>}, {pipeline_mode = #tpu.pipeline_mode<synchronous>, transform_indices = @transform_2, window_bounds = array<i64: 24, 8>}, {pipeline_mode = #tpu.pipeline_mode<synchronous>, transform_indices = @transform_3, window_bounds = array<i64: 24, 1>}, {pipeline_mode = #tpu.pipeline_mode<synchronous>, transform_indices = @transform_4, window_bounds = array<i64: 16, 8>}, {pipeline_mode = #tpu.pipeline_mode<synchronous>, transform_indices = @transform_5, window_bounds = array<i64: 16, 1>}, {transform_indices = @transform_6, window_bounds = array<i64: 1, 8, 256>}]} {
    %c0 = arith.constant 0 : index
    %c0_0 = arith.constant 0 : index
    %c0_1 = arith.constant 0 : index
    %0 = vector.load %arg1[%c0, %c0_0, %c0_1] : memref<1x8x256xf32, #tpu.memory_space<vmem>>, vector<1x8x256xf32>
    %1 = vector.shape_cast %0 : vector<1x8x256xf32> to vector<8x256xf32>
    %c0_2 = arith.constant 0 : index
    %c0_3 = arith.constant 0 : index
    %2 = vector.load %arg2[%c0_2, %c0_3] : memref<8x256xf32, #tpu.memory_space<vmem>>, vector<8x256xf32>
    %3 = arith.addf %1, %2 : vector<8x256xf32>
    %c0_4 = arith.constant 0 : index
    %c0_5 = arith.constant 0 : index
    %4 = vector.load %arg3[%c0_4, %c0_5] : memref<24x8xf32, #tpu.memory_space<vmem>>, vector<24x8xf32>
    %cst = arith.constant dense<0.000000e+00> : vector<24x256xf32>
    %5 = tpu.matmul %4, %3, %cst {dimension_numbers = #tpu.dot_dimension_numbers<[1], [0], [0], [1], [0, 0, 1, 1], [], []>} : vector<24x8xf32>, vector<8x256xf32>, vector<24x256xf32> -> vector<24x256xf32>
    %c0_6 = arith.constant 0 : index
    %c0_7 = arith.constant 0 : index
    %6 = vector.load %arg4[%c0_6, %c0_7] : memref<24x1xf32, #tpu.memory_space<vmem>>, vector<24x1xf32>
    %7 = vector.broadcast %6 : vector<24x1xf32> to vector<24x256xf32>
    %8 = arith.addf %5, %7 : vector<24x256xf32>
    %9 = vector.extract_strided_slice %8 {offsets = [0, 0], sizes = [8, 256], strides = [1, 1]} : vector<24x256xf32> to vector<8x256xf32>
    %cst_8 = arith.constant 0.707106769 : f32
    %10 = vector.broadcast %cst_8 : f32 to vector<8x256xf32>
    %11 = arith.mulf %9, %10 : vector<8x256xf32>
    %12 = arith.truncf %11 : vector<8x256xf32> to vector<8x256xbf16>
    %13 = vector.shape_cast %12 : vector<8x256xbf16> to vector<4x2x256xbf16>
    %14 = vector.extract_strided_slice %8 {offsets = [8, 0], sizes = [8, 256], strides = [1, 1]} : vector<24x256xf32> to vector<8x256xf32>
    %15 = arith.truncf %14 : vector<8x256xf32> to vector<8x256xbf16>
    %16 = vector.shape_cast %15 : vector<8x256xbf16> to vector<4x2x256xbf16>
    %17 = vector.extract_strided_slice %8 {offsets = [16, 0], sizes = [8, 256], strides = [1, 1]} : vector<24x256xf32> to vector<8x256xf32>
    %18 = arith.truncf %17 : vector<8x256xf32> to vector<8x256xbf16>
    %19 = vector.shape_cast %18 : vector<8x256xbf16> to vector<4x2x256xbf16>
    %cst_9 = arith.constant dense<0.000000e+00> : vector<4x256x256xf32>
    %20 = tpu.matmul %13, %16, %cst_9 {dimension_numbers = #tpu.dot_dimension_numbers<[1], [1], [2], [2], [0, 0, 0, 2, 1, 2], [0], [0]>} : vector<4x2x256xbf16>, vector<4x2x256xbf16>, vector<4x256x256xf32> -> vector<4x256x256xf32>
    %cst_10 = arith.constant dense<0xFF800000> : vector<4x256xf32>
    %21 = vector.multi_reduction <maximumf>, %20, %cst_10 [1] : vector<4x256x256xf32> to vector<4x256xf32>
    %22 = vector.shape_cast %21 : vector<4x256xf32> to vector<4x1x256xf32>
    %23 = vector.broadcast %22 : vector<4x1x256xf32> to vector<4x256x256xf32>
    %24 = arith.subf %20, %23 : vector<4x256x256xf32>
    %25 = arith.truncf %24 : vector<4x256x256xf32> to vector<4x256x256xbf16>
    %26 = math.exp %25 : vector<4x256x256xbf16>
    %cst_11 = arith.constant 1.000000e+00 : bf16
    %27 = vector.broadcast %cst_11 : bf16 to vector<4x1x256xbf16>
    %28 = tpu.concatenate %19, %27 in 1 : vector<4x2x256xbf16>, vector<4x1x256xbf16> -> vector<4x3x256xbf16>
    %cst_12 = arith.constant dense<0.000000e+00> : vector<4x3x256xf32>
    %29 = tpu.matmul %28, %26, %cst_12 {dimension_numbers = #tpu.dot_dimension_numbers<[2], [1], [1], [2], [0, 0, 0, 1, 1, 2], [0], [0]>} : vector<4x3x256xbf16>, vector<4x256x256xbf16>, vector<4x3x256xf32> -> vector<4x3x256xf32>
    %30 = vector.extract_strided_slice %29 {offsets = [0, 0, 0], sizes = [4, 2, 256], strides = [1, 1, 1]} : vector<4x3x256xf32> to vector<4x2x256xf32>
    %31 = vector.extract_strided_slice %29 {offsets = [0, 2, 0], sizes = [4, 1, 256], strides = [1, 1, 1]} : vector<4x3x256xf32> to vector<4x1x256xf32>
    %32 = tpu.reciprocal %31 {approx = true} : vector<4x1x256xf32> -> vector<4x1x256xf32>
    %33 = vector.broadcast %32 : vector<4x1x256xf32> to vector<4x2x256xf32>
    %34 = arith.mulf %30, %33 : vector<4x2x256xf32>
    %35 = vector.shape_cast %34 : vector<4x2x256xf32> to vector<8x256xf32>
    %c0_13 = arith.constant 0 : index
    %c0_14 = arith.constant 0 : index
    %36 = vector.load %arg5[%c0_13, %c0_14] : memref<16x8xf32, #tpu.memory_space<vmem>>, vector<16x8xf32>
    %cst_15 = arith.constant dense<0.000000e+00> : vector<16x256xf32>
    %37 = tpu.matmul %36, %35, %cst_15 {dimension_numbers = #tpu.dot_dimension_numbers<[1], [0], [0], [1], [0, 0, 1, 1], [], []>} : vector<16x8xf32>, vector<8x256xf32>, vector<16x256xf32> -> vector<16x256xf32>
    %c0_16 = arith.constant 0 : index
    %c0_17 = arith.constant 0 : index
    %38 = vector.load %arg6[%c0_16, %c0_17] : memref<16x1xf32, #tpu.memory_space<vmem>>, vector<16x1xf32>
    %39 = vector.broadcast %38 : vector<16x1xf32> to vector<16x256xf32>
    %40 = arith.addf %37, %39 : vector<16x256xf32>
    %41 = vector.extract_strided_slice %40 {offsets = [0, 0], sizes = [8, 256], strides = [1, 1]} : vector<16x256xf32> to vector<8x256xf32>
    %42 = vector.extract_strided_slice %40 {offsets = [8, 0], sizes = [8, 256], strides = [1, 1]} : vector<16x256xf32> to vector<8x256xf32>
    %43 = arith.negf %42 : vector<8x256xf32>
    %44 = math.exp %43 : vector<8x256xf32>
    %cst_18 = arith.constant 1.000000e+00 : f32
    %45 = vector.broadcast %cst_18 : f32 to vector<8x256xf32>
    %46 = arith.addf %45, %44 : vector<8x256xf32>
    %47 = arith.divf %45, %46 : vector<8x256xf32>
    %48 = arith.mulf %41, %47 : vector<8x256xf32>
    %49 = arith.addf %1, %48 : vector<8x256xf32>
    %c0_19 = arith.constant 0 : index
    %c0_20 = arith.constant 0 : index
    %c0_21 = arith.constant 0 : index
    %50 = vector.load %arg7[%c0_19, %c0_20, %c0_21] : memref<1x8x256xf32, #tpu.memory_space<vmem>>, vector<1x8x256xf32>
    %51 = vector.shape_cast %50 : vector<1x8x256xf32> to vector<8x256xf32>
    %52 = vector.shape_cast %49 : vector<8x256xf32> to vector<1x8x256xf32>
    tpu.vector_store %arg7[%c0_19, %c0_20, %c0_21], %52 {strides = array<i32>} : memref<1x8x256xf32, #tpu.memory_space<vmem>>, vector<1x8x256xf32>,
    return
  }
  func.func @transform_0(%arg0: i32) -> (i32, i32, i32) {
    %c0_i32 = arith.constant 0 : i32
    %c0_i32_0 = arith.constant 0 : i32
    %c0_i32_1 = arith.constant 0 : i32
    return %arg0, %c0_i32, %c0_i32_0 : i32, i32, i32
  }
  func.func @transform_1(%arg0: i32) -> (i32, i32) {
    %c0_i32 = arith.constant 0 : i32
    %c0_i32_0 = arith.constant 0 : i32
    %c0_i32_1 = arith.constant 0 : i32
    return %c0_i32, %c0_i32_0 : i32, i32
  }
  func.func @transform_2(%arg0: i32) -> (i32, i32) {
    %c0_i32 = arith.constant 0 : i32
    %c0_i32_0 = arith.constant 0 : i32
    %c0_i32_1 = arith.constant 0 : i32
    return %c0_i32, %c0_i32_0 : i32, i32
  }
  func.func @transform_3(%arg0: i32) -> (i32, i32) {
    %c0_i32 = arith.constant 0 : i32
    %c0_i32_0 = arith.constant 0 : i32
    %c0_i32_1 = arith.constant 0 : i32
    return %c0_i32, %c0_i32_0 : i32, i32
  }
  func.func @transform_4(%arg0: i32) -> (i32, i32) {
    %c0_i32 = arith.constant 0 : i32
    %c0_i32_0 = arith.constant 0 : i32
    %c0_i32_1 = arith.constant 0 : i32
    return %c0_i32, %c0_i32_0 : i32, i32
  }
  func.func @transform_5(%arg0: i32) -> (i32, i32) {
    %c0_i32 = arith.constant 0 : i32
    %c0_i32_0 = arith.constant 0 : i32
    %c0_i32_1 = arith.constant 0 : i32
    return %c0_i32, %c0_i32_0 : i32, i32
  }
  func.func @transform_6(%arg0: i32) -> (i32, i32, i32) {
    %c0_i32 = arith.constant 0 : i32
    %c0_i32_0 = arith.constant 0 : i32
    %c0_i32_1 = arith.constant 0 : i32
    return %arg0, %c0_i32, %c0_i32_0 : i32, i32, i32
  }
}

</mosaic_0001>

<llo_original>
// kernel: tpu_custom_call.1
$region0: #{tpu_custom_call.1}
  #allocation0 [shape = 'u32[]', space=smem, size = 0x4, offset = 0x4, fixed_abs, tag = 'smem constant byte address 0x4 - core index']
  #allocation1 [shape = 'u32[72,128]{1,0:T(1,128)}', space=vmem, size = 0x9000, scoped, tag = 'internal scratch']
  %s0 = inlined_call_operand.vmem [shape: f32[2,8,256], index: 0, kind: input, shape index: {}]
  %s1 = inlined_call_operand.vmem [shape: f32[8,256], index: 1, kind: input, shape index: {}]
  %s2 = inlined_call_operand.vmem [shape: f32[24,8], index: 2, kind: input, shape index: {}]
  %s3 = inlined_call_operand.vmem [shape: f32[24,1], index: 3, kind: input, shape index: {}]
  %s4 = inlined_call_operand.vmem [shape: f32[16,8], index: 4, kind: input, shape index: {}]
  %s5 = inlined_call_operand.vmem [shape: f32[16,1], index: 5, kind: input, shape index: {}]
  %s6 = inlined_call_operand.hbm [shape: f32[2,8,256], index: 6, kind: output, shape index: {}]
  %s7 = sld [smem:[#allocation0]]
  $region57: #{tpu_custom_call.1} parent=0
    _
  %s9 = ssub.s32 1, %s7
  %s10 = scalar_select 0, %s9, %s7
  $region1: #{tpu_custom_call.1} parent=0
    #allocation2 [shape = 'u8[16384]{0}', space=vmem, size = 0x4000, scoped, tag = 'output window, operand 0']
    #allocation3 [shape = 's32[2]{0}', space=sflag, size = 0x8, scoped, tag = 'scoped memory for tpu_custom_call.1']
    %11 = vsyncpa [#allocation3], 0
    %s12 = scalar_lea.sflag [#allocation3], 1
    %13 = vsyncpa %s12, 0
    loop: start=0, step=1, limit=4
    $region2: #{tpu_custom_call.1} parent=1 // loop_pre_header
      _
    $region3: #{tpu_custom_call.1} parent=1 // loop_header
      %s15 = sphi 0, %s19
      %p16 = scmp.ge.s32.totalorder %s15, 4
      %s25 = sphi 0, %s27
      %s28 = sphi 0, %s25
      %s29 = sphi 0, %s28
      %s45 = sphi 0, %s29
      %s49 = sphi 0, %s49
      %s51 = sphi 0, %s49
      %s52 = sphi 0, %s51
      %s66 = sphi 0, %s52
      %s70 = sphi 0, %s70
      %s72 = sphi 0, %s70
      %s73 = sphi 0, %s72
      %s87 = sphi 0, %s73
      %s91 = sphi 0, %s91
      %s93 = sphi 0, %s91
      %s94 = sphi 0, %s93
      %s108 = sphi 0, %s94
      %s112 = sphi 0, %s112
      %s114 = sphi 0, %s112
      %s115 = sphi 0, %s114
      %s129 = sphi 0, %s115
      %s133 = sphi 0, %s133
      %s135 = sphi 0, %s133
      %s136 = sphi 0, %s135
      %s150 = sphi 0, %s136
      %s156 = sphi 0, %s158
      %s159 = sphi 0, %s156
      %s160 = sphi 0, %s159
      %s176 = sphi 0, %s160
    $region4: #{tpu_custom_call.1} parent=1 // loop_header_branch
      %18 = sbr.rel (%p16) target = $region8
    $region5: #{tpu_custom_call.1} parent=1 // loop_body
      %s20 = ssub.s32 %s15, 1
      %s21 = ssub.s32 %s15, 2
      %s22 = sadd.s32 %s15, 1
      %s23 = ssub.s32 %s15, %s22
      %p24 = scmp.eq.s32.totalorder %s23, 0
      %s26 = sadd.s32 %s25, 1
      %s27 = scalar_select %p24, %s25, %s26
      %p30 = pneg %p24
      %p31 = scmp.eq.s32.totalorder %s15, 1
      %p32 = por %p30, %p31
      %p33 = scmp.ne.s32.totalorder %s25, %s28
      %p34 = scmp.eq.s32.totalorder %s15, 0
      %p35 = por %p33, %p34
      %p36 = scmp.ne.s32.totalorder %s25, %s28
      %p37 = scmp.eq.s32.totalorder %s20, 1
      %p38 = por %p36, %p37
      %p39 = scmp.ne.s32.totalorder %s28, %s29
      %p40 = scmp.eq.s32.totalorder %s20, 0
      %p41 = por %p39, %p40
      %p42 = scmp.ne.s32.totalorder %s28, %s29
      %p43 = scmp.eq.s32.totalorder %s21, 1
      %p44 = por %p42, %p43
      %p46 = scmp.ne.s32.totalorder %s29, %s45
      %p47 = scmp.eq.s32.totalorder %s21, 0
      %p48 = por %p46, %p47
      %s50 = sadd.s32 %s49, 1
      %p53 = scmp.eq.s32.totalorder %s15, 1
      %p54 = scmp.ne.s32.totalorder %s49, %s51
      %p55 = scmp.eq.s32.totalorder %s15, 0
      %p56 = por %p54, %p55
      %p57 = scmp.ne.s32.totalorder %s49, %s51
      %p58 = scmp.eq.s32.totalorder %s20, 1
      %p59 = por %p57, %p58
      %p60 = scmp.ne.s32.totalorder %s51, %s52
      %p61 = scmp.eq.s32.totalorder %s20, 0
      %p62 = por %p60, %p61
      %p63 = scmp.ne.s32.totalorder %s51, %s52
      %p64 = scmp.eq.s32.totalorder %s21, 1
      %p65 = por %p63, %p64
      %p67 = scmp.ne.s32.totalorder %s52, %s66
      %p68 = scmp.eq.s32.totalorder %s21, 0
      %p69 = por %p67, %p68
      %s71 = sadd.s32 %s70, 1
      %p74 = scmp.eq.s32.totalorder %s15, 1
      %p75 = scmp.ne.s32.totalorder %s70, %s72
      %p76 = scmp.eq.s32.totalorder %s15, 0
      %p77 = por %p75, %p76
      %p78 = scmp.ne.s32.totalorder %s70, %s72
      %p79 = scmp.eq.s32.totalorder %s20, 1
      %p80 = por %p78, %p79
      %p81 = scmp.ne.s32.totalorder %s72, %s73
      %p82 = scmp.eq.s32.totalorder %s20, 0
      %p83 = por %p81, %p82
      %p84 = scmp.ne.s32.totalorder %s72, %s73
      %p85 = scmp.eq.s32.totalorder %s21, 1
      %p86 = por %p84, %p85
      %p88 = scmp.ne.s32.totalorder %s73, %s87
      %p89 = scmp.eq.s32.totalorder %s21, 0
      %p90 = por %p88, %p89
      %s92 = sadd.s32 %s91, 1
      %p95 = scmp.eq.s32.totalorder %s15, 1
      %p96 = scmp.ne.s32.totalorder %s91, %s93
      %p97 = scmp.eq.s32.totalorder %s15, 0
      %p98 = por %p96, %p97
      %p99 = scmp.ne.s32.totalorder %s91, %s93
      %p100 = scmp.eq.s32.totalorder %s20, 1
      %p101 = por %p99, %p100
      %p102 = scmp.ne.s32.totalorder %s93, %s94
      %p103 = scmp.eq.s32.totalorder %s20, 0
      %p104 = por %p102, %p103
      %p105 = scmp.ne.s32.totalorder %s93, %s94
      %p106 = scmp.eq.s32.totalorder %s21, 1
      %p107 = por %p105, %p106
      %p109 = scmp.ne.s32.totalorder %s94, %s108
      %p110 = scmp.eq.s32.totalorder %s21, 0
      %p111 = por %p109, %p110
      %s113 = sadd.s32 %s112, 1
      %p116 = scmp.eq.s32.totalorder %s15, 1
      %p117 = scmp.ne.s32.totalorder %s112, %s114
      %p118 = scmp.eq.s32.totalorder %s15, 0
      %p119 = por %p117, %p118
      %p120 = scmp.ne.s32.totalorder %s112, %s114
      %p121 = scmp.eq.s32.totalorder %s20, 1
      %p122 = por %p120, %p121
      %p123 = scmp.ne.s32.totalorder %s114, %s115
      %p124 = scmp.eq.s32.totalorder %s20, 0
      %p125 = por %p123, %p124
      %p126 = scmp.ne.s32.totalorder %s114, %s115
      %p127 = scmp.eq.s32.totalorder %s21, 1
      %p128 = por %p126, %p127
      %p130 = scmp.ne.s32.totalorder %s115, %s129
      %p131 = scmp.eq.s32.totalorder %s21, 0
      %p132 = por %p130, %p131
      %s134 = sadd.s32 %s133, 1
      %p137 = scmp.eq.s32.totalorder %s15, 1
      %p138 = scmp.ne.s32.totalorder %s133, %s135
      %p139 = scmp.eq.s32.totalorder %s15, 0
      %p140 = por %p138, %p139
      %p141 = scmp.ne.s32.totalorder %s133, %s135
      %p142 = scmp.eq.s32.totalorder %s20, 1
      %p143 = por %p141, %p142
      %p144 = scmp.ne.s32.totalorder %s135, %s136
      %p145 = scmp.eq.s32.totalorder %s20, 0
      %p146 = por %p144, %p145
      %p147 = scmp.ne.s32.totalorder %s135, %s136
      %p148 = scmp.eq.s32.totalorder %s21, 1
      %p149 = por %p147, %p148
      %p151 = scmp.ne.s32.totalorder %s136, %s150
      %p152 = scmp.eq.s32.totalorder %s21, 0
      %p153 = por %p151, %p152
      %s154 = ssub.s32 %s15, %s22
      %p155 = scmp.eq.s32.totalorder %s154, 0
      %s157 = sadd.s32 %s156, 1
      %s158 = scalar_select %p155, %s156, %s157
      %p161 = pneg %p155
      %p162 = scmp.eq.s32.totalorder %s15, 1
      %p163 = por %p161, %p162
      %p164 = scmp.ne.s32.totalorder %s156, %s159
      %p165 = scmp.eq.s32.totalorder %s15, 0
      %p166 = por %p164, %p165
      %p167 = scmp.ne.s32.totalorder %s156, %s159
      %p168 = scmp.eq.s32.totalorder %s20, 1
      %p169 = por %p167, %p168
      %p170 = scmp.ne.s32.totalorder %s159, %s160
      %p171 = scmp.eq.s32.totalorder %s20, 0
      %p172 = por %p170, %p171
      %p173 = scmp.ne.s32.totalorder %s159, %s160
      %p174 = scmp.eq.s32.totalorder %s21, 1
      %p175 = por %p173, %p174
      %p177 = scmp.ne.s32.totalorder %s160, %s176
      %p178 = scmp.eq.s32.totalorder %s21, 0
      %p179 = por %p177, %p178
      %p180 = scmp.le.s32.totalorder 1, %s15
      %p181 = scmp.lt.s32.totalorder %s15, 3
      %p182 = pnand %p180, %p181
      %p183 = pneg %p182
      // Predicated region
      $region9: #{tpu_custom_call.1} parent=5 // pred_check
        _
      $region10: #{tpu_custom_call.1} parent=5 // pred_check_branch
        %185 = sbr.rel (%p182) target = $region12
      $region11: #{tpu_custom_call.1} parent=5 // pred_region
        %s186 = ssub.s32 %s15, 1
        // Predicated region
        $region13: #{tpu_custom_call.1} parent=11 // pred_check
          %p187 = pneg %p62
        $region14: #{tpu_custom_call.1} parent=11 // pred_check_branch
          %189 = sbr.rel (%p187) target = $region16
        $region15: #{tpu_custom_call.1} parent=11 // pred_region
          _
        $region16: #{tpu_custom_call.1} parent=11 // pred_fallthru
          _
        // Predicated region
        $region17: #{tpu_custom_call.1} parent=11 // pred_check
          %p190 = pneg %p83
        $region18: #{tpu_custom_call.1} parent=11 // pred_check_branch
          %192 = sbr.rel (%p190) target = $region20
        $region19: #{tpu_custom_call.1} parent=11 // pred_region
          _
        $region20: #{tpu_custom_call.1} parent=11 // pred_fallthru
          _
        // Predicated region
        $region21: #{tpu_custom_call.1} parent=11 // pred_check
          %p193 = pneg %p104
        $region22: #{tpu_custom_call.1} parent=11 // pred_check_branch
          %195 = sbr.rel (%p193) target = $region24
        $region23: #{tpu_custom_call.1} parent=11 // pred_region
          _
        $region24: #{tpu_custom_call.1} parent=11 // pred_fallthru
          _
        // Predicated region
        $region25: #{tpu_custom_call.1} parent=11 // pred_check
          %p196 = pneg %p125
        $region26: #{tpu_custom_call.1} parent=11 // pred_check_branch
          %198 = sbr.rel (%p196) target = $region28
        $region27: #{tpu_custom_call.1} parent=11 // pred_region
          _
        $region28: #{tpu_custom_call.1} parent=11 // pred_fallthru
          _
        // Predicated region
        $region29: #{tpu_custom_call.1} parent=11 // pred_check
          %p199 = pneg %p146
        $region30: #{tpu_custom_call.1} parent=11 // pred_check_branch
          %201 = sbr.rel (%p199) target = $region32
        $region31: #{tpu_custom_call.1} parent=11 // pred_region
          _
        $region32: #{tpu_custom_call.1} parent=11 // pred_fallthru
          _
      $region12: #{tpu_custom_call.1} parent=5 // pred_fallthru
        _
      %p202 = scmp.lt.s32.totalorder %s15, 2
      // Predicated region
      $region33: #{tpu_custom_call.1} parent=5 // pred_check
        %p203 = pneg %p202
      $region34: #{tpu_custom_call.1} parent=5 // pred_check_branch
        %205 = sbr.rel (%p203) target = $region36
      $region35: #{tpu_custom_call.1} parent=5 // pred_region
        // Predicated region
        $region37: #{tpu_custom_call.1} parent=35 // pred_check
          %p206 = pneg %p35
        $region38: #{tpu_custom_call.1} parent=35 // pred_check_branch
          %208 = sbr.rel (%p206) target = $region40
        $region39: #{tpu_custom_call.1} parent=35 // pred_region
          %p209 = scmp.lt.s32.totalorder %s15, 1
          %s210 = scalar_select %p209, %s15, 1
          %s211 = smul.addr %s210, 2
          %s212 = smul.addr %s211, 8
          %s213 = scalar_lea.vmem %s0, %s212
        $region40: #{tpu_custom_call.1} parent=35 // pred_fallthru
          _
      $region36: #{tpu_custom_call.1} parent=5 // pred_fallthru
        _
      %p214 = scmp.le.s32.totalorder 1, %s15
      %p215 = scmp.lt.s32.totalorder %s15, 3
      %p216 = pnand %p214, %p215
      %p217 = pneg %p216
      // Predicated region
      $region41: #{tpu_custom_call.1} parent=5 // pred_check
        _
      $region42: #{tpu_custom_call.1} parent=5 // pred_check_branch
        %219 = sbr.rel (%p216) target = $region44
      $region43: #{tpu_custom_call.1} parent=5 // pred_region
        %s220 = ssub.s32 %s15, 1
        %p221 = scmp.lt.s32.totalorder %s20, 1
        %s222 = scalar_select %p221, %s20, 1
        %s223 = smul.addr %s222, 2
        %s224 = smul.addr %s223, 8
        %s225 = scalar_lea.vmem %s0, %s224
        %p226 = pneg %p41
        %p227 = pneg %p38
        %p228 = pneg %p62
        %p229 = pneg %p59
        %p230 = pneg %p83
        %p231 = pneg %p80
        %p232 = pneg %p104
        %p233 = pneg %p101
        %p234 = pneg %p125
        %p235 = pneg %p122
        %p236 = pneg %p146
        %p237 = pneg %p143
        %p238 = pneg %p172
        %p239 = pneg %p169
        %s240 = sand.u32 %s159, 1
        %s241 = scalar_lea.sflag [#allocation3], %s240
        %s242 = sand.u32 %s159, 1
        %s243 = smul.addr %s242, 16
        %s244 = scalar_lea.vmem [#allocation2], %s243
        %p245 = scmp.lt.s32.totalorder %s20, 1
        %s246 = scalar_select %p245, %s20, 1
        %s247 = smul.addr %s246, 2
        %s248 = smul.addr %s247, 8
        %s249 = scalar_lea.vmem %s0, %s248
        %v252 = vld [vmem:[%s249] sm:$0xff]
        %v253 = vld [vmem:[%s249 + $0x8] sm:$0xff]
        %v254 = vld [vmem:[%s1] sm:$0xff]
        %v255 = vld [vmem:[%s1 + $0x8] sm:$0xff]
        %v256 = vadd.f32 %v252, %v254
        %v257 = vadd.f32 %v253, %v255
        %v258 = vld [vmem:[%s2] sm:$0xff]
        %v259 = vld [vmem:[%s2 + $0x8] sm:$0xff]
        %v260 = vld [vmem:[%s2 + $0x10] sm:$0xff]
        %v261 = vld [vmem:[%s3] sm:$0xff]
        %v262 = vld [vmem:[%s3 + $0x8] sm:$0xff]
        %v263 = vld [vmem:[%s3 + $0x10] sm:$0xff]
        %265 = vset.pattern.permute.xlu0 0
        %266 = vperm.xlu0 %265, %v261
        %v267 = vpop.permute.xlu0 %266
        %270 = vset.pattern.permute.xlu0 0
        %271 = vperm.xlu0 %270, %v262
        %v272 = vpop.permute.xlu0 %271
        %275 = vset.pattern.permute.xlu0 0
        %276 = vperm.xlu0 %275, %v263
        %v277 = vpop.permute.xlu0 %276
        %vm279 = vcmask 64512
        %v281 = vsel %vm279, %v258, 0
        %v284 = vsel %vm279, %v259, 0
        %v287 = vsel %vm279, %v260, 0
        %289 = vmatpush.msra.mxu0 0.0
        %290 = vmatpush.msra.mxu0 0.0
        %291 = vmatpush.msra.mxu0 0.0
        %292 = vmatpush.msra.mxu0 0.0
        %293 = vmatpush.msra.mxu0 0.0
        %294 = vmatpush.msra.mxu0 0.0
        %295 = vmatpush.msra.mxu0 0.0
        %296 = vmatpush.msra.mxu0 0.0
        %297 = vmatpush.msra.mxu0 0.0
        %298 = vmatpush.msra.mxu0 0.0
        %299 = vmatpush.msra.mxu0 0.0
        %300 = vmatpush.msra.mxu0 0.0
        %301 = vmatpush.msra.mxu0 0.0
        %302 = vmatpush.msra.mxu0 0.0
        %303 = vmatpush.msra.mxu0 0.0
        %304 = vmatpush.msra.mxu0 %v256
        %305 = vmatmul.f32.gmra.mxu0 %v281
        %v306 = vpop.f32.mrf.mxu0
        %v307 = vadd.f32 %v267, %v306
        %308 = vmatmul.f32.gmra.mxu0 %v284
        %v309 = vpop.f32.mrf.mxu0
        %v310 = vadd.f32 %v272, %v309
        %311 = vmatmul.f32.gmra.mxu0 %v287
        %v312 = vpop.f32.mrf.mxu0
        %v313 = vadd.f32 %v277, %v312
        %314 = vdwg.mxu0
        %315 = vmatpush.msra.mxu0 0.0
        %316 = vmatpush.msra.mxu0 0.0
        %317 = vmatpush.msra.mxu0 0.0
        %318 = vmatpush.msra.mxu0 0.0
        %319 = vmatpush.msra.mxu0 0.0
        %320 = vmatpush.msra.mxu0 0.0
        %321 = vmatpush.msra.mxu0 0.0
        %322 = vmatpush.msra.mxu0 0.0
        %323 = vmatpush.msra.mxu0 0.0
        %324 = vmatpush.msra.mxu0 0.0
        %325 = vmatpush.msra.mxu0 0.0
        %326 = vmatpush.msra.mxu0 0.0
        %327 = vmatpush.msra.mxu0 0.0
        %328 = vmatpush.msra.mxu0 0.0
        %329 = vmatpush.msra.mxu0 0.0
        %330 = vmatpush.msra.mxu0 %v257
        %331 = vmatmul.f32.gmra.mxu0 %v281
        %v332 = vpop.f32.mrf.mxu0
        %v333 = vadd.f32 %v267, %v332
        %334 = vmatmul.f32.gmra.mxu0 %v284
        %v335 = vpop.f32.mrf.mxu0
        %v336 = vadd.f32 %v272, %v335
        %337 = vmatmul.f32.gmra.mxu0 %v287
        %v338 = vpop.f32.mrf.mxu0
        %v339 = vadd.f32 %v277, %v338
        %340 = vdwg.mxu0
        %v341 = vmul.f32 %v307, 0.70710677
        %v342 = vmul.f32 %v333, 0.70710677
        %v343 = vpack.c.bf16 %v342, %v341
        %v345 = vrot.slane %v343, 3
        %vm346 = vcmask 1040384
        %v349 = vsel %vm346, %v343, %v345
        %vm350 = vcmask 1041409
        %v351 = vsel %vm350, %v343, %v345
        %v353 = vrot.slane %v351, 1
        %vm354 = vcmask 1042434
        %v355 = vsel %vm354, %v343, %v345
        %v357 = vrot.slane %v355, 2
        %vm358 = vcmask 1043459
        %v359 = vsel %vm358, %v343, %v345
        %v361 = vrot.slane %v359, 3
        %v362 = vpack.c.bf16 %v336, %v310
        %v364 = vrot.slane %v362, 3
        %v367 = vsel %vm346, %v362, %v364
        %v368 = vsel %vm350, %v362, %v364
        %v370 = vrot.slane %v368, 1
        %v371 = vsel %vm354, %v362, %v364
        %v373 = vrot.slane %v371, 2
        %v374 = vsel %vm358, %v362, %v364
        %v376 = vrot.slane %v374, 3
        %v377 = vpack.c.bf16 %v339, %v313
        %v379 = vrot.slane %v377, 3
        %v382 = vsel %vm346, %v377, %v379
        %v383 = vsel %vm350, %v377, %v379
        %v385 = vrot.slane %v383, 1
        %v386 = vsel %vm354, %v377, %v379
        %v388 = vrot.slane %v386, 2
        %v389 = vsel %vm358, %v377, %v379
        %v391 = vrot.slane %v389, 3
        %392 = vst [vmem:[#allocation1] ss:$9 sm:$0xff] %v349
        %v393 = vld [vmem:[#allocation1] sm:$0xff]
        %v394 = vld [vmem:[#allocation1 + $0x9] sm:$0xff]
        %397 = vxpose.binary.xlu0.c.b16.start [1/16] %v394, %v393, 128
        %398 = vxpose.binary.xlu0.c.b16.cont [2/16] 0, 0, 128
        %399 = vxpose.binary.xlu0.c.b16.cont [3/16] 0, 0, 128
        %400 = vxpose.binary.xlu0.c.b16.cont [4/16] 0, 0, 128
        %401 = vxpose.binary.xlu0.c.b16.cont [5/16] 0, 0, 128
        %402 = vxpose.binary.xlu0.c.b16.cont [6/16] 0, 0, 128
        %403 = vxpose.binary.xlu0.c.b16.cont [7/16] 0, 0, 128
        %404 = vxpose.binary.xlu0.c.b16.end [8/16] 0, 0, 128
        %v405 = vpop.trf.xlu0
        %v406 = vpop.trf.xlu0
        %v407 = vpop.trf.xlu0
        %v408 = vpop.trf.xlu0
        %v409 = vpop.trf.xlu0
        %v410 = vpop.trf.xlu0
        %v411 = vpop.trf.xlu0
        %v412 = vpop.trf.xlu0
        %v413 = vpop.trf.xlu0
        %v414 = vpop.trf.xlu0
        %v415 = vpop.trf.xlu0
        %v416 = vpop.trf.xlu0
        %v417 = vpop.trf.xlu0
        %v418 = vpop.trf.xlu0
        %v419 = vpop.trf.xlu0
        %v420 = vpop.trf.xlu0
        %421 = vst [vmem:[#allocation1] ss:$9 sm:$0xff] %v367
        %v422 = vld [vmem:[#allocation1] sm:$0xff]
        %v423 = vld [vmem:[#allocation1 + $0x9] sm:$0xff]
        %vm424 = vcmask 15360
        %v426 = vsel %vm424, %v405, 0
        %v429 = vsel %vm424, %v407, 0
        %v432 = vsel %vm424, %v409, 0
        %v435 = vsel %vm424, %v411, 0
        %v438 = vsel %vm424, %v413, 0
        %v441 = vsel %vm424, %v415, 0
        %v444 = vsel %vm424, %v417, 0
        %v447 = vsel %vm424, %v419, 0
        %v450 = vsel %vm424, %v406, 0
        %v453 = vsel %vm424, %v408, 0
        %v456 = vsel %vm424, %v410, 0
        %v459 = vsel %vm424, %v412, 0
        %v462 = vsel %vm424, %v414, 0
        %v465 = vsel %vm424, %v416, 0
        %v468 = vsel %vm424, %v418, 0
        %v471 = vsel %vm424, %v420, 0
        %v473 = vsel %vm346, %v422, 0
        %v475 = vsel %vm346, %v423, 0
        %477 = vmatpush.bf16.msra.mxu0 0
        %478 = vmatpush.bf16.msra.mxu0 0
        %479 = vmatpush.bf16.msra.mxu0 0
        %480 = vmatpush.bf16.msra.mxu0 0
        %481 = vmatpush.bf16.msra.mxu0 0
        %482 = vmatpush.bf16.msra.mxu0 0
        %483 = vmatpush.bf16.msra.mxu0 0
        %484 = vmatpush.bf16.msra.mxu0 %v473
        %485 = vmatmul.bf16.gmra.mxu0 %v426
        %v486 = vpop.f32.mrf.mxu0
        %v487 = vadd.f32 0.0, %v486
        %v488 = vpop.f32.mrf.mxu0
        %v489 = vadd.f32 0.0, %v488
        %490 = vmatmul.bf16.gmra.mxu0 %v429
        %v491 = vpop.f32.mrf.mxu0
        %v492 = vadd.f32 0.0, %v491
        %v493 = vpop.f32.mrf.mxu0
        %v494 = vadd.f32 0.0, %v493
        %495 = vmatmul.bf16.gmra.mxu0 %v432
        %v496 = vpop.f32.mrf.mxu0
        %v497 = vadd.f32 0.0, %v496
        %v498 = vpop.f32.mrf.mxu0
        %v499 = vadd.f32 0.0, %v498
        %500 = vmatmul.bf16.gmra.mxu0 %v435
        %v501 = vpop.f32.mrf.mxu0
        %v502 = vadd.f32 0.0, %v501
        %v503 = vpop.f32.mrf.mxu0
        %v504 = vadd.f32 0.0, %v503
        %505 = vmatmul.bf16.gmra.mxu0 %v438
        %v506 = vpop.f32.mrf.mxu0
        %v507 = vadd.f32 0.0, %v506
        %v508 = vpop.f32.mrf.mxu0
        %v509 = vadd.f32 0.0, %v508
        %510 = vmatmul.bf16.gmra.mxu0 %v441
        %v511 = vpop.f32.mrf.mxu0
        %v512 = vadd.f32 0.0, %v511
        %v513 = vpop.f32.mrf.mxu0
        %v514 = vadd.f32 0.0, %v513
        %515 = vmatmul.bf16.gmra.mxu0 %v444
        %v516 = vpop.f32.mrf.mxu0
        %v517 = vadd.f32 0.0, %v516
        %v518 = vpop.f32.mrf.mxu0
        %v519 = vadd.f32 0.0, %v518
        %520 = vmatmul.bf16.gmra.mxu0 %v447
        %v521 = vpop.f32.mrf.mxu0
        %v522 = vadd.f32 0.0, %v521
        %v523 = vpop.f32.mrf.mxu0
        %v524 = vadd.f32 0.0, %v523
        %525 = vmatmul.bf16.gmra.mxu0 %v450
        %v526 = vpop.f32.mrf.mxu0
        %v527 = vadd.f32 0.0, %v526
        %v528 = vpop.f32.mrf.mxu0
        %v529 = vadd.f32 0.0, %v528
        %530 = vmatmul.bf16.gmra.mxu0 %v453
        %v531 = vpop.f32.mrf.mxu0
        %v532 = vadd.f32 0.0, %v531
        %v533 = vpop.f32.mrf.mxu0
        %v534 = vadd.f32 0.0, %v533
        %535 = vmatmul.bf16.gmra.mxu0 %v456
        %v536 = vpop.f32.mrf.mxu0
        %v537 = vadd.f32 0.0, %v536
        %v538 = vpop.f32.mrf.mxu0
        %v539 = vadd.f32 0.0, %v538
        %540 = vmatmul.bf16.gmra.mxu0 %v459
        %v541 = vpop.f32.mrf.mxu0
        %v542 = vadd.f32 0.0, %v541
        %v543 = vpop.f32.mrf.mxu0
        %v544 = vadd.f32 0.0, %v543
        %545 = vmatmul.bf16.gmra.mxu0 %v462
        %v546 = vpop.f32.mrf.mxu0
        %v547 = vadd.f32 0.0, %v546
        %v548 = vpop.f32.mrf.mxu0
        %v549 = vadd.f32 0.0, %v548
        %550 = vmatmul.bf16.gmra.mxu0 %v465
        %v551 = vpop.f32.mrf.mxu0
        %v552 = vadd.f32 0.0, %v551
        %v553 = vpop.f32.mrf.mxu0
        %v554 = vadd.f32 0.0, %v553
        %555 = vmatmul.bf16.gmra.mxu0 %v468
        %v556 = vpop.f32.mrf.mxu0
        %v557 = vadd.f32 0.0, %v556
        %v558 = vpop.f32.mrf.mxu0
        %v559 = vadd.f32 0.0, %v558
        %560 = vmatmul.bf16.gmra.mxu0 %v471
        %v561 = vpop.f32.mrf.mxu0
        %v562 = vadd.f32 0.0, %v561
        %v563 = vpop.f32.mrf.mxu0
        %v564 = vadd.f32 0.0, %v563
        %565 = vdwg.mxu0
        %566 = vmatpush.bf16.msra.mxu0 0
        %567 = vmatpush.bf16.msra.mxu0 0
        %568 = vmatpush.bf16.msra.mxu0 0
        %569 = vmatpush.bf16.msra.mxu0 0
        %570 = vmatpush.bf16.msra.mxu0 0
        %571 = vmatpush.bf16.msra.mxu0 0
        %572 = vmatpush.bf16.msra.mxu0 0
        %573 = vmatpush.bf16.msra.mxu0 %v475
        %574 = vmatmul.bf16.gmra.mxu0 %v426
        %v575 = vpop.f32.mrf.mxu0
        %v576 = vadd.f32 0.0, %v575
        %v577 = vpop.f32.mrf.mxu0
        %v578 = vadd.f32 0.0, %v577
        %579 = vmatmul.bf16.gmra.mxu0 %v429
        %v580 = vpop.f32.mrf.mxu0
        %v581 = vadd.f32 0.0, %v580
        %v582 = vpop.f32.mrf.mxu0
        %v583 = vadd.f32 0.0, %v582
        %584 = vmatmul.bf16.gmra.mxu0 %v432
        %v585 = vpop.f32.mrf.mxu0
        %v586 = vadd.f32 0.0, %v585
        %v587 = vpop.f32.mrf.mxu0
        %v588 = vadd.f32 0.0, %v587
        %589 = vmatmul.bf16.gmra.mxu0 %v435
        %v590 = vpop.f32.mrf.mxu0
        %v591 = vadd.f32 0.0, %v590
        %v592 = vpop.f32.mrf.mxu0
        %v593 = vadd.f32 0.0, %v592
        %594 = vmatmul.bf16.gmra.mxu0 %v438
        %v595 = vpop.f32.mrf.mxu0
        %v596 = vadd.f32 0.0, %v595
        %v597 = vpop.f32.mrf.mxu0
        %v598 = vadd.f32 0.0, %v597
        %599 = vmatmul.bf16.gmra.mxu0 %v441
        %v600 = vpop.f32.mrf.mxu0
        %v601 = vadd.f32 0.0, %v600
        %v602 = vpop.f32.mrf.mxu0
        %v603 = vadd.f32 0.0, %v602
        %604 = vmatmul.bf16.gmra.mxu0 %v444
        %v605 = vpop.f32.mrf.mxu0
        %v606 = vadd.f32 0.0, %v605
        %v607 = vpop.f32.mrf.mxu0
        %v608 = vadd.f32 0.0, %v607
        %609 = vmatmul.bf16.gmra.mxu0 %v447
        %v610 = vpop.f32.mrf.mxu0
        %v611 = vadd.f32 0.0, %v610
        %v612 = vpop.f32.mrf.mxu0
        %v613 = vadd.f32 0.0, %v612
        %614 = vmatmul.bf16.gmra.mxu0 %v450
        %v615 = vpop.f32.mrf.mxu0
        %v616 = vadd.f32 0.0, %v615
        %v617 = vpop.f32.mrf.mxu0
        %v618 = vadd.f32 0.0, %v617
        %619 = vmatmul.bf16.gmra.mxu0 %v453
        %v620 = vpop.f32.mrf.mxu0
        %v621 = vadd.f32 0.0, %v620
        %v622 = vpop.f32.mrf.mxu0
        %v623 = vadd.f32 0.0, %v622
        %624 = vmatmul.bf16.gmra.mxu0 %v456
        %v625 = vpop.f32.mrf.mxu0
        %v626 = vadd.f32 0.0, %v625
        %v627 = vpop.f32.mrf.mxu0
        %v628 = vadd.f32 0.0, %v627
        %629 = vmatmul.bf16.gmra.mxu0 %v459
        %v630 = vpop.f32.mrf.mxu0
        %v631 = vadd.f32 0.0, %v630
        %v632 = vpop.f32.mrf.mxu0
        %v633 = vadd.f32 0.0, %v632
        %634 = vmatmul.bf16.gmra.mxu0 %v462
        %v635 = vpop.f32.mrf.mxu0
        %v636 = vadd.f32 0.0, %v635
        %v637 = vpop.f32.mrf.mxu0
        %v638 = vadd.f32 0.0, %v637
        %639 = vmatmul.bf16.gmra.mxu0 %v465
        %v640 = vpop.f32.mrf.mxu0
        %v641 = vadd.f32 0.0, %v640
        %v642 = vpop.f32.mrf.mxu0
        %v643 = vadd.f32 0.0, %v642
        %644 = vmatmul.bf16.gmra.mxu0 %v468
        %v645 = vpop.f32.mrf.mxu0
        %v646 = vadd.f32 0.0, %v645
        %v647 = vpop.f32.mrf.mxu0
        %v648 = vadd.f32 0.0, %v647
        %649 = vmatmul.bf16.gmra.mxu0 %v471
        %v650 = vpop.f32.mrf.mxu0
        %v651 = vadd.f32 0.0, %v650
        %v652 = vpop.f32.mrf.mxu0
        %v653 = vadd.f32 0.0, %v652
        %654 = vdwg.mxu0
        %656 = vst [vmem:[#allocation1] ss:$9 sm:$0xff] %v353
        %v657 = vld [vmem:[#allocation1] sm:$0xff]
        %v658 = vld [vmem:[#allocation1 + $0x9] sm:$0xff]
        %661 = vxpose.binary.xlu0.c.b16.start [1/16] %v658, %v657, 128
        %662 = vxpose.binary.xlu0.c.b16.cont [2/16] 0, 0, 128
        %663 = vxpose.binary.xlu0.c.b16.cont [3/16] 0, 0, 128
        %664 = vxpose.binary.xlu0.c.b16.cont [4/16] 0, 0, 128
        %665 = vxpose.binary.xlu0.c.b16.cont [5/16] 0, 0, 128
        %666 = vxpose.binary.xlu0.c.b16.cont [6/16] 0, 0, 128
        %667 = vxpose.binary.xlu0.c.b16.cont [7/16] 0, 0, 128
        %668 = vxpose.binary.xlu0.c.b16.end [8/16] 0, 0, 128
        %v669 = vpop.trf.xlu0
        %v670 = vpop.trf.xlu0
        %v671 = vpop.trf.xlu0
        %v672 = vpop.trf.xlu0
        %v673 = vpop.trf.xlu0
        %v674 = vpop.trf.xlu0
        %v675 = vpop.trf.xlu0
        %v676 = vpop.trf.xlu0
        %v677 = vpop.trf.xlu0
        %v678 = vpop.trf.xlu0
        %v679 = vpop.trf.xlu0
        %v680 = vpop.trf.xlu0
        %v681 = vpop.trf.xlu0
        %v682 = vpop.trf.xlu0
        %v683 = vpop.trf.xlu0
        %v684 = vpop.trf.xlu0
        %686 = vst [vmem:[#allocation1] ss:$9 sm:$0xff] %v370
        %v687 = vld [vmem:[#allocation1] sm:$0xff]
        %v688 = vld [vmem:[#allocation1 + $0x9] sm:$0xff]
        %v690 = vsel %vm424, %v669, 0
        %v693 = vsel %vm424, %v671, 0
        %v696 = vsel %vm424, %v673, 0
        %v699 = vsel %vm424, %v675, 0
        %v702 = vsel %vm424, %v677, 0
        %v705 = vsel %vm424, %v679, 0
        %v708 = vsel %vm424, %v681, 0
        %v711 = vsel %vm424, %v683, 0
        %v714 = vsel %vm424, %v670, 0
        %v717 = vsel %vm424, %v672, 0
        %v720 = vsel %vm424, %v674, 0
        %v723 = vsel %vm424, %v676, 0
        %v726 = vsel %vm424, %v678, 0
        %v729 = vsel %vm424, %v680, 0
        %v732 = vsel %vm424, %v682, 0
        %v735 = vsel %vm424, %v684, 0
        %v737 = vsel %vm346, %v687, 0
        %v739 = vsel %vm346, %v688, 0
        %741 = vmatpush.bf16.msra.mxu0 0
        %742 = vmatpush.bf16.msra.mxu0 0
        %743 = vmatpush.bf16.msra.mxu0 0
        %744 = vmatpush.bf16.msra.mxu0 0
        %745 = vmatpush.bf16.msra.mxu0 0
        %746 = vmatpush.bf16.msra.mxu0 0
        %747 = vmatpush.bf16.msra.mxu0 0
        %748 = vmatpush.bf16.msra.mxu0 %v737
        %749 = vmatmul.bf16.gmra.mxu0 %v690
        %v750 = vpop.f32.mrf.mxu0
        %v751 = vadd.f32 0.0, %v750
        %v752 = vpop.f32.mrf.mxu0
        %v753 = vadd.f32 0.0, %v752
        %754 = vmatmul.bf16.gmra.mxu0 %v693
        %v755 = vpop.f32.mrf.mxu0
        %v756 = vadd.f32 0.0, %v755
        %v757 = vpop.f32.mrf.mxu0
        %v758 = vadd.f32 0.0, %v757
        %759 = vmatmul.bf16.gmra.mxu0 %v696
        %v760 = vpop.f32.mrf.mxu0
        %v761 = vadd.f32 0.0, %v760
        %v762 = vpop.f32.mrf.mxu0
        %v763 = vadd.f32 0.0, %v762
        %764 = vmatmul.bf16.gmra.mxu0 %v699
        %v765 = vpop.f32.mrf.mxu0
        %v766 = vadd.f32 0.0, %v765
        %v767 = vpop.f32.mrf.mxu0
        %v768 = vadd.f32 0.0, %v767
        %769 = vmatmul.bf16.gmra.mxu0 %v702
        %v770 = vpop.f32.mrf.mxu0
        %v771 = vadd.f32 0.0, %v770
        %v772 = vpop.f32.mrf.mxu0
        %v773 = vadd.f32 0.0, %v772
        %774 = vmatmul.bf16.gmra.mxu0 %v705
        %v775 = vpop.f32.mrf.mxu0
        %v776 = vadd.f32 0.0, %v775
        %v777 = vpop.f32.mrf.mxu0
        %v778 = vadd.f32 0.0, %v777
        %779 = vmatmul.bf16.gmra.mxu0 %v708
        %v780 = vpop.f32.mrf.mxu0
        %v781 = vadd.f32 0.0, %v780
        %v782 = vpop.f32.mrf.mxu0
        %v783 = vadd.f32 0.0, %v782
        %784 = vmatmul.bf16.gmra.mxu0 %v711
        %v785 = vpop.f32.mrf.mxu0
        %v786 = vadd.f32 0.0, %v785
        %v787 = vpop.f32.mrf.mxu0
        %v788 = vadd.f32 0.0, %v787
        %789 = vmatmul.bf16.gmra.mxu0 %v714
        %v790 = vpop.f32.mrf.mxu0
        %v791 = vadd.f32 0.0, %v790
        %v792 = vpop.f32.mrf.mxu0
        %v793 = vadd.f32 0.0, %v792
        %794 = vmatmul.bf16.gmra.mxu0 %v717
        %v795 = vpop.f32.mrf.mxu0
        %v796 = vadd.f32 0.0, %v795
        %v797 = vpop.f32.mrf.mxu0
        %v798 = vadd.f32 0.0, %v797
        %799 = vmatmul.bf16.gmra.mxu0 %v720
        %v800 = vpop.f32.mrf.mxu0
        %v801 = vadd.f32 0.0, %v800
        %v802 = vpop.f32.mrf.mxu0
        %v803 = vadd.f32 0.0, %v802
        %804 = vmatmul.bf16.gmra.mxu0 %v723
        %v805 = vpop.f32.mrf.mxu0
        %v806 = vadd.f32 0.0, %v805
        %v807 = vpop.f32.mrf.mxu0
        %v808 = vadd.f32 0.0, %v807
        %809 = vmatmul.bf16.gmra.mxu0 %v726
        %v810 = vpop.f32.mrf.mxu0
        %v811 = vadd.f32 0.0, %v810
        %v812 = vpop.f32.mrf.mxu0
        %v813 = vadd.f32 0.0, %v812
        %814 = vmatmul.bf16.gmra.mxu0 %v729
        %v815 = vpop.f32.mrf.mxu0
        %v816 = vadd.f32 0.0, %v815
        %v817 = vpop.f32.mrf.mxu0
        %v818 = vadd.f32 0.0, %v817
        %819 = vmatmul.bf16.gmra.mxu0 %v732
        %v820 = vpop.f32.mrf.mxu0
        %v821 = vadd.f32 0.0, %v820
        %v822 = vpop.f32.mrf.mxu0
        %v823 = vadd.f32 0.0, %v822
        %824 = vmatmul.bf16.gmra.mxu0 %v735
        %v825 = vpop.f32.mrf.mxu0
        %v826 = vadd.f32 0.0, %v825
        %v827 = vpop.f32.mrf.mxu0
        %v828 = vadd.f32 0.0, %v827
        %829 = vdwg.mxu0
        %830 = vmatpush.bf16.msra.mxu0 0
        %831 = vmatpush.bf16.msra.mxu0 0
        %832 = vmatpush.bf16.msra.mxu0 0
        %833 = vmatpush.bf16.msra.mxu0 0
        %834 = vmatpush.bf16.msra.mxu0 0
        %835 = vmatpush.bf16.msra.mxu0 0
        %836 = vmatpush.bf16.msra.mxu0 0
        %837 = vmatpush.bf16.msra.mxu0 %v739
        %838 = vmatmul.bf16.gmra.mxu0 %v690
        %v839 = vpop.f32.mrf.mxu0
        %v840 = vadd.f32 0.0, %v839
        %v841 = vpop.f32.mrf.mxu0
        %v842 = vadd.f32 0.0, %v841
        %843 = vmatmul.bf16.gmra.mxu0 %v693
        %v844 = vpop.f32.mrf.mxu0
        %v845 = vadd.f32 0.0, %v844
        %v846 = vpop.f32.mrf.mxu0
        %v847 = vadd.f32 0.0, %v846
        %848 = vmatmul.bf16.gmra.mxu0 %v696
        %v849 = vpop.f32.mrf.mxu0
        %v850 = vadd.f32 0.0, %v849
        %v851 = vpop.f32.mrf.mxu0
        %v852 = vadd.f32 0.0, %v851
        %853 = vmatmul.bf16.gmra.mxu0 %v699
        %v854 = vpop.f32.mrf.mxu0
        %v855 = vadd.f32 0.0, %v854
        %v856 = vpop.f32.mrf.mxu0
        %v857 = vadd.f32 0.0, %v856
        %858 = vmatmul.bf16.gmra.mxu0 %v702
        %v859 = vpop.f32.mrf.mxu0
        %v860 = vadd.f32 0.0, %v859
        %v861 = vpop.f32.mrf.mxu0
        %v862 = vadd.f32 0.0, %v861
        %863 = vmatmul.bf16.gmra.mxu0 %v705
        %v864 = vpop.f32.mrf.mxu0
        %v865 = vadd.f32 0.0, %v864
        %v866 = vpop.f32.mrf.mxu0
        %v867 = vadd.f32 0.0, %v866
        %868 = vmatmul.bf16.gmra.mxu0 %v708
        %v869 = vpop.f32.mrf.mxu0
        %v870 = vadd.f32 0.0, %v869
        %v871 = vpop.f32.mrf.mxu0
        %v872 = vadd.f32 0.0, %v871
        %873 = vmatmul.bf16.gmra.mxu0 %v711
        %v874 = vpop.f32.mrf.mxu0
        %v875 = vadd.f32 0.0, %v874
        %v876 = vpop.f32.mrf.mxu0
        %v877 = vadd.f32 0.0, %v876
        %878 = vmatmul.bf16.gmra.mxu0 %v714
        %v879 = vpop.f32.mrf.mxu0
        %v880 = vadd.f32 0.0, %v879
        %v881 = vpop.f32.mrf.mxu0
        %v882 = vadd.f32 0.0, %v881
        %883 = vmatmul.bf16.gmra.mxu0 %v717
        %v884 = vpop.f32.mrf.mxu0
        %v885 = vadd.f32 0.0, %v884
        %v886 = vpop.f32.mrf.mxu0
        %v887 = vadd.f32 0.0, %v886
        %888 = vmatmul.bf16.gmra.mxu0 %v720
        %v889 = vpop.f32.mrf.mxu0
        %v890 = vadd.f32 0.0, %v889
        %v891 = vpop.f32.mrf.mxu0
        %v892 = vadd.f32 0.0, %v891
        %893 = vmatmul.bf16.gmra.mxu0 %v723
        %v894 = vpop.f32.mrf.mxu0
        %v895 = vadd.f32 0.0, %v894
        %v896 = vpop.f32.mrf.mxu0
        %v897 = vadd.f32 0.0, %v896
        %898 = vmatmul.bf16.gmra.mxu0 %v726
        %v899 = vpop.f32.mrf.mxu0
        %v900 = vadd.f32 0.0, %v899
        %v901 = vpop.f32.mrf.mxu0
        %v902 = vadd.f32 0.0, %v901
        %903 = vmatmul.bf16.gmra.mxu0 %v729
        %v904 = vpop.f32.mrf.mxu0
        %v905 = vadd.f32 0.0, %v904
        %v906 = vpop.f32.mrf.mxu0
        %v907 = vadd.f32 0.0, %v906
        %908 = vmatmul.bf16.gmra.mxu0 %v732
        %v909 = vpop.f32.mrf.mxu0
        %v910 = vadd.f32 0.0, %v909
        %v911 = vpop.f32.mrf.mxu0
        %v912 = vadd.f32 0.0, %v911
        %913 = vmatmul.bf16.gmra.mxu0 %v735
        %v914 = vpop.f32.mrf.mxu0
        %v915 = vadd.f32 0.0, %v914
        %v916 = vpop.f32.mrf.mxu0
        %v917 = vadd.f32 0.0, %v916
        %918 = vdwg.mxu0
        %920 = vst [vmem:[#allocation1] ss:$9 sm:$0xff] %v357
        %v921 = vld [vmem:[#allocation1] sm:$0xff]
        %v922 = vld [vmem:[#allocation1 + $0x9] sm:$0xff]
        %925 = vxpose.binary.xlu0.c.b16.start [1/16] %v922, %v921, 128
        %926 = vxpose.binary.xlu0.c.b16.cont [2/16] 0, 0, 128
        %927 = vxpose.binary.xlu0.c.b16.cont [3/16] 0, 0, 128
        %928 = vxpose.binary.xlu0.c.b16.cont [4/16] 0, 0, 128
        %929 = vxpose.binary.xlu0.c.b16.cont [5/16] 0, 0, 128
        %930 = vxpose.binary.xlu0.c.b16.cont [6/16] 0, 0, 128
        %931 = vxpose.binary.xlu0.c.b16.cont [7/16] 0, 0, 128
        %932 = vxpose.binary.xlu0.c.b16.end [8/16] 0, 0, 128
        %v933 = vpop.trf.xlu0
        %v934 = vpop.trf.xlu0
        %v935 = vpop.trf.xlu0
        %v936 = vpop.trf.xlu0
        %v937 = vpop.trf.xlu0
        %v938 = vpop.trf.xlu0
        %v939 = vpop.trf.xlu0
        %v940 = vpop.trf.xlu0
        %v941 = vpop.trf.xlu0
        %v942 = vpop.trf.xlu0
        %v943 = vpop.trf.xlu0
        %v944 = vpop.trf.xlu0
        %v945 = vpop.trf.xlu0
        %v946 = vpop.trf.xlu0
        %v947 = vpop.trf.xlu0
        %v948 = vpop.trf.xlu0
        %950 = vst [vmem:[#allocation1] ss:$9 sm:$0xff] %v373
        %v951 = vld [vmem:[#allocation1] sm:$0xff]
        %v952 = vld [vmem:[#allocation1 + $0x9] sm:$0xff]
        %v954 = vsel %vm424, %v933, 0
        %v957 = vsel %vm424, %v935, 0
        %v960 = vsel %vm424, %v937, 0
        %v963 = vsel %vm424, %v939, 0
        %v966 = vsel %vm424, %v941, 0
        %v969 = vsel %vm424, %v943, 0
        %v972 = vsel %vm424, %v945, 0
        %v975 = vsel %vm424, %v947, 0
        %v978 = vsel %vm424, %v934, 0
        %v981 = vsel %vm424, %v936, 0
        %v984 = vsel %vm424, %v938, 0
        %v987 = vsel %vm424, %v940, 0
        %v990 = vsel %vm424, %v942, 0
        %v993 = vsel %vm424, %v944, 0
        %v996 = vsel %vm424, %v946, 0
        %v999 = vsel %vm424, %v948, 0
        %v1001 = vsel %vm346, %v951, 0
        %v1003 = vsel %vm346, %v952, 0
        %1005 = vmatpush.bf16.msra.mxu0 0
        %1006 = vmatpush.bf16.msra.mxu0 0
        %1007 = vmatpush.bf16.msra.mxu0 0
        %1008 = vmatpush.bf16.msra.mxu0 0
        %1009 = vmatpush.bf16.msra.mxu0 0
        %1010 = vmatpush.bf16.msra.mxu0 0
        %1011 = vmatpush.bf16.msra.mxu0 0
        %1012 = vmatpush.bf16.msra.mxu0 %v1001
        %1013 = vmatmul.bf16.gmra.mxu0 %v954
        %v1014 = vpop.f32.mrf.mxu0
        %v1015 = vadd.f32 0.0, %v1014
        %v1016 = vpop.f32.mrf.mxu0
        %v1017 = vadd.f32 0.0, %v1016
        %1018 = vmatmul.bf16.gmra.mxu0 %v957
        %v1019 = vpop.f32.mrf.mxu0
        %v1020 = vadd.f32 0.0, %v1019
        %v1021 = vpop.f32.mrf.mxu0
        %v1022 = vadd.f32 0.0, %v1021
        %1023 = vmatmul.bf16.gmra.mxu0 %v960
        %v1024 = vpop.f32.mrf.mxu0
        %v1025 = vadd.f32 0.0, %v1024
        %v1026 = vpop.f32.mrf.mxu0
        %v1027 = vadd.f32 0.0, %v1026
        %1028 = vmatmul.bf16.gmra.mxu0 %v963
        %v1029 = vpop.f32.mrf.mxu0
        %v1030 = vadd.f32 0.0, %v1029
        %v1031 = vpop.f32.mrf.mxu0
        %v1032 = vadd.f32 0.0, %v1031
        %1033 = vmatmul.bf16.gmra.mxu0 %v966
        %v1034 = vpop.f32.mrf.mxu0
        %v1035 = vadd.f32 0.0, %v1034
        %v1036 = vpop.f32.mrf.mxu0
        %v1037 = vadd.f32 0.0, %v1036
        %1038 = vmatmul.bf16.gmra.mxu0 %v969
        %v1039 = vpop.f32.mrf.mxu0
        %v1040 = vadd.f32 0.0, %v1039
        %v1041 = vpop.f32.mrf.mxu0
        %v1042 = vadd.f32 0.0, %v1041
        %1043 = vmatmul.bf16.gmra.mxu0 %v972
        %v1044 = vpop.f32.mrf.mxu0
        %v1045 = vadd.f32 0.0, %v1044
        %v1046 = vpop.f32.mrf.mxu0
        %v1047 = vadd.f32 0.0, %v1046
        %1048 = vmatmul.bf16.gmra.mxu0 %v975
        %v1049 = vpop.f32.mrf.mxu0
        %v1050 = vadd.f32 0.0, %v1049
        %v1051 = vpop.f32.mrf.mxu0
        %v1052 = vadd.f32 0.0, %v1051
        %1053 = vmatmul.bf16.gmra.mxu0 %v978
        %v1054 = vpop.f32.mrf.mxu0
        %v1055 = vadd.f32 0.0, %v1054
        %v1056 = vpop.f32.mrf.mxu0
        %v1057 = vadd.f32 0.0, %v1056
        %1058 = vmatmul.bf16.gmra.mxu0 %v981
        %v1059 = vpop.f32.mrf.mxu0
        %v1060 = vadd.f32 0.0, %v1059
        %v1061 = vpop.f32.mrf.mxu0
        %v1062 = vadd.f32 0.0, %v1061
        %1063 = vmatmul.bf16.gmra.mxu0 %v984
        %v1064 = vpop.f32.mrf.mxu0
        %v1065 = vadd.f32 0.0, %v1064
        %v1066 = vpop.f32.mrf.mxu0
        %v1067 = vadd.f32 0.0, %v1066
        %1068 = vmatmul.bf16.gmra.mxu0 %v987
        %v1069 = vpop.f32.mrf.mxu0
        %v1070 = vadd.f32 0.0, %v1069
        %v1071 = vpop.f32.mrf.mxu0
        %v1072 = vadd.f32 0.0, %v1071
        %1073 = vmatmul.bf16.gmra.mxu0 %v990
        %v1074 = vpop.f32.mrf.mxu0
        %v1075 = vadd.f32 0.0, %v1074
        %v1076 = vpop.f32.mrf.mxu0
        %v1077 = vadd.f32 0.0, %v1076
        %1078 = vmatmul.bf16.gmra.mxu0 %v993
        %v1079 = vpop.f32.mrf.mxu0
        %v1080 = vadd.f32 0.0, %v1079
        %v1081 = vpop.f32.mrf.mxu0
        %v1082 = vadd.f32 0.0, %v1081
        %1083 = vmatmul.bf16.gmra.mxu0 %v996
        %v1084 = vpop.f32.mrf.mxu0
        %v1085 = vadd.f32 0.0, %v1084
        %v1086 = vpop.f32.mrf.mxu0
        %v1087 = vadd.f32 0.0, %v1086
        %1088 = vmatmul.bf16.gmra.mxu0 %v999
        %v1089 = vpop.f32.mrf.mxu0
        %v1090 = vadd.f32 0.0, %v1089
        %v1091 = vpop.f32.mrf.mxu0
        %v1092 = vadd.f32 0.0, %v1091
        %1093 = vdwg.mxu0
        %1094 = vmatpush.bf16.msra.mxu0 0
        %1095 = vmatpush.bf16.msra.mxu0 0
        %1096 = vmatpush.bf16.msra.mxu0 0
        %1097 = vmatpush.bf16.msra.mxu0 0
        %1098 = vmatpush.bf16.msra.mxu0 0
        %1099 = vmatpush.bf16.msra.mxu0 0
        %1100 = vmatpush.bf16.msra.mxu0 0
        %1101 = vmatpush.bf16.msra.mxu0 %v1003
        %1102 = vmatmul.bf16.gmra.mxu0 %v954
        %v1103 = vpop.f32.mrf.mxu0
        %v1104 = vadd.f32 0.0, %v1103
        %v1105 = vpop.f32.mrf.mxu0
        %v1106 = vadd.f32 0.0, %v1105
        %1107 = vmatmul.bf16.gmra.mxu0 %v957
        %v1108 = vpop.f32.mrf.mxu0
        %v1109 = vadd.f32 0.0, %v1108
        %v1110 = vpop.f32.mrf.mxu0
        %v1111 = vadd.f32 0.0, %v1110
        %1112 = vmatmul.bf16.gmra.mxu0 %v960
        %v1113 = vpop.f32.mrf.mxu0
        %v1114 = vadd.f32 0.0, %v1113
        %v1115 = vpop.f32.mrf.mxu0
        %v1116 = vadd.f32 0.0, %v1115
        %1117 = vmatmul.bf16.gmra.mxu0 %v963
        %v1118 = vpop.f32.mrf.mxu0
        %v1119 = vadd.f32 0.0, %v1118
        %v1120 = vpop.f32.mrf.mxu0
        %v1121 = vadd.f32 0.0, %v1120
        %1122 = vmatmul.bf16.gmra.mxu0 %v966
        %v1123 = vpop.f32.mrf.mxu0
        %v1124 = vadd.f32 0.0, %v1123
        %v1125 = vpop.f32.mrf.mxu0
        %v1126 = vadd.f32 0.0, %v1125
        %1127 = vmatmul.bf16.gmra.mxu0 %v969
        %v1128 = vpop.f32.mrf.mxu0
        %v1129 = vadd.f32 0.0, %v1128
        %v1130 = vpop.f32.mrf.mxu0
        %v1131 = vadd.f32 0.0, %v1130
        %1132 = vmatmul.bf16.gmra.mxu0 %v972
        %v1133 = vpop.f32.mrf.mxu0
        %v1134 = vadd.f32 0.0, %v1133
        %v1135 = vpop.f32.mrf.mxu0
        %v1136 = vadd.f32 0.0, %v1135
        %1137 = vmatmul.bf16.gmra.mxu0 %v975
        %v1138 = vpop.f32.mrf.mxu0
        %v1139 = vadd.f32 0.0, %v1138
        %v1140 = vpop.f32.mrf.mxu0
        %v1141 = vadd.f32 0.0, %v1140
        %1142 = vmatmul.bf16.gmra.mxu0 %v978
        %v1143 = vpop.f32.mrf.mxu0
        %v1144 = vadd.f32 0.0, %v1143
        %v1145 = vpop.f32.mrf.mxu0
        %v1146 = vadd.f32 0.0, %v1145
        %1147 = vmatmul.bf16.gmra.mxu0 %v981
        %v1148 = vpop.f32.mrf.mxu0
        %v1149 = vadd.f32 0.0, %v1148
        %v1150 = vpop.f32.mrf.mxu0
        %v1151 = vadd.f32 0.0, %v1150
        %1152 = vmatmul.bf16.gmra.mxu0 %v984
        %v1153 = vpop.f32.mrf.mxu0
        %v1154 = vadd.f32 0.0, %v1153
        %v1155 = vpop.f32.mrf.mxu0
        %v1156 = vadd.f32 0.0, %v1155
        %1157 = vmatmul.bf16.gmra.mxu0 %v987
        %v1158 = vpop.f32.mrf.mxu0
        %v1159 = vadd.f32 0.0, %v1158
        %v1160 = vpop.f32.mrf.mxu0
        %v1161 = vadd.f32 0.0, %v1160
        %1162 = vmatmul.bf16.gmra.mxu0 %v990
        %v1163 = vpop.f32.mrf.mxu0
        %v1164 = vadd.f32 0.0, %v1163
        %v1165 = vpop.f32.mrf.mxu0
        %v1166 = vadd.f32 0.0, %v1165
        %1167 = vmatmul.bf16.gmra.mxu0 %v993
        %v1168 = vpop.f32.mrf.mxu0
        %v1169 = vadd.f32 0.0, %v1168
        %v1170 = vpop.f32.mrf.mxu0
        %v1171 = vadd.f32 0.0, %v1170
        %1172 = vmatmul.bf16.gmra.mxu0 %v996
        %v1173 = vpop.f32.mrf.mxu0
        %v1174 = vadd.f32 0.0, %v1173
        %v1175 = vpop.f32.mrf.mxu0
        %v1176 = vadd.f32 0.0, %v1175
        %1177 = vmatmul.bf16.gmra.mxu0 %v999
        %v1178 = vpop.f32.mrf.mxu0
        %v1179 = vadd.f32 0.0, %v1178
        %v1180 = vpop.f32.mrf.mxu0
        %v1181 = vadd.f32 0.0, %v1180
        %1182 = vdwg.mxu0
        %1184 = vst [vmem:[#allocation1] ss:$9 sm:$0xff] %v361
        %v1185 = vld [vmem:[#allocation1] sm:$0xff]
        %v1186 = vld [vmem:[#allocation1 + $0x9] sm:$0xff]
        %1189 = vxpose.binary.xlu0.c.b16.start [1/16] %v1186, %v1185, 128
        %1190 = vxpose.binary.xlu0.c.b16.cont [2/16] 0, 0, 128
        %1191 = vxpose.binary.xlu0.c.b16.cont [3/16] 0, 0, 128
        %1192 = vxpose.binary.xlu0.c.b16.cont [4/16] 0, 0, 128
        %1193 = vxpose.binary.xlu0.c.b16.cont [5/16] 0, 0, 128
        %1194 = vxpose.binary.xlu0.c.b16.cont [6/16] 0, 0, 128
        %1195 = vxpose.binary.xlu0.c.b16.cont [7/16] 0, 0, 128
        %1196 = vxpose.binary.xlu0.c.b16.end [8/16] 0, 0, 128
        %v1197 = vpop.trf.xlu0
        %v1198 = vpop.trf.xlu0
        %v1199 = vpop.trf.xlu0
        %v1200 = vpop.trf.xlu0
        %v1201 = vpop.trf.xlu0
        %v1202 = vpop.trf.xlu0
        %v1203 = vpop.trf.xlu0
        %v1204 = vpop.trf.xlu0
        %v1205 = vpop.trf.xlu0
        %v1206 = vpop.trf.xlu0
        %v1207 = vpop.trf.xlu0
        %v1208 = vpop.trf.xlu0
        %v1209 = vpop.trf.xlu0
        %v1210 = vpop.trf.xlu0
        %v1211 = vpop.trf.xlu0
        %v1212 = vpop.trf.xlu0
        %1214 = vst [vmem:[#allocation1] ss:$9 sm:$0xff] %v376
        %v1215 = vld [vmem:[#allocation1] sm:$0xff]
        %v1216 = vld [vmem:[#allocation1 + $0x9] sm:$0xff]
        %v1218 = vsel %vm424, %v1197, 0
        %v1221 = vsel %vm424, %v1199, 0
        %v1224 = vsel %vm424, %v1201, 0
        %v1227 = vsel %vm424, %v1203, 0
        %v1230 = vsel %vm424, %v1205, 0
        %v1233 = vsel %vm424, %v1207, 0
        %v1236 = vsel %vm424, %v1209, 0
        %v1239 = vsel %vm424, %v1211, 0
        %v1242 = vsel %vm424, %v1198, 0
        %v1245 = vsel %vm424, %v1200, 0
        %v1248 = vsel %vm424, %v1202, 0
        %v1251 = vsel %vm424, %v1204, 0
        %v1254 = vsel %vm424, %v1206, 0
        %v1257 = vsel %vm424, %v1208, 0
        %v1260 = vsel %vm424, %v1210, 0
        %v1263 = vsel %vm424, %v1212, 0
        %v1265 = vsel %vm346, %v1215, 0
        %v1267 = vsel %vm346, %v1216, 0
        %1269 = vmatpush.bf16.msra.mxu0 0
        %1270 = vmatpush.bf16.msra.mxu0 0
        %1271 = vmatpush.bf16.msra.mxu0 0
        %1272 = vmatpush.bf16.msra.mxu0 0
        %1273 = vmatpush.bf16.msra.mxu0 0
        %1274 = vmatpush.bf16.msra.mxu0 0
        %1275 = vmatpush.bf16.msra.mxu0 0
        %1276 = vmatpush.bf16.msra.mxu0 %v1265
        %1277 = vmatmul.bf16.gmra.mxu0 %v1218
        %v1278 = vpop.f32.mrf.mxu0
        %v1279 = vadd.f32 0.0, %v1278
        %v1280 = vpop.f32.mrf.mxu0
        %v1281 = vadd.f32 0.0, %v1280
        %1282 = vmatmul.bf16.gmra.mxu0 %v1221
        %v1283 = vpop.f32.mrf.mxu0
        %v1284 = vadd.f32 0.0, %v1283
        %v1285 = vpop.f32.mrf.mxu0
        %v1286 = vadd.f32 0.0, %v1285
        %1287 = vmatmul.bf16.gmra.mxu0 %v1224
        %v1288 = vpop.f32.mrf.mxu0
        %v1289 = vadd.f32 0.0, %v1288
        %v1290 = vpop.f32.mrf.mxu0
        %v1291 = vadd.f32 0.0, %v1290
        %1292 = vmatmul.bf16.gmra.mxu0 %v1227
        %v1293 = vpop.f32.mrf.mxu0
        %v1294 = vadd.f32 0.0, %v1293
        %v1295 = vpop.f32.mrf.mxu0
        %v1296 = vadd.f32 0.0, %v1295
        %1297 = vmatmul.bf16.gmra.mxu0 %v1230
        %v1298 = vpop.f32.mrf.mxu0
        %v1299 = vadd.f32 0.0, %v1298
        %v1300 = vpop.f32.mrf.mxu0
        %v1301 = vadd.f32 0.0, %v1300
        %1302 = vmatmul.bf16.gmra.mxu0 %v1233
        %v1303 = vpop.f32.mrf.mxu0
        %v1304 = vadd.f32 0.0, %v1303
        %v1305 = vpop.f32.mrf.mxu0
        %v1306 = vadd.f32 0.0, %v1305
        %1307 = vmatmul.bf16.gmra.mxu0 %v1236
        %v1308 = vpop.f32.mrf.mxu0
        %v1309 = vadd.f32 0.0, %v1308
        %v1310 = vpop.f32.mrf.mxu0
        %v1311 = vadd.f32 0.0, %v1310
        %1312 = vmatmul.bf16.gmra.mxu0 %v1239
        %v1313 = vpop.f32.mrf.mxu0
        %v1314 = vadd.f32 0.0, %v1313
        %v1315 = vpop.f32.mrf.mxu0
        %v1316 = vadd.f32 0.0, %v1315
        %1317 = vmatmul.bf16.gmra.mxu0 %v1242
        %v1318 = vpop.f32.mrf.mxu0
        %v1319 = vadd.f32 0.0, %v1318
        %v1320 = vpop.f32.mrf.mxu0
        %v1321 = vadd.f32 0.0, %v1320
        %1322 = vmatmul.bf16.gmra.mxu0 %v1245
        %v1323 = vpop.f32.mrf.mxu0
        %v1324 = vadd.f32 0.0, %v1323
        %v1325 = vpop.f32.mrf.mxu0
        %v1326 = vadd.f32 0.0, %v1325
        %1327 = vmatmul.bf16.gmra.mxu0 %v1248
        %v1328 = vpop.f32.mrf.mxu0
        %v1329 = vadd.f32 0.0, %v1328
        %v1330 = vpop.f32.mrf.mxu0
        %v1331 = vadd.f32 0.0, %v1330
        %1332 = vmatmul.bf16.gmra.mxu0 %v1251
        %v1333 = vpop.f32.mrf.mxu0
        %v1334 = vadd.f32 0.0, %v1333
        %v1335 = vpop.f32.mrf.mxu0
        %v1336 = vadd.f32 0.0, %v1335
        %1337 = vmatmul.bf16.gmra.mxu0 %v1254
        %v1338 = vpop.f32.mrf.mxu0
        %v1339 = vadd.f32 0.0, %v1338
        %v1340 = vpop.f32.mrf.mxu0
        %v1341 = vadd.f32 0.0, %v1340
        %1342 = vmatmul.bf16.gmra.mxu0 %v1257
        %v1343 = vpop.f32.mrf.mxu0
        %v1344 = vadd.f32 0.0, %v1343
        %v1345 = vpop.f32.mrf.mxu0
        %v1346 = vadd.f32 0.0, %v1345
        %1347 = vmatmul.bf16.gmra.mxu0 %v1260
        %v1348 = vpop.f32.mrf.mxu0
        %v1349 = vadd.f32 0.0, %v1348
        %v1350 = vpop.f32.mrf.mxu0
        %v1351 = vadd.f32 0.0, %v1350
        %1352 = vmatmul.bf16.gmra.mxu0 %v1263
        %v1353 = vpop.f32.mrf.mxu0
        %v1354 = vadd.f32 0.0, %v1353
        %v1355 = vpop.f32.mrf.mxu0
        %v1356 = vadd.f32 0.0, %v1355
        %1357 = vdwg.mxu0
        %1358 = vmatpush.bf16.msra.mxu0 0
        %1359 = vmatpush.bf16.msra.mxu0 0
        %1360 = vmatpush.bf16.msra.mxu0 0
        %1361 = vmatpush.bf16.msra.mxu0 0
        %1362 = vmatpush.bf16.msra.mxu0 0
        %1363 = vmatpush.bf16.msra.mxu0 0
        %1364 = vmatpush.bf16.msra.mxu0 0
        %1365 = vmatpush.bf16.msra.mxu0 %v1267
        %1366 = vmatmul.bf16.gmra.mxu0 %v1218
        %v1367 = vpop.f32.mrf.mxu0
        %v1368 = vadd.f32 0.0, %v1367
        %v1369 = vpop.f32.mrf.mxu0
        %v1370 = vadd.f32 0.0, %v1369
        %1371 = vmatmul.bf16.gmra.mxu0 %v1221
        %v1372 = vpop.f32.mrf.mxu0
        %v1373 = vadd.f32 0.0, %v1372
        %v1374 = vpop.f32.mrf.mxu0
        %v1375 = vadd.f32 0.0, %v1374
        %1376 = vmatmul.bf16.gmra.mxu0 %v1224
        %v1377 = vpop.f32.mrf.mxu0
        %v1378 = vadd.f32 0.0, %v1377
        %v1379 = vpop.f32.mrf.mxu0
        %v1380 = vadd.f32 0.0, %v1379
        %1381 = vmatmul.bf16.gmra.mxu0 %v1227
        %v1382 = vpop.f32.mrf.mxu0
        %v1383 = vadd.f32 0.0, %v1382
        %v1384 = vpop.f32.mrf.mxu0
        %v1385 = vadd.f32 0.0, %v1384
        %1386 = vmatmul.bf16.gmra.mxu0 %v1230
        %v1387 = vpop.f32.mrf.mxu0
        %v1388 = vadd.f32 0.0, %v1387
        %v1389 = vpop.f32.mrf.mxu0
        %v1390 = vadd.f32 0.0, %v1389
        %1391 = vmatmul.bf16.gmra.mxu0 %v1233
        %v1392 = vpop.f32.mrf.mxu0
        %v1393 = vadd.f32 0.0, %v1392
        %v1394 = vpop.f32.mrf.mxu0
        %v1395 = vadd.f32 0.0, %v1394
        %1396 = vmatmul.bf16.gmra.mxu0 %v1236
        %v1397 = vpop.f32.mrf.mxu0
        %v1398 = vadd.f32 0.0, %v1397
        %v1399 = vpop.f32.mrf.mxu0
        %v1400 = vadd.f32 0.0, %v1399
        %1401 = vmatmul.bf16.gmra.mxu0 %v1239
        %v1402 = vpop.f32.mrf.mxu0
        %v1403 = vadd.f32 0.0, %v1402
        %v1404 = vpop.f32.mrf.mxu0
        %v1405 = vadd.f32 0.0, %v1404
        %1406 = vmatmul.bf16.gmra.mxu0 %v1242
        %v1407 = vpop.f32.mrf.mxu0
        %v1408 = vadd.f32 0.0, %v1407
        %v1409 = vpop.f32.mrf.mxu0
        %v1410 = vadd.f32 0.0, %v1409
        %1411 = vmatmul.bf16.gmra.mxu0 %v1245
        %v1412 = vpop.f32.mrf.mxu0
        %v1413 = vadd.f32 0.0, %v1412
        %v1414 = vpop.f32.mrf.mxu0
        %v1415 = vadd.f32 0.0, %v1414
        %1416 = vmatmul.bf16.gmra.mxu0 %v1248
        %v1417 = vpop.f32.mrf.mxu0
        %v1418 = vadd.f32 0.0, %v1417
        %v1419 = vpop.f32.mrf.mxu0
        %v1420 = vadd.f32 0.0, %v1419
        %1421 = vmatmul.bf16.gmra.mxu0 %v1251
        %v1422 = vpop.f32.mrf.mxu0
        %v1423 = vadd.f32 0.0, %v1422
        %v1424 = vpop.f32.mrf.mxu0
        %v1425 = vadd.f32 0.0, %v1424
        %1426 = vmatmul.bf16.gmra.mxu0 %v1254
        %v1427 = vpop.f32.mrf.mxu0
        %v1428 = vadd.f32 0.0, %v1427
        %v1429 = vpop.f32.mrf.mxu0
        %v1430 = vadd.f32 0.0, %v1429
        %1431 = vmatmul.bf16.gmra.mxu0 %v1257
        %v1432 = vpop.f32.mrf.mxu0
        %v1433 = vadd.f32 0.0, %v1432
        %v1434 = vpop.f32.mrf.mxu0
        %v1435 = vadd.f32 0.0, %v1434
        %1436 = vmatmul.bf16.gmra.mxu0 %v1260
        %v1437 = vpop.f32.mrf.mxu0
        %v1438 = vadd.f32 0.0, %v1437
        %v1439 = vpop.f32.mrf.mxu0
        %v1440 = vadd.f32 0.0, %v1439
        %1441 = vmatmul.bf16.gmra.mxu0 %v1263
        %v1442 = vpop.f32.mrf.mxu0
        %v1443 = vadd.f32 0.0, %v1442
        %v1444 = vpop.f32.mrf.mxu0
        %v1445 = vadd.f32 0.0, %v1444
        %1446 = vdwg.mxu0
        %v1447 = vmax.f32 %v487, %v489
        %v1448 = vmax.f32 %v1447, %v492
        %v1449 = vmax.f32 %v1448, %v494
        %v1450 = vmax.f32 %v1449, %v497
        %v1451 = vmax.f32 %v1450, %v499
        %v1452 = vmax.f32 %v1451, %v502
        %v1453 = vmax.f32 %v1452, %v504
        %v1454 = vmax.f32 %v1453, %v507
        %v1455 = vmax.f32 %v1454, %v509
        %v1456 = vmax.f32 %v1455, %v512
        %v1457 = vmax.f32 %v1456, %v514
        %v1458 = vmax.f32 %v1457, %v517
        %v1459 = vmax.f32 %v1458, %v519
        %v1460 = vmax.f32 %v1459, %v522
        %v1461 = vmax.f32 %v1460, %v524
        %v1462 = vmax.f32 %v1461, %v527
        %v1463 = vmax.f32 %v1462, %v529
        %v1464 = vmax.f32 %v1463, %v532
        %v1465 = vmax.f32 %v1464, %v534
        %v1466 = vmax.f32 %v1465, %v537
        %v1467 = vmax.f32 %v1466, %v539
        %v1468 = vmax.f32 %v1467, %v542
        %v1469 = vmax.f32 %v1468, %v544
        %v1470 = vmax.f32 %v1469, %v547
        %v1471 = vmax.f32 %v1470, %v549
        %v1472 = vmax.f32 %v1471, %v552
        %v1473 = vmax.f32 %v1472, %v554
        %v1474 = vmax.f32 %v1473, %v557
        %v1475 = vmax.f32 %v1474, %v559
        %v1476 = vmax.f32 %v1475, %v562
        %v1477 = vmax.f32 %v1476, %v564
        %v1478 = vrot.slane %v1477, 4
        %v1479 = vmax.f32 %v1477, %v1478
        %v1480 = vrot.slane %v1479, 2
        %v1481 = vmax.f32 %v1479, %v1480
        %v1482 = vrot.slane %v1481, 1
        %v1483 = vmax.f32 %v1481, %v1482
        %v1484 = vmax.f32 %v576, %v578
        %v1485 = vmax.f32 %v1484, %v581
        %v1486 = vmax.f32 %v1485, %v583
        %v1487 = vmax.f32 %v1486, %v586
        %v1488 = vmax.f32 %v1487, %v588
        %v1489 = vmax.f32 %v1488, %v591
        %v1490 = vmax.f32 %v1489, %v593
        %v1491 = vmax.f32 %v1490, %v596
        %v1492 = vmax.f32 %v1491, %v598
        %v1493 = vmax.f32 %v1492, %v601
        %v1494 = vmax.f32 %v1493, %v603
        %v1495 = vmax.f32 %v1494, %v606
        %v1496 = vmax.f32 %v1495, %v608
        %v1497 = vmax.f32 %v1496, %v611
        %v1498 = vmax.f32 %v1497, %v613
        %v1499 = vmax.f32 %v1498, %v616
        %v1500 = vmax.f32 %v1499, %v618
        %v1501 = vmax.f32 %v1500, %v621
        %v1502 = vmax.f32 %v1501, %v623
        %v1503 = vmax.f32 %v1502, %v626
        %v1504 = vmax.f32 %v1503, %v628
        %v1505 = vmax.f32 %v1504, %v631
        %v1506 = vmax.f32 %v1505, %v633
        %v1507 = vmax.f32 %v1506, %v636
        %v1508 = vmax.f32 %v1507, %v638
        %v1509 = vmax.f32 %v1508, %v641
        %v1510 = vmax.f32 %v1509, %v643
        %v1511 = vmax.f32 %v1510, %v646
        %v1512 = vmax.f32 %v1511, %v648
        %v1513 = vmax.f32 %v1512, %v651
        %v1514 = vmax.f32 %v1513, %v653
        %v1515 = vrot.slane %v1514, 4
        %v1516 = vmax.f32 %v1514, %v1515
        %v1517 = vrot.slane %v1516, 2
        %v1518 = vmax.f32 %v1516, %v1517
        %v1519 = vrot.slane %v1518, 1
        %v1520 = vmax.f32 %v1518, %v1519
        %v1521 = vmax.f32 %v751, %v753
        %v1522 = vmax.f32 %v1521, %v756
        %v1523 = vmax.f32 %v1522, %v758
        %v1524 = vmax.f32 %v1523, %v761
        %v1525 = vmax.f32 %v1524, %v763
        %v1526 = vmax.f32 %v1525, %v766
        %v1527 = vmax.f32 %v1526, %v768
        %v1528 = vmax.f32 %v1527, %v771
        %v1529 = vmax.f32 %v1528, %v773
        %v1530 = vmax.f32 %v1529, %v776
        %v1531 = vmax.f32 %v1530, %v778
        %v1532 = vmax.f32 %v1531, %v781
        %v1533 = vmax.f32 %v1532, %v783
        %v1534 = vmax.f32 %v1533, %v786
        %v1535 = vmax.f32 %v1534, %v788
        %v1536 = vmax.f32 %v1535, %v791
        %v1537 = vmax.f32 %v1536, %v793
        %v1538 = vmax.f32 %v1537, %v796
        %v1539 = vmax.f32 %v1538, %v798
        %v1540 = vmax.f32 %v1539, %v801
        %v1541 = vmax.f32 %v1540, %v803
        %v1542 = vmax.f32 %v1541, %v806
        %v1543 = vmax.f32 %v1542, %v808
        %v1544 = vmax.f32 %v1543, %v811
        %v1545 = vmax.f32 %v1544, %v813
        %v1546 = vmax.f32 %v1545, %v816
        %v1547 = vmax.f32 %v1546, %v818
        %v1548 = vmax.f32 %v1547, %v821
        %v1549 = vmax.f32 %v1548, %v823
        %v1550 = vmax.f32 %v1549, %v826
        %v1551 = vmax.f32 %v1550, %v828
        %v1552 = vrot.slane %v1551, 4
        %v1553 = vmax.f32 %v1551, %v1552
        %v1554 = vrot.slane %v1553, 2
        %v1555 = vmax.f32 %v1553, %v1554
        %v1556 = vrot.slane %v1555, 1
        %v1557 = vmax.f32 %v1555, %v1556
        %v1558 = vmax.f32 %v840, %v842
        %v1559 = vmax.f32 %v1558, %v845
        %v1560 = vmax.f32 %v1559, %v847
        %v1561 = vmax.f32 %v1560, %v850
        %v1562 = vmax.f32 %v1561, %v852
        %v1563 = vmax.f32 %v1562, %v855
        %v1564 = vmax.f32 %v1563, %v857
        %v1565 = vmax.f32 %v1564, %v860
        %v1566 = vmax.f32 %v1565, %v862
        %v1567 = vmax.f32 %v1566, %v865
        %v1568 = vmax.f32 %v1567, %v867
        %v1569 = vmax.f32 %v1568, %v870
        %v1570 = vmax.f32 %v1569, %v872
        %v1571 = vmax.f32 %v1570, %v875
        %v1572 = vmax.f32 %v1571, %v877
        %v1573 = vmax.f32 %v1572, %v880
        %v1574 = vmax.f32 %v1573, %v882
        %v1575 = vmax.f32 %v1574, %v885
        %v1576 = vmax.f32 %v1575, %v887
        %v1577 = vmax.f32 %v1576, %v890
        %v1578 = vmax.f32 %v1577, %v892
        %v1579 = vmax.f32 %v1578, %v895
        %v1580 = vmax.f32 %v1579, %v897
        %v1581 = vmax.f32 %v1580, %v900
        %v1582 = vmax.f32 %v1581, %v902
        %v1583 = vmax.f32 %v1582, %v905
        %v1584 = vmax.f32 %v1583, %v907
        %v1585 = vmax.f32 %v1584, %v910
        %v1586 = vmax.f32 %v1585, %v912
        %v1587 = vmax.f32 %v1586, %v915
        %v1588 = vmax.f32 %v1587, %v917
        %v1589 = vrot.slane %v1588, 4
        %v1590 = vmax.f32 %v1588, %v1589
        %v1591 = vrot.slane %v1590, 2
        %v1592 = vmax.f32 %v1590, %v1591
        %v1593 = vrot.slane %v1592, 1
        %v1594 = vmax.f32 %v1592, %v1593
        %v1595 = vmax.f32 %v1015, %v1017
        %v1596 = vmax.f32 %v1595, %v1020
        %v1597 = vmax.f32 %v1596, %v1022
        %v1598 = vmax.f32 %v1597, %v1025
        %v1599 = vmax.f32 %v1598, %v1027
        %v1600 = vmax.f32 %v1599, %v1030
        %v1601 = vmax.f32 %v1600, %v1032
        %v1602 = vmax.f32 %v1601, %v1035
        %v1603 = vmax.f32 %v1602, %v1037
        %v1604 = vmax.f32 %v1603, %v1040
        %v1605 = vmax.f32 %v1604, %v1042
        %v1606 = vmax.f32 %v1605, %v1045
        %v1607 = vmax.f32 %v1606, %v1047
        %v1608 = vmax.f32 %v1607, %v1050
        %v1609 = vmax.f32 %v1608, %v1052
        %v1610 = vmax.f32 %v1609, %v1055
        %v1611 = vmax.f32 %v1610, %v1057
        %v1612 = vmax.f32 %v1611, %v1060
        %v1613 = vmax.f32 %v1612, %v1062
        %v1614 = vmax.f32 %v1613, %v1065
        %v1615 = vmax.f32 %v1614, %v1067
        %v1616 = vmax.f32 %v1615, %v1070
        %v1617 = vmax.f32 %v1616, %v1072
        %v1618 = vmax.f32 %v1617, %v1075
        %v1619 = vmax.f32 %v1618, %v1077
        %v1620 = vmax.f32 %v1619, %v1080
        %v1621 = vmax.f32 %v1620, %v1082
        %v1622 = vmax.f32 %v1621, %v1085
        %v1623 = vmax.f32 %v1622, %v1087
        %v1624 = vmax.f32 %v1623, %v1090
        %v1625 = vmax.f32 %v1624, %v1092
        %v1626 = vrot.slane %v1625, 4
        %v1627 = vmax.f32 %v1625, %v1626
        %v1628 = vrot.slane %v1627, 2
        %v1629 = vmax.f32 %v1627, %v1628
        %v1630 = vrot.slane %v1629, 1
        %v1631 = vmax.f32 %v1629, %v1630
        %v1632 = vmax.f32 %v1104, %v1106
        %v1633 = vmax.f32 %v1632, %v1109
        %v1634 = vmax.f32 %v1633, %v1111
        %v1635 = vmax.f32 %v1634, %v1114
        %v1636 = vmax.f32 %v1635, %v1116
        %v1637 = vmax.f32 %v1636, %v1119
        %v1638 = vmax.f32 %v1637, %v1121
        %v1639 = vmax.f32 %v1638, %v1124
        %v1640 = vmax.f32 %v1639, %v1126
        %v1641 = vmax.f32 %v1640, %v1129
        %v1642 = vmax.f32 %v1641, %v1131
        %v1643 = vmax.f32 %v1642, %v1134
        %v1644 = vmax.f32 %v1643, %v1136
        %v1645 = vmax.f32 %v1644, %v1139
        %v1646 = vmax.f32 %v1645, %v1141
        %v1647 = vmax.f32 %v1646, %v1144
        %v1648 = vmax.f32 %v1647, %v1146
        %v1649 = vmax.f32 %v1648, %v1149
        %v1650 = vmax.f32 %v1649, %v1151
        %v1651 = vmax.f32 %v1650, %v1154
        %v1652 = vmax.f32 %v1651, %v1156
        %v1653 = vmax.f32 %v1652, %v1159
        %v1654 = vmax.f32 %v1653, %v1161
        %v1655 = vmax.f32 %v1654, %v1164
        %v1656 = vmax.f32 %v1655, %v1166
        %v1657 = vmax.f32 %v1656, %v1169
        %v1658 = vmax.f32 %v1657, %v1171
        %v1659 = vmax.f32 %v1658, %v1174
        %v1660 = vmax.f32 %v1659, %v1176
        %v1661 = vmax.f32 %v1660, %v1179
        %v1662 = vmax.f32 %v1661, %v1181
        %v1663 = vrot.slane %v1662, 4
        %v1664 = vmax.f32 %v1662, %v1663
        %v1665 = vrot.slane %v1664, 2
        %v1666 = vmax.f32 %v1664, %v1665
        %v1667 = vrot.slane %v1666, 1
        %v1668 = vmax.f32 %v1666, %v1667
        %v1669 = vmax.f32 %v1279, %v1281
        %v1670 = vmax.f32 %v1669, %v1284
        %v1671 = vmax.f32 %v1670, %v1286
        %v1672 = vmax.f32 %v1671, %v1289
        %v1673 = vmax.f32 %v1672, %v1291
        %v1674 = vmax.f32 %v1673, %v1294
        %v1675 = vmax.f32 %v1674, %v1296
        %v1676 = vmax.f32 %v1675, %v1299
        %v1677 = vmax.f32 %v1676, %v1301
        %v1678 = vmax.f32 %v1677, %v1304
        %v1679 = vmax.f32 %v1678, %v1306
        %v1680 = vmax.f32 %v1679, %v1309
        %v1681 = vmax.f32 %v1680, %v1311
        %v1682 = vmax.f32 %v1681, %v1314
        %v1683 = vmax.f32 %v1682, %v1316
        %v1684 = vmax.f32 %v1683, %v1319
        %v1685 = vmax.f32 %v1684, %v1321
        %v1686 = vmax.f32 %v1685, %v1324
        %v1687 = vmax.f32 %v1686, %v1326
        %v1688 = vmax.f32 %v1687, %v1329
        %v1689 = vmax.f32 %v1688, %v1331
        %v1690 = vmax.f32 %v1689, %v1334
        %v1691 = vmax.f32 %v1690, %v1336
        %v1692 = vmax.f32 %v1691, %v1339
        %v1693 = vmax.f32 %v1692, %v1341
        %v1694 = vmax.f32 %v1693, %v1344
        %v1695 = vmax.f32 %v1694, %v1346
        %v1696 = vmax.f32 %v1695, %v1349
        %v1697 = vmax.f32 %v1696, %v1351
        %v1698 = vmax.f32 %v1697, %v1354
        %v1699 = vmax.f32 %v1698, %v1356
        %v1700 = vrot.slane %v1699, 4
        %v1701 = vmax.f32 %v1699, %v1700
        %v1702 = vrot.slane %v1701, 2
        %v1703 = vmax.f32 %v1701, %v1702
        %v1704 = vrot.slane %v1703, 1
        %v1705 = vmax.f32 %v1703, %v1704
        %v1706 = vmax.f32 %v1368, %v1370
        %v1707 = vmax.f32 %v1706, %v1373
        %v1708 = vmax.f32 %v1707, %v1375
        %v1709 = vmax.f32 %v1708, %v1378
        %v1710 = vmax.f32 %v1709, %v1380
        %v1711 = vmax.f32 %v1710, %v1383
        %v1712 = vmax.f32 %v1711, %v1385
        %v1713 = vmax.f32 %v1712, %v1388
        %v1714 = vmax.f32 %v1713, %v1390
        %v1715 = vmax.f32 %v1714, %v1393
        %v1716 = vmax.f32 %v1715, %v1395
        %v1717 = vmax.f32 %v1716, %v1398
        %v1718 = vmax.f32 %v1717, %v1400
        %v1719 = vmax.f32 %v1718, %v1403
        %v1720 = vmax.f32 %v1719, %v1405
        %v1721 = vmax.f32 %v1720, %v1408
        %v1722 = vmax.f32 %v1721, %v1410
        %v1723 = vmax.f32 %v1722, %v1413
        %v1724 = vmax.f32 %v1723, %v1415
        %v1725 = vmax.f32 %v1724, %v1418
        %v1726 = vmax.f32 %v1725, %v1420
        %v1727 = vmax.f32 %v1726, %v1423
        %v1728 = vmax.f32 %v1727, %v1425
        %v1729 = vmax.f32 %v1728, %v1428
        %v1730 = vmax.f32 %v1729, %v1430
        %v1731 = vmax.f32 %v1730, %v1433
        %v1732 = vmax.f32 %v1731, %v1435
        %v1733 = vmax.f32 %v1732, %v1438
        %v1734 = vmax.f32 %v1733, %v1440
        %v1735 = vmax.f32 %v1734, %v1443
        %v1736 = vmax.f32 %v1735, %v1445
        %v1737 = vrot.slane %v1736, 4
        %v1738 = vmax.f32 %v1736, %v1737
        %v1739 = vrot.slane %v1738, 2
        %v1740 = vmax.f32 %v1738, %v1739
        %v1741 = vrot.slane %v1740, 1
        %v1742 = vmax.f32 %v1740, %v1741
        %v1743 = vsub.f32 %v487, %v1483
        %v1744 = vsub.f32 %v576, %v1520
        %v1745 = vsub.f32 %v489, %v1483
        %v1746 = vsub.f32 %v578, %v1520
        %v1747 = vsub.f32 %v492, %v1483
        %v1748 = vsub.f32 %v581, %v1520
        %v1749 = vsub.f32 %v494, %v1483
        %v1750 = vsub.f32 %v583, %v1520
        %v1751 = vsub.f32 %v497, %v1483
        %v1752 = vsub.f32 %v586, %v1520
        %v1753 = vsub.f32 %v499, %v1483
        %v1754 = vsub.f32 %v588, %v1520
        %v1755 = vsub.f32 %v502, %v1483
        %v1756 = vsub.f32 %v591, %v1520
        %v1757 = vsub.f32 %v504, %v1483
        %v1758 = vsub.f32 %v593, %v1520
        %v1759 = vsub.f32 %v507, %v1483
        %v1760 = vsub.f32 %v596, %v1520
        %v1761 = vsub.f32 %v509, %v1483
        %v1762 = vsub.f32 %v598, %v1520
        %v1763 = vsub.f32 %v512, %v1483
        %v1764 = vsub.f32 %v601, %v1520
        %v1765 = vsub.f32 %v514, %v1483
        %v1766 = vsub.f32 %v603, %v1520
        %v1767 = vsub.f32 %v517, %v1483
        %v1768 = vsub.f32 %v606, %v1520
        %v1769 = vsub.f32 %v519, %v1483
        %v1770 = vsub.f32 %v608, %v1520
        %v1771 = vsub.f32 %v522, %v1483
        %v1772 = vsub.f32 %v611, %v1520
        %v1773 = vsub.f32 %v524, %v1483
        %v1774 = vsub.f32 %v613, %v1520
        %v1775 = vsub.f32 %v527, %v1483
        %v1776 = vsub.f32 %v616, %v1520
        %v1777 = vsub.f32 %v529, %v1483
        %v1778 = vsub.f32 %v618, %v1520
        %v1779 = vsub.f32 %v532, %v1483
        %v1780 = vsub.f32 %v621, %v1520
        %v1781 = vsub.f32 %v534, %v1483
        %v1782 = vsub.f32 %v623, %v1520
        %v1783 = vsub.f32 %v537, %v1483
        %v1784 = vsub.f32 %v626, %v1520
        %v1785 = vsub.f32 %v539, %v1483
        %v1786 = vsub.f32 %v628, %v1520
        %v1787 = vsub.f32 %v542, %v1483
        %v1788 = vsub.f32 %v631, %v1520
        %v1789 = vsub.f32 %v544, %v1483
        %v1790 = vsub.f32 %v633, %v1520
        %v1791 = vsub.f32 %v547, %v1483
        %v1792 = vsub.f32 %v636, %v1520
        %v1793 = vsub.f32 %v549, %v1483
        %v1794 = vsub.f32 %v638, %v1520
        %v1795 = vsub.f32 %v552, %v1483
        %v1796 = vsub.f32 %v641, %v1520
        %v1797 = vsub.f32 %v554, %v1483
        %v1798 = vsub.f32 %v643, %v1520
        %v1799 = vsub.f32 %v557, %v1483
        %v1800 = vsub.f32 %v646, %v1520
        %v1801 = vsub.f32 %v559, %v1483
        %v1802 = vsub.f32 %v648, %v1520
        %v1803 = vsub.f32 %v562, %v1483
        %v1804 = vsub.f32 %v651, %v1520
        %v1805 = vsub.f32 %v564, %v1483
        %v1806 = vsub.f32 %v653, %v1520
        %v1807 = vsub.f32 %v751, %v1557
        %v1808 = vsub.f32 %v840, %v1594
        %v1809 = vsub.f32 %v753, %v1557
        %v1810 = vsub.f32 %v842, %v1594
        %v1811 = vsub.f32 %v756, %v1557
        %v1812 = vsub.f32 %v845, %v1594
        %v1813 = vsub.f32 %v758, %v1557
        %v1814 = vsub.f32 %v847, %v1594
        %v1815 = vsub.f32 %v761, %v1557
        %v1816 = vsub.f32 %v850, %v1594
        %v1817 = vsub.f32 %v763, %v1557
        %v1818 = vsub.f32 %v852, %v1594
        %v1819 = vsub.f32 %v766, %v1557
        %v1820 = vsub.f32 %v855, %v1594
        %v1821 = vsub.f32 %v768, %v1557
        %v1822 = vsub.f32 %v857, %v1594
        %v1823 = vsub.f32 %v771, %v1557
        %v1824 = vsub.f32 %v860, %v1594
        %v1825 = vsub.f32 %v773, %v1557
        %v1826 = vsub.f32 %v862, %v1594
        %v1827 = vsub.f32 %v776, %v1557
        %v1828 = vsub.f32 %v865, %v1594
        %v1829 = vsub.f32 %v778, %v1557
        %v1830 = vsub.f32 %v867, %v1594
        %v1831 = vsub.f32 %v781, %v1557
        %v1832 = vsub.f32 %v870, %v1594
        %v1833 = vsub.f32 %v783, %v1557
        %v1834 = vsub.f32 %v872, %v1594
        %v1835 = vsub.f32 %v786, %v1557
        %v1836 = vsub.f32 %v875, %v1594
        %v1837 = vsub.f32 %v788, %v1557
        %v1838 = vsub.f32 %v877, %v1594
        %v1839 = vsub.f32 %v791, %v1557
        %v1840 = vsub.f32 %v880, %v1594
        %v1841 = vsub.f32 %v793, %v1557
        %v1842 = vsub.f32 %v882, %v1594
        %v1843 = vsub.f32 %v796, %v1557
        %v1844 = vsub.f32 %v885, %v1594
        %v1845 = vsub.f32 %v798, %v1557
        %v1846 = vsub.f32 %v887, %v1594
        %v1847 = vsub.f32 %v801, %v1557
        %v1848 = vsub.f32 %v890, %v1594
        %v1849 = vsub.f32 %v803, %v1557
        %v1850 = vsub.f32 %v892, %v1594
        %v1851 = vsub.f32 %v806, %v1557
        %v1852 = vsub.f32 %v895, %v1594
        %v1853 = vsub.f32 %v808, %v1557
        %v1854 = vsub.f32 %v897, %v1594
        %v1855 = vsub.f32 %v811, %v1557
        %v1856 = vsub.f32 %v900, %v1594
        %v1857 = vsub.f32 %v813, %v1557
        %v1858 = vsub.f32 %v902, %v1594
        %v1859 = vsub.f32 %v816, %v1557
        %v1860 = vsub.f32 %v905, %v1594
        %v1861 = vsub.f32 %v818, %v1557
        %v1862 = vsub.f32 %v907, %v1594
        %v1863 = vsub.f32 %v821, %v1557
        %v1864 = vsub.f32 %v910, %v1594
        %v1865 = vsub.f32 %v823, %v1557
        %v1866 = vsub.f32 %v912, %v1594
        %v1867 = vsub.f32 %v826, %v1557
        %v1868 = vsub.f32 %v915, %v1594
        %v1869 = vsub.f32 %v828, %v1557
        %v1870 = vsub.f32 %v917, %v1594
        %v1871 = vsub.f32 %v1015, %v1631
        %v1872 = vsub.f32 %v1104, %v1668
        %v1873 = vsub.f32 %v1017, %v1631
        %v1874 = vsub.f32 %v1106, %v1668
        %v1875 = vsub.f32 %v1020, %v1631
        %v1876 = vsub.f32 %v1109, %v1668
        %v1877 = vsub.f32 %v1022, %v1631
        %v1878 = vsub.f32 %v1111, %v1668
        %v1879 = vsub.f32 %v1025, %v1631
        %v1880 = vsub.f32 %v1114, %v1668
        %v1881 = vsub.f32 %v1027, %v1631
        %v1882 = vsub.f32 %v1116, %v1668
        %v1883 = vsub.f32 %v1030, %v1631
        %v1884 = vsub.f32 %v1119, %v1668
        %v1885 = vsub.f32 %v1032, %v1631
        %v1886 = vsub.f32 %v1121, %v1668
        %v1887 = vsub.f32 %v1035, %v1631
        %v1888 = vsub.f32 %v1124, %v1668
        %v1889 = vsub.f32 %v1037, %v1631
        %v1890 = vsub.f32 %v1126, %v1668
        %v1891 = vsub.f32 %v1040, %v1631
        %v1892 = vsub.f32 %v1129, %v1668
        %v1893 = vsub.f32 %v1042, %v1631
        %v1894 = vsub.f32 %v1131, %v1668
        %v1895 = vsub.f32 %v1045, %v1631
        %v1896 = vsub.f32 %v1134, %v1668
        %v1897 = vsub.f32 %v1047, %v1631
        %v1898 = vsub.f32 %v1136, %v1668
        %v1899 = vsub.f32 %v1050, %v1631
        %v1900 = vsub.f32 %v1139, %v1668
        %v1901 = vsub.f32 %v1052, %v1631
        %v1902 = vsub.f32 %v1141, %v1668
        %v1903 = vsub.f32 %v1055, %v1631
        %v1904 = vsub.f32 %v1144, %v1668
        %v1905 = vsub.f32 %v1057, %v1631
        %v1906 = vsub.f32 %v1146, %v1668
        %v1907 = vsub.f32 %v1060, %v1631
        %v1908 = vsub.f32 %v1149, %v1668
        %v1909 = vsub.f32 %v1062, %v1631
        %v1910 = vsub.f32 %v1151, %v1668
        %v1911 = vsub.f32 %v1065, %v1631
        %v1912 = vsub.f32 %v1154, %v1668
        %v1913 = vsub.f32 %v1067, %v1631
        %v1914 = vsub.f32 %v1156, %v1668
        %v1915 = vsub.f32 %v1070, %v1631
        %v1916 = vsub.f32 %v1159, %v1668
        %v1917 = vsub.f32 %v1072, %v1631
        %v1918 = vsub.f32 %v1161, %v1668
        %v1919 = vsub.f32 %v1075, %v1631
        %v1920 = vsub.f32 %v1164, %v1668
        %v1921 = vsub.f32 %v1077, %v1631
        %v1922 = vsub.f32 %v1166, %v1668
        %v1923 = vsub.f32 %v1080, %v1631
        %v1924 = vsub.f32 %v1169, %v1668
        %v1925 = vsub.f32 %v1082, %v1631
        %v1926 = vsub.f32 %v1171, %v1668
        %v1927 = vsub.f32 %v1085, %v1631
        %v1928 = vsub.f32 %v1174, %v1668
        %v1929 = vsub.f32 %v1087, %v1631
        %v1930 = vsub.f32 %v1176, %v1668
        %v1931 = vsub.f32 %v1090, %v1631
        %v1932 = vsub.f32 %v1179, %v1668
        %v1933 = vsub.f32 %v1092, %v1631
        %v1934 = vsub.f32 %v1181, %v1668
        %v1935 = vsub.f32 %v1279, %v1705
        %v1936 = vsub.f32 %v1368, %v1742
        %v1937 = vsub.f32 %v1281, %v1705
        %v1938 = vsub.f32 %v1370, %v1742
        %v1939 = vsub.f32 %v1284, %v1705
        %v1940 = vsub.f32 %v1373, %v1742
        %v1941 = vsub.f32 %v1286, %v1705
        %v1942 = vsub.f32 %v1375, %v1742
        %v1943 = vsub.f32 %v1289, %v1705
        %v1944 = vsub.f32 %v1378, %v1742
        %v1945 = vsub.f32 %v1291, %v1705
        %v1946 = vsub.f32 %v1380, %v1742
        %v1947 = vsub.f32 %v1294, %v1705
        %v1948 = vsub.f32 %v1383, %v1742
        %v1949 = vsub.f32 %v1296, %v1705
        %v1950 = vsub.f32 %v1385, %v1742
        %v1951 = vsub.f32 %v1299, %v1705
        %v1952 = vsub.f32 %v1388, %v1742
        %v1953 = vsub.f32 %v1301, %v1705
        %v1954 = vsub.f32 %v1390, %v1742
        %v1955 = vsub.f32 %v1304, %v1705
        %v1956 = vsub.f32 %v1393, %v1742
        %v1957 = vsub.f32 %v1306, %v1705
        %v1958 = vsub.f32 %v1395, %v1742
        %v1959 = vsub.f32 %v1309, %v1705
        %v1960 = vsub.f32 %v1398, %v1742
        %v1961 = vsub.f32 %v1311, %v1705
        %v1962 = vsub.f32 %v1400, %v1742
        %v1963 = vsub.f32 %v1314, %v1705
        %v1964 = vsub.f32 %v1403, %v1742
        %v1965 = vsub.f32 %v1316, %v1705
        %v1966 = vsub.f32 %v1405, %v1742
        %v1967 = vsub.f32 %v1319, %v1705
        %v1968 = vsub.f32 %v1408, %v1742
        %v1969 = vsub.f32 %v1321, %v1705
        %v1970 = vsub.f32 %v1410, %v1742
        %v1971 = vsub.f32 %v1324, %v1705
        %v1972 = vsub.f32 %v1413, %v1742
        %v1973 = vsub.f32 %v1326, %v1705
        %v1974 = vsub.f32 %v1415, %v1742
        %v1975 = vsub.f32 %v1329, %v1705
        %v1976 = vsub.f32 %v1418, %v1742
        %v1977 = vsub.f32 %v1331, %v1705
        %v1978 = vsub.f32 %v1420, %v1742
        %v1979 = vsub.f32 %v1334, %v1705
        %v1980 = vsub.f32 %v1423, %v1742
        %v1981 = vsub.f32 %v1336, %v1705
        %v1982 = vsub.f32 %v1425, %v1742
        %v1983 = vsub.f32 %v1339, %v1705
        %v1984 = vsub.f32 %v1428, %v1742
        %v1985 = vsub.f32 %v1341, %v1705
        %v1986 = vsub.f32 %v1430, %v1742
        %v1987 = vsub.f32 %v1344, %v1705
        %v1988 = vsub.f32 %v1433, %v1742
        %v1989 = vsub.f32 %v1346, %v1705
        %v1990 = vsub.f32 %v1435, %v1742
        %v1991 = vsub.f32 %v1349, %v1705
        %v1992 = vsub.f32 %v1438, %v1742
        %v1993 = vsub.f32 %v1351, %v1705
        %v1994 = vsub.f32 %v1440, %v1742
        %v1995 = vsub.f32 %v1354, %v1705
        %v1996 = vsub.f32 %v1443, %v1742
        %v1997 = vsub.f32 %v1356, %v1705
        %v1998 = vsub.f32 %v1445, %v1742
        %v1999 = vpack.c.bf16 %v1744, %v1743
        %v2000 = vpack.c.bf16 %v1746, %v1745
        %v2001 = vpack.c.bf16 %v1748, %v1747
        %v2002 = vpack.c.bf16 %v1750, %v1749
        %v2003 = vpack.c.bf16 %v1752, %v1751
        %v2004 = vpack.c.bf16 %v1754, %v1753
        %v2005 = vpack.c.bf16 %v1756, %v1755
        %v2006 = vpack.c.bf16 %v1758, %v1757
        %v2007 = vpack.c.bf16 %v1760, %v1759
        %v2008 = vpack.c.bf16 %v1762, %v1761
        %v2009 = vpack.c.bf16 %v1764, %v1763
        %v2010 = vpack.c.bf16 %v1766, %v1765
        %v2011 = vpack.c.bf16 %v1768, %v1767
        %v2012 = vpack.c.bf16 %v1770, %v1769
        %v2013 = vpack.c.bf16 %v1772, %v1771
        %v2014 = vpack.c.bf16 %v1774, %v1773
        %v2015 = vpack.c.bf16 %v1776, %v1775
        %v2016 = vpack.c.bf16 %v1778, %v1777
        %v2017 = vpack.c.bf16 %v1780, %v1779
        %v2018 = vpack.c.bf16 %v1782, %v1781
        %v2019 = vpack.c.bf16 %v1784, %v1783
        %v2020 = vpack.c.bf16 %v1786, %v1785
        %v2021 = vpack.c.bf16 %v1788, %v1787
        %v2022 = vpack.c.bf16 %v1790, %v1789
        %v2023 = vpack.c.bf16 %v1792, %v1791
        %v2024 = vpack.c.bf16 %v1794, %v1793
        %v2025 = vpack.c.bf16 %v1796, %v1795
        %v2026 = vpack.c.bf16 %v1798, %v1797
        %v2027 = vpack.c.bf16 %v1800, %v1799
        %v2028 = vpack.c.bf16 %v1802, %v1801
        %v2029 = vpack.c.bf16 %v1804, %v1803
        %v2030 = vpack.c.bf16 %v1806, %v1805
        %v2031 = vpack.c.bf16 %v1808, %v1807
        %v2032 = vpack.c.bf16 %v1810, %v1809
        %v2033 = vpack.c.bf16 %v1812, %v1811
        %v2034 = vpack.c.bf16 %v1814, %v1813
        %v2035 = vpack.c.bf16 %v1816, %v1815
        %v2036 = vpack.c.bf16 %v1818, %v1817
        %v2037 = vpack.c.bf16 %v1820, %v1819
        %v2038 = vpack.c.bf16 %v1822, %v1821
        %v2039 = vpack.c.bf16 %v1824, %v1823
        %v2040 = vpack.c.bf16 %v1826, %v1825
        %v2041 = vpack.c.bf16 %v1828, %v1827
        %v2042 = vpack.c.bf16 %v1830, %v1829
        %v2043 = vpack.c.bf16 %v1832, %v1831
        %v2044 = vpack.c.bf16 %v1834, %v1833
        %v2045 = vpack.c.bf16 %v1836, %v1835
        %v2046 = vpack.c.bf16 %v1838, %v1837
        %v2047 = vpack.c.bf16 %v1840, %v1839
        %v2048 = vpack.c.bf16 %v1842, %v1841
        %v2049 = vpack.c.bf16 %v1844, %v1843
        %v2050 = vpack.c.bf16 %v1846, %v1845
        %v2051 = vpack.c.bf16 %v1848, %v1847
        %v2052 = vpack.c.bf16 %v1850, %v1849
        %v2053 = vpack.c.bf16 %v1852, %v1851
        %v2054 = vpack.c.bf16 %v1854, %v1853
        %v2055 = vpack.c.bf16 %v1856, %v1855
        %v2056 = vpack.c.bf16 %v1858, %v1857
        %v2057 = vpack.c.bf16 %v1860, %v1859
        %v2058 = vpack.c.bf16 %v1862, %v1861
        %v2059 = vpack.c.bf16 %v1864, %v1863
        %v2060 = vpack.c.bf16 %v1866, %v1865
        %v2061 = vpack.c.bf16 %v1868, %v1867
        %v2062 = vpack.c.bf16 %v1870, %v1869
        %v2063 = vpack.c.bf16 %v1872, %v1871
        %v2064 = vpack.c.bf16 %v1874, %v1873
        %v2065 = vpack.c.bf16 %v1876, %v1875
        %v2066 = vpack.c.bf16 %v1878, %v1877
        %v2067 = vpack.c.bf16 %v1880, %v1879
        %v2068 = vpack.c.bf16 %v1882, %v1881
        %v2069 = vpack.c.bf16 %v1884, %v1883
        %v2070 = vpack.c.bf16 %v1886, %v1885
        %v2071 = vpack.c.bf16 %v1888, %v1887
        %v2072 = vpack.c.bf16 %v1890, %v1889
        %v2073 = vpack.c.bf16 %v1892, %v1891
        %v2074 = vpack.c.bf16 %v1894, %v1893
        %v2075 = vpack.c.bf16 %v1896, %v1895
        %v2076 = vpack.c.bf16 %v1898, %v1897
        %v2077 = vpack.c.bf16 %v1900, %v1899
        %v2078 = vpack.c.bf16 %v1902, %v1901
        %v2079 = vpack.c.bf16 %v1904, %v1903
        %v2080 = vpack.c.bf16 %v1906, %v1905
        %v2081 = vpack.c.bf16 %v1908, %v1907
        %v2082 = vpack.c.bf16 %v1910, %v1909
        %v2083 = vpack.c.bf16 %v1912, %v1911
        %v2084 = vpack.c.bf16 %v1914, %v1913
        %v2085 = vpack.c.bf16 %v1916, %v1915
        %v2086 = vpack.c.bf16 %v1918, %v1917
        %v2087 = vpack.c.bf16 %v1920, %v1919
        %v2088 = vpack.c.bf16 %v1922, %v1921
        %v2089 = vpack.c.bf16 %v1924, %v1923
        %v2090 = vpack.c.bf16 %v1926, %v1925
        %v2091 = vpack.c.bf16 %v1928, %v1927
        %v2092 = vpack.c.bf16 %v1930, %v1929
        %v2093 = vpack.c.bf16 %v1932, %v1931
        %v2094 = vpack.c.bf16 %v1934, %v1933
        %v2095 = vpack.c.bf16 %v1936, %v1935
        %v2096 = vpack.c.bf16 %v1938, %v1937
        %v2097 = vpack.c.bf16 %v1940, %v1939
        %v2098 = vpack.c.bf16 %v1942, %v1941
        %v2099 = vpack.c.bf16 %v1944, %v1943
        %v2100 = vpack.c.bf16 %v1946, %v1945
        %v2101 = vpack.c.bf16 %v1948, %v1947
        %v2102 = vpack.c.bf16 %v1950, %v1949
        %v2103 = vpack.c.bf16 %v1952, %v1951
        %v2104 = vpack.c.bf16 %v1954, %v1953
        %v2105 = vpack.c.bf16 %v1956, %v1955
        %v2106 = vpack.c.bf16 %v1958, %v1957
        %v2107 = vpack.c.bf16 %v1960, %v1959
        %v2108 = vpack.c.bf16 %v1962, %v1961
        %v2109 = vpack.c.bf16 %v1964, %v1963
        %v2110 = vpack.c.bf16 %v1966, %v1965
        %v2111 = vpack.c.bf16 %v1968, %v1967
        %v2112 = vpack.c.bf16 %v1970, %v1969
        %v2113 = vpack.c.bf16 %v1972, %v1971
        %v2114 = vpack.c.bf16 %v1974, %v1973
        %v2115 = vpack.c.bf16 %v1976, %v1975
        %v2116 = vpack.c.bf16 %v1978, %v1977
        %v2117 = vpack.c.bf16 %v1980, %v1979
        %v2118 = vpack.c.bf16 %v1982, %v1981
        %v2119 = vpack.c.bf16 %v1984, %v1983
        %v2120 = vpack.c.bf16 %v1986, %v1985
        %v2121 = vpack.c.bf16 %v1988, %v1987
        %v2122 = vpack.c.bf16 %v1990, %v1989
        %v2123 = vpack.c.bf16 %v1992, %v1991
        %v2124 = vpack.c.bf16 %v1994, %v1993
        %v2125 = vpack.c.bf16 %v1996, %v1995
        %v2126 = vpack.c.bf16 %v1998, %v1997
        %v2127 = vunpack.c.l.bf16 %v1999
        %v2128 = vunpack.c.h.bf16 %v1999
        %v2129 = vunpack.c.l.bf16 %v2000
        %v2130 = vunpack.c.h.bf16 %v2000
        %v2131 = vunpack.c.l.bf16 %v2001
        %v2132 = vunpack.c.h.bf16 %v2001
        %v2133 = vunpack.c.l.bf16 %v2002
        %v2134 = vunpack.c.h.bf16 %v2002
        %v2135 = vunpack.c.l.bf16 %v2003
        %v2136 = vunpack.c.h.bf16 %v2003
        %v2137 = vunpack.c.l.bf16 %v2004
        %v2138 = vunpack.c.h.bf16 %v2004
        %v2139 = vunpack.c.l.bf16 %v2005
        %v2140 = vunpack.c.h.bf16 %v2005
        %v2141 = vunpack.c.l.bf16 %v2006
        %v2142 = vunpack.c.h.bf16 %v2006
        %v2143 = vunpack.c.l.bf16 %v2007
        %v2144 = vunpack.c.h.bf16 %v2007
        %v2145 = vunpack.c.l.bf16 %v2008
        %v2146 = vunpack.c.h.bf16 %v2008
        %v2147 = vunpack.c.l.bf16 %v2009
        %v2148 = vunpack.c.h.bf16 %v2009
        %v2149 = vunpack.c.l.bf16 %v2010
        %v2150 = vunpack.c.h.bf16 %v2010
        %v2151 = vunpack.c.l.bf16 %v2011
        %v2152 = vunpack.c.h.bf16 %v2011
        %v2153 = vunpack.c.l.bf16 %v2012
        %v2154 = vunpack.c.h.bf16 %v2012
        %v2155 = vunpack.c.l.bf16 %v2013
        %v2156 = vunpack.c.h.bf16 %v2013
        %v2157 = vunpack.c.l.bf16 %v2014
        %v2158 = vunpack.c.h.bf16 %v2014
        %v2159 = vunpack.c.l.bf16 %v2015
        %v2160 = vunpack.c.h.bf16 %v2015
        %v2161 = vunpack.c.l.bf16 %v2016
        %v2162 = vunpack.c.h.bf16 %v2016
        %v2163 = vunpack.c.l.bf16 %v2017
        %v2164 = vunpack.c.h.bf16 %v2017
        %v2165 = vunpack.c.l.bf16 %v2018
        %v2166 = vunpack.c.h.bf16 %v2018
        %v2167 = vunpack.c.l.bf16 %v2019
        %v2168 = vunpack.c.h.bf16 %v2019
        %v2169 = vunpack.c.l.bf16 %v2020
        %v2170 = vunpack.c.h.bf16 %v2020
        %v2171 = vunpack.c.l.bf16 %v2021
        %v2172 = vunpack.c.h.bf16 %v2021
        %v2173 = vunpack.c.l.bf16 %v2022
        %v2174 = vunpack.c.h.bf16 %v2022
        %v2175 = vunpack.c.l.bf16 %v2023
        %v2176 = vunpack.c.h.bf16 %v2023
        %v2177 = vunpack.c.l.bf16 %v2024
        %v2178 = vunpack.c.h.bf16 %v2024
        %v2179 = vunpack.c.l.bf16 %v2025
        %v2180 = vunpack.c.h.bf16 %v2025
        %v2181 = vunpack.c.l.bf16 %v2026
        %v2182 = vunpack.c.h.bf16 %v2026
        %v2183 = vunpack.c.l.bf16 %v2027
        %v2184 = vunpack.c.h.bf16 %v2027
        %v2185 = vunpack.c.l.bf16 %v2028
        %v2186 = vunpack.c.h.bf16 %v2028
        %v2187 = vunpack.c.l.bf16 %v2029
        %v2188 = vunpack.c.h.bf16 %v2029
        %v2189 = vunpack.c.l.bf16 %v2030
        %v2190 = vunpack.c.h.bf16 %v2030
        %v2191 = vunpack.c.l.bf16 %v2031
        %v2192 = vunpack.c.h.bf16 %v2031
        %v2193 = vunpack.c.l.bf16 %v2032
        %v2194 = vunpack.c.h.bf16 %v2032
        %v2195 = vunpack.c.l.bf16 %v2033
        %v2196 = vunpack.c.h.bf16 %v2033
        %v2197 = vunpack.c.l.bf16 %v2034
        %v2198 = vunpack.c.h.bf16 %v2034
        %v2199 = vunpack.c.l.bf16 %v2035
        %v2200 = vunpack.c.h.bf16 %v2035
        %v2201 = vunpack.c.l.bf16 %v2036
        %v2202 = vunpack.c.h.bf16 %v2036
        %v2203 = vunpack.c.l.bf16 %v2037
        %v2204 = vunpack.c.h.bf16 %v2037
        %v2205 = vunpack.c.l.bf16 %v2038
        %v2206 = vunpack.c.h.bf16 %v2038
        %v2207 = vunpack.c.l.bf16 %v2039
        %v2208 = vunpack.c.h.bf16 %v2039
        %v2209 = vunpack.c.l.bf16 %v2040
        %v2210 = vunpack.c.h.bf16 %v2040
        %v2211 = vunpack.c.l.bf16 %v2041
        %v2212 = vunpack.c.h.bf16 %v2041
        %v2213 = vunpack.c.l.bf16 %v2042
        %v2214 = vunpack.c.h.bf16 %v2042
        %v2215 = vunpack.c.l.bf16 %v2043
        %v2216 = vunpack.c.h.bf16 %v2043
        %v2217 = vunpack.c.l.bf16 %v2044
        %v2218 = vunpack.c.h.bf16 %v2044
        %v2219 = vunpack.c.l.bf16 %v2045
        %v2220 = vunpack.c.h.bf16 %v2045
        %v2221 = vunpack.c.l.bf16 %v2046
        %v2222 = vunpack.c.h.bf16 %v2046
        %v2223 = vunpack.c.l.bf16 %v2047
        %v2224 = vunpack.c.h.bf16 %v2047
        %v2225 = vunpack.c.l.bf16 %v2048
        %v2226 = vunpack.c.h.bf16 %v2048
        %v2227 = vunpack.c.l.bf16 %v2049
        %v2228 = vunpack.c.h.bf16 %v2049
        %v2229 = vunpack.c.l.bf16 %v2050
        %v2230 = vunpack.c.h.bf16 %v2050
        %v2231 = vunpack.c.l.bf16 %v2051
        %v2232 = vunpack.c.h.bf16 %v2051
        %v2233 = vunpack.c.l.bf16 %v2052
        %v2234 = vunpack.c.h.bf16 %v2052
        %v2235 = vunpack.c.l.bf16 %v2053
        %v2236 = vunpack.c.h.bf16 %v2053
        %v2237 = vunpack.c.l.bf16 %v2054
        %v2238 = vunpack.c.h.bf16 %v2054
        %v2239 = vunpack.c.l.bf16 %v2055
        %v2240 = vunpack.c.h.bf16 %v2055
        %v2241 = vunpack.c.l.bf16 %v2056
        %v2242 = vunpack.c.h.bf16 %v2056
        %v2243 = vunpack.c.l.bf16 %v2057
        %v2244 = vunpack.c.h.bf16 %v2057
        %v2245 = vunpack.c.l.bf16 %v2058
        %v2246 = vunpack.c.h.bf16 %v2058
        %v2247 = vunpack.c.l.bf16 %v2059
        %v2248 = vunpack.c.h.bf16 %v2059
        %v2249 = vunpack.c.l.bf16 %v2060
        %v2250 = vunpack.c.h.bf16 %v2060
        %v2251 = vunpack.c.l.bf16 %v2061
        %v2252 = vunpack.c.h.bf16 %v2061
        %v2253 = vunpack.c.l.bf16 %v2062
        %v2254 = vunpack.c.h.bf16 %v2062
        %v2255 = vunpack.c.l.bf16 %v2063
        %v2256 = vunpack.c.h.bf16 %v2063
        %v2257 = vunpack.c.l.bf16 %v2064
        %v2258 = vunpack.c.h.bf16 %v2064
        %v2259 = vunpack.c.l.bf16 %v2065
        %v2260 = vunpack.c.h.bf16 %v2065
        %v2261 = vunpack.c.l.bf16 %v2066
        %v2262 = vunpack.c.h.bf16 %v2066
        %v2263 = vunpack.c.l.bf16 %v2067
        %v2264 = vunpack.c.h.bf16 %v2067
        %v2265 = vunpack.c.l.bf16 %v2068
        %v2266 = vunpack.c.h.bf16 %v2068
        %v2267 = vunpack.c.l.bf16 %v2069
        %v2268 = vunpack.c.h.bf16 %v2069
        %v2269 = vunpack.c.l.bf16 %v2070
        %v2270 = vunpack.c.h.bf16 %v2070
        %v2271 = vunpack.c.l.bf16 %v2071
        %v2272 = vunpack.c.h.bf16 %v2071
        %v2273 = vunpack.c.l.bf16 %v2072
        %v2274 = vunpack.c.h.bf16 %v2072
        %v2275 = vunpack.c.l.bf16 %v2073
        %v2276 = vunpack.c.h.bf16 %v2073
        %v2277 = vunpack.c.l.bf16 %v2074
        %v2278 = vunpack.c.h.bf16 %v2074
        %v2279 = vunpack.c.l.bf16 %v2075
        %v2280 = vunpack.c.h.bf16 %v2075
        %v2281 = vunpack.c.l.bf16 %v2076
        %v2282 = vunpack.c.h.bf16 %v2076
        %v2283 = vunpack.c.l.bf16 %v2077
        %v2284 = vunpack.c.h.bf16 %v2077
        %v2285 = vunpack.c.l.bf16 %v2078
        %v2286 = vunpack.c.h.bf16 %v2078
        %v2287 = vunpack.c.l.bf16 %v2079
        %v2288 = vunpack.c.h.bf16 %v2079
        %v2289 = vunpack.c.l.bf16 %v2080
        %v2290 = vunpack.c.h.bf16 %v2080
        %v2291 = vunpack.c.l.bf16 %v2081
        %v2292 = vunpack.c.h.bf16 %v2081
        %v2293 = vunpack.c.l.bf16 %v2082
        %v2294 = vunpack.c.h.bf16 %v2082
        %v2295 = vunpack.c.l.bf16 %v2083
        %v2296 = vunpack.c.h.bf16 %v2083
        %v2297 = vunpack.c.l.bf16 %v2084
        %v2298 = vunpack.c.h.bf16 %v2084
        %v2299 = vunpack.c.l.bf16 %v2085
        %v2300 = vunpack.c.h.bf16 %v2085
        %v2301 = vunpack.c.l.bf16 %v2086
        %v2302 = vunpack.c.h.bf16 %v2086
        %v2303 = vunpack.c.l.bf16 %v2087
        %v2304 = vunpack.c.h.bf16 %v2087
        %v2305 = vunpack.c.l.bf16 %v2088
        %v2306 = vunpack.c.h.bf16 %v2088
        %v2307 = vunpack.c.l.bf16 %v2089
        %v2308 = vunpack.c.h.bf16 %v2089
        %v2309 = vunpack.c.l.bf16 %v2090
        %v2310 = vunpack.c.h.bf16 %v2090
        %v2311 = vunpack.c.l.bf16 %v2091
        %v2312 = vunpack.c.h.bf16 %v2091
        %v2313 = vunpack.c.l.bf16 %v2092
        %v2314 = vunpack.c.h.bf16 %v2092
        %v2315 = vunpack.c.l.bf16 %v2093
        %v2316 = vunpack.c.h.bf16 %v2093
        %v2317 = vunpack.c.l.bf16 %v2094
        %v2318 = vunpack.c.h.bf16 %v2094
        %v2319 = vunpack.c.l.bf16 %v2095
        %v2320 = vunpack.c.h.bf16 %v2095
        %v2321 = vunpack.c.l.bf16 %v2096
        %v2322 = vunpack.c.h.bf16 %v2096
        %v2323 = vunpack.c.l.bf16 %v2097
        %v2324 = vunpack.c.h.bf16 %v2097
        %v2325 = vunpack.c.l.bf16 %v2098
        %v2326 = vunpack.c.h.bf16 %v2098
        %v2327 = vunpack.c.l.bf16 %v2099
        %v2328 = vunpack.c.h.bf16 %v2099
        %v2329 = vunpack.c.l.bf16 %v2100
        %v2330 = vunpack.c.h.bf16 %v2100
        %v2331 = vunpack.c.l.bf16 %v2101
        %v2332 = vunpack.c.h.bf16 %v2101
        %v2333 = vunpack.c.l.bf16 %v2102
        %v2334 = vunpack.c.h.bf16 %v2102
        %v2335 = vunpack.c.l.bf16 %v2103
        %v2336 = vunpack.c.h.bf16 %v2103
        %v2337 = vunpack.c.l.bf16 %v2104
        %v2338 = vunpack.c.h.bf16 %v2104
        %v2339 = vunpack.c.l.bf16 %v2105
        %v2340 = vunpack.c.h.bf16 %v2105
        %v2341 = vunpack.c.l.bf16 %v2106
        %v2342 = vunpack.c.h.bf16 %v2106
        %v2343 = vunpack.c.l.bf16 %v2107
        %v2344 = vunpack.c.h.bf16 %v2107
        %v2345 = vunpack.c.l.bf16 %v2108
        %v2346 = vunpack.c.h.bf16 %v2108
        %v2347 = vunpack.c.l.bf16 %v2109
        %v2348 = vunpack.c.h.bf16 %v2109
        %v2349 = vunpack.c.l.bf16 %v2110
        %v2350 = vunpack.c.h.bf16 %v2110
        %v2351 = vunpack.c.l.bf16 %v2111
        %v2352 = vunpack.c.h.bf16 %v2111
        %v2353 = vunpack.c.l.bf16 %v2112
        %v2354 = vunpack.c.h.bf16 %v2112
        %v2355 = vunpack.c.l.bf16 %v2113
        %v2356 = vunpack.c.h.bf16 %v2113
        %v2357 = vunpack.c.l.bf16 %v2114
        %v2358 = vunpack.c.h.bf16 %v2114
        %v2359 = vunpack.c.l.bf16 %v2115
        %v2360 = vunpack.c.h.bf16 %v2115
        %v2361 = vunpack.c.l.bf16 %v2116
        %v2362 = vunpack.c.h.bf16 %v2116
        %v2363 = vunpack.c.l.bf16 %v2117
        %v2364 = vunpack.c.h.bf16 %v2117
        %v2365 = vunpack.c.l.bf16 %v2118
        %v2366 = vunpack.c.h.bf16 %v2118
        %v2367 = vunpack.c.l.bf16 %v2119
        %v2368 = vunpack.c.h.bf16 %v2119
        %v2369 = vunpack.c.l.bf16 %v2120
        %v2370 = vunpack.c.h.bf16 %v2120
        %v2371 = vunpack.c.l.bf16 %v2121
        %v2372 = vunpack.c.h.bf16 %v2121
        %v2373 = vunpack.c.l.bf16 %v2122
        %v2374 = vunpack.c.h.bf16 %v2122
        %v2375 = vunpack.c.l.bf16 %v2123
        %v2376 = vunpack.c.h.bf16 %v2123
        %v2377 = vunpack.c.l.bf16 %v2124
        %v2378 = vunpack.c.h.bf16 %v2124
        %v2379 = vunpack.c.l.bf16 %v2125
        %v2380 = vunpack.c.h.bf16 %v2125
        %v2381 = vunpack.c.l.bf16 %v2126
        %v2382 = vunpack.c.h.bf16 %v2126
        %v2383 = vmul.f32 %v2127, 1.442695
        %v2384 = vpow.pop %v2383
        %v2385 = vmul.f32 %v2128, 1.442695
        %v2386 = vpow.pop %v2385
        %v2387 = vmul.f32 %v2129, 1.442695
        %v2388 = vpow.pop %v2387
        %v2389 = vmul.f32 %v2130, 1.442695
        %v2390 = vpow.pop %v2389
        %v2391 = vmul.f32 %v2131, 1.442695
        %v2392 = vpow.pop %v2391
        %v2393 = vmul.f32 %v2132, 1.442695
        %v2394 = vpow.pop %v2393
        %v2395 = vmul.f32 %v2133, 1.442695
        %v2396 = vpow.pop %v2395
        %v2397 = vmul.f32 %v2134, 1.442695
        %v2398 = vpow.pop %v2397
        %v2399 = vmul.f32 %v2135, 1.442695
        %v2400 = vpow.pop %v2399
        %v2401 = vmul.f32 %v2136, 1.442695
        %v2402 = vpow.pop %v2401
        %v2403 = vmul.f32 %v2137, 1.442695
        %v2404 = vpow.pop %v2403
        %v2405 = vmul.f32 %v2138, 1.442695
        %v2406 = vpow.pop %v2405
        %v2407 = vmul.f32 %v2139, 1.442695
        %v2408 = vpow.pop %v2407
        %v2409 = vmul.f32 %v2140, 1.442695
        %v2410 = vpow.pop %v2409
        %v2411 = vmul.f32 %v2141, 1.442695
        %v2412 = vpow.pop %v2411
        %v2413 = vmul.f32 %v2142, 1.442695
        %v2414 = vpow.pop %v2413
        %v2415 = vmul.f32 %v2143, 1.442695
        %v2416 = vpow.pop %v2415
        %v2417 = vmul.f32 %v2144, 1.442695
        %v2418 = vpow.pop %v2417
        %v2419 = vmul.f32 %v2145, 1.442695
        %v2420 = vpow.pop %v2419
        %v2421 = vmul.f32 %v2146, 1.442695
        %v2422 = vpow.pop %v2421
        %v2423 = vmul.f32 %v2147, 1.442695
        %v2424 = vpow.pop %v2423
        %v2425 = vmul.f32 %v2148, 1.442695
        %v2426 = vpow.pop %v2425
        %v2427 = vmul.f32 %v2149, 1.442695
        %v2428 = vpow.pop %v2427
        %v2429 = vmul.f32 %v2150, 1.442695
        %v2430 = vpow.pop %v2429
        %v2431 = vmul.f32 %v2151, 1.442695
        %v2432 = vpow.pop %v2431
        %v2433 = vmul.f32 %v2152, 1.442695
        %v2434 = vpow.pop %v2433
        %v2435 = vmul.f32 %v2153, 1.442695
        %v2436 = vpow.pop %v2435
        %v2437 = vmul.f32 %v2154, 1.442695
        %v2438 = vpow.pop %v2437
        %v2439 = vmul.f32 %v2155, 1.442695
        %v2440 = vpow.pop %v2439
        %v2441 = vmul.f32 %v2156, 1.442695
        %v2442 = vpow.pop %v2441
        %v2443 = vmul.f32 %v2157, 1.442695
        %v2444 = vpow.pop %v2443
        %v2445 = vmul.f32 %v2158, 1.442695
        %v2446 = vpow.pop %v2445
        %v2447 = vmul.f32 %v2159, 1.442695
        %v2448 = vpow.pop %v2447
        %v2449 = vmul.f32 %v2160, 1.442695
        %v2450 = vpow.pop %v2449
        %v2451 = vmul.f32 %v2161, 1.442695
        %v2452 = vpow.pop %v2451
        %v2453 = vmul.f32 %v2162, 1.442695
        %v2454 = vpow.pop %v2453
        %v2455 = vmul.f32 %v2163, 1.442695
        %v2456 = vpow.pop %v2455
        %v2457 = vmul.f32 %v2164, 1.442695
        %v2458 = vpow.pop %v2457
        %v2459 = vmul.f32 %v2165, 1.442695
        %v2460 = vpow.pop %v2459
        %v2461 = vmul.f32 %v2166, 1.442695
        %v2462 = vpow.pop %v2461
        %v2463 = vmul.f32 %v2167, 1.442695
        %v2464 = vpow.pop %v2463
        %v2465 = vmul.f32 %v2168, 1.442695
        %v2466 = vpow.pop %v2465
        %v2467 = vmul.f32 %v2169, 1.442695
        %v2468 = vpow.pop %v2467
        %v2469 = vmul.f32 %v2170, 1.442695
        %v2470 = vpow.pop %v2469
        %v2471 = vmul.f32 %v2171, 1.442695
        %v2472 = vpow.pop %v2471
        %v2473 = vmul.f32 %v2172, 1.442695
        %v2474 = vpow.pop %v2473
        %v2475 = vmul.f32 %v2173, 1.442695
        %v2476 = vpow.pop %v2475
        %v2477 = vmul.f32 %v2174, 1.442695
        %v2478 = vpow.pop %v2477
        %v2479 = vmul.f32 %v2175, 1.442695
        %v2480 = vpow.pop %v2479
        %v2481 = vmul.f32 %v2176, 1.442695
        %v2482 = vpow.pop %v2481
        %v2483 = vmul.f32 %v2177, 1.442695
        %v2484 = vpow.pop %v2483
        %v2485 = vmul.f32 %v2178, 1.442695
        %v2486 = vpow.pop %v2485
        %v2487 = vmul.f32 %v2179, 1.442695
        %v2488 = vpow.pop %v2487
        %v2489 = vmul.f32 %v2180, 1.442695
        %v2490 = vpow.pop %v2489
        %v2491 = vmul.f32 %v2181, 1.442695
        %v2492 = vpow.pop %v2491
        %v2493 = vmul.f32 %v2182, 1.442695
        %v2494 = vpow.pop %v2493
        %v2495 = vmul.f32 %v2183, 1.442695
        %v2496 = vpow.pop %v2495
        %v2497 = vmul.f32 %v2184, 1.442695
        %v2498 = vpow.pop %v2497
        %v2499 = vmul.f32 %v2185, 1.442695
        %v2500 = vpow.pop %v2499
        %v2501 = vmul.f32 %v2186, 1.442695
        %v2502 = vpow.pop %v2501
        %v2503 = vmul.f32 %v2187, 1.442695
        %v2504 = vpow.pop %v2503
        %v2505 = vmul.f32 %v2188, 1.442695
        %v2506 = vpow.pop %v2505
        %v2507 = vmul.f32 %v2189, 1.442695
        %v2508 = vpow.pop %v2507
        %v2509 = vmul.f32 %v2190, 1.442695
        %v2510 = vpow.pop %v2509
        %v2511 = vmul.f32 %v2191, 1.442695
        %v2512 = vpow.pop %v2511
        %v2513 = vmul.f32 %v2192, 1.442695
        %v2514 = vpow.pop %v2513
        %v2515 = vmul.f32 %v2193, 1.442695
        %v2516 = vpow.pop %v2515
        %v2517 = vmul.f32 %v2194, 1.442695
        %v2518 = vpow.pop %v2517
        %v2519 = vmul.f32 %v2195, 1.442695
        %v2520 = vpow.pop %v2519
        %v2521 = vmul.f32 %v2196, 1.442695
        %v2522 = vpow.pop %v2521
        %v2523 = vmul.f32 %v2197, 1.442695
        %v2524 = vpow.pop %v2523
        %v2525 = vmul.f32 %v2198, 1.442695
        %v2526 = vpow.pop %v2525
        %v2527 = vmul.f32 %v2199, 1.442695
        %v2528 = vpow.pop %v2527
        %v2529 = vmul.f32 %v2200, 1.442695
        %v2530 = vpow.pop %v2529
        %v2531 = vmul.f32 %v2201, 1.442695
        %v2532 = vpow.pop %v2531
        %v2533 = vmul.f32 %v2202, 1.442695
        %v2534 = vpow.pop %v2533
        %v2535 = vmul.f32 %v2203, 1.442695
        %v2536 = vpow.pop %v2535
        %v2537 = vmul.f32 %v2204, 1.442695
        %v2538 = vpow.pop %v2537
        %v2539 = vmul.f32 %v2205, 1.442695
        %v2540 = vpow.pop %v2539
        %v2541 = vmul.f32 %v2206, 1.442695
        %v2542 = vpow.pop %v2541
        %v2543 = vmul.f32 %v2207, 1.442695
        %v2544 = vpow.pop %v2543
        %v2545 = vmul.f32 %v2208, 1.442695
        %v2546 = vpow.pop %v2545
        %v2547 = vmul.f32 %v2209, 1.442695
        %v2548 = vpow.pop %v2547
        %v2549 = vmul.f32 %v2210, 1.442695
        %v2550 = vpow.pop %v2549
        %v2551 = vmul.f32 %v2211, 1.442695
        %v2552 = vpow.pop %v2551
        %v2553 = vmul.f32 %v2212, 1.442695
        %v2554 = vpow.pop %v2553
        %v2555 = vmul.f32 %v2213, 1.442695
        %v2556 = vpow.pop %v2555
        %v2557 = vmul.f32 %v2214, 1.442695
        %v2558 = vpow.pop %v2557
        %v2559 = vmul.f32 %v2215, 1.442695
        %v2560 = vpow.pop %v2559
        %v2561 = vmul.f32 %v2216, 1.442695
        %v2562 = vpow.pop %v2561
        %v2563 = vmul.f32 %v2217, 1.442695
        %v2564 = vpow.pop %v2563
        %v2565 = vmul.f32 %v2218, 1.442695
        %v2566 = vpow.pop %v2565
        %v2567 = vmul.f32 %v2219, 1.442695
        %v2568 = vpow.pop %v2567
        %v2569 = vmul.f32 %v2220, 1.442695
        %v2570 = vpow.pop %v2569
        %v2571 = vmul.f32 %v2221, 1.442695
        %v2572 = vpow.pop %v2571
        %v2573 = vmul.f32 %v2222, 1.442695
        %v2574 = vpow.pop %v2573
        %v2575 = vmul.f32 %v2223, 1.442695
        %v2576 = vpow.pop %v2575
        %v2577 = vmul.f32 %v2224, 1.442695
        %v2578 = vpow.pop %v2577
        %v2579 = vmul.f32 %v2225, 1.442695
        %v2580 = vpow.pop %v2579
        %v2581 = vmul.f32 %v2226, 1.442695
        %v2582 = vpow.pop %v2581
        %v2583 = vmul.f32 %v2227, 1.442695
        %v2584 = vpow.pop %v2583
        %v2585 = vmul.f32 %v2228, 1.442695
        %v2586 = vpow.pop %v2585
        %v2587 = vmul.f32 %v2229, 1.442695
        %v2588 = vpow.pop %v2587
        %v2589 = vmul.f32 %v2230, 1.442695
        %v2590 = vpow.pop %v2589
        %v2591 = vmul.f32 %v2231, 1.442695
        %v2592 = vpow.pop %v2591
        %v2593 = vmul.f32 %v2232, 1.442695
        %v2594 = vpow.pop %v2593
        %v2595 = vmul.f32 %v2233, 1.442695
        %v2596 = vpow.pop %v2595
        %v2597 = vmul.f32 %v2234, 1.442695
        %v2598 = vpow.pop %v2597
        %v2599 = vmul.f32 %v2235, 1.442695
        %v2600 = vpow.pop %v2599
        %v2601 = vmul.f32 %v2236, 1.442695
        %v2602 = vpow.pop %v2601
        %v2603 = vmul.f32 %v2237, 1.442695
        %v2604 = vpow.pop %v2603
        %v2605 = vmul.f32 %v2238, 1.442695
        %v2606 = vpow.pop %v2605
        %v2607 = vmul.f32 %v2239, 1.442695
        %v2608 = vpow.pop %v2607
        %v2609 = vmul.f32 %v2240, 1.442695
        %v2610 = vpow.pop %v2609
        %v2611 = vmul.f32 %v2241, 1.442695
        %v2612 = vpow.pop %v2611
        %v2613 = vmul.f32 %v2242, 1.442695
        %v2614 = vpow.pop %v2613
        %v2615 = vmul.f32 %v2243, 1.442695
        %v2616 = vpow.pop %v2615
        %v2617 = vmul.f32 %v2244, 1.442695
        %v2618 = vpow.pop %v2617
        %v2619 = vmul.f32 %v2245, 1.442695
        %v2620 = vpow.pop %v2619
        %v2621 = vmul.f32 %v2246, 1.442695
        %v2622 = vpow.pop %v2621
        %v2623 = vmul.f32 %v2247, 1.442695
        %v2624 = vpow.pop %v2623
        %v2625 = vmul.f32 %v2248, 1.442695
        %v2626 = vpow.pop %v2625
        %v2627 = vmul.f32 %v2249, 1.442695
        %v2628 = vpow.pop %v2627
        %v2629 = vmul.f32 %v2250, 1.442695
        %v2630 = vpow.pop %v2629
        %v2631 = vmul.f32 %v2251, 1.442695
        %v2632 = vpow.pop %v2631
        %v2633 = vmul.f32 %v2252, 1.442695
        %v2634 = vpow.pop %v2633
        %v2635 = vmul.f32 %v2253, 1.442695
        %v2636 = vpow.pop %v2635
        %v2637 = vmul.f32 %v2254, 1.442695
        %v2638 = vpow.pop %v2637
        %v2639 = vmul.f32 %v2255, 1.442695
        %v2640 = vpow.pop %v2639
        %v2641 = vmul.f32 %v2256, 1.442695
        %v2642 = vpow.pop %v2641
        %v2643 = vmul.f32 %v2257, 1.442695
        %v2644 = vpow.pop %v2643
        %v2645 = vmul.f32 %v2258, 1.442695
        %v2646 = vpow.pop %v2645
        %v2647 = vmul.f32 %v2259, 1.442695
        %v2648 = vpow.pop %v2647
        %v2649 = vmul.f32 %v2260, 1.442695
        %v2650 = vpow.pop %v2649
        %v2651 = vmul.f32 %v2261, 1.442695
        %v2652 = vpow.pop %v2651
        %v2653 = vmul.f32 %v2262, 1.442695
        %v2654 = vpow.pop %v2653
        %v2655 = vmul.f32 %v2263, 1.442695
        %v2656 = vpow.pop %v2655
        %v2657 = vmul.f32 %v2264, 1.442695
        %v2658 = vpow.pop %v2657
        %v2659 = vmul.f32 %v2265, 1.442695
        %v2660 = vpow.pop %v2659
        %v2661 = vmul.f32 %v2266, 1.442695
        %v2662 = vpow.pop %v2661
        %v2663 = vmul.f32 %v2267, 1.442695
        %v2664 = vpow.pop %v2663
        %v2665 = vmul.f32 %v2268, 1.442695
        %v2666 = vpow.pop %v2665
        %v2667 = vmul.f32 %v2269, 1.442695
        %v2668 = vpow.pop %v2667
        %v2669 = vmul.f32 %v2270, 1.442695
        %v2670 = vpow.pop %v2669
        %v2671 = vmul.f32 %v2271, 1.442695
        %v2672 = vpow.pop %v2671
        %v2673 = vmul.f32 %v2272, 1.442695
        %v2674 = vpow.pop %v2673
        %v2675 = vmul.f32 %v2273, 1.442695
        %v2676 = vpow.pop %v2675
        %v2677 = vmul.f32 %v2274, 1.442695
        %v2678 = vpow.pop %v2677
        %v2679 = vmul.f32 %v2275, 1.442695
        %v2680 = vpow.pop %v2679
        %v2681 = vmul.f32 %v2276, 1.442695
        %v2682 = vpow.pop %v2681
        %v2683 = vmul.f32 %v2277, 1.442695
        %v2684 = vpow.pop %v2683
        %v2685 = vmul.f32 %v2278, 1.442695
        %v2686 = vpow.pop %v2685
        %v2687 = vmul.f32 %v2279, 1.442695
        %v2688 = vpow.pop %v2687
        %v2689 = vmul.f32 %v2280, 1.442695
        %v2690 = vpow.pop %v2689
        %v2691 = vmul.f32 %v2281, 1.442695
        %v2692 = vpow.pop %v2691
        %v2693 = vmul.f32 %v2282, 1.442695
        %v2694 = vpow.pop %v2693
        %v2695 = vmul.f32 %v2283, 1.442695
        %v2696 = vpow.pop %v2695
        %v2697 = vmul.f32 %v2284, 1.442695
        %v2698 = vpow.pop %v2697
        %v2699 = vmul.f32 %v2285, 1.442695
        %v2700 = vpow.pop %v2699
        %v2701 = vmul.f32 %v2286, 1.442695
        %v2702 = vpow.pop %v2701
        %v2703 = vmul.f32 %v2287, 1.442695
        %v2704 = vpow.pop %v2703
        %v2705 = vmul.f32 %v2288, 1.442695
        %v2706 = vpow.pop %v2705
        %v2707 = vmul.f32 %v2289, 1.442695
        %v2708 = vpow.pop %v2707
        %v2709 = vmul.f32 %v2290, 1.442695
        %v2710 = vpow.pop %v2709
        %v2711 = vmul.f32 %v2291, 1.442695
        %v2712 = vpow.pop %v2711
        %v2713 = vmul.f32 %v2292, 1.442695
        %v2714 = vpow.pop %v2713
        %v2715 = vmul.f32 %v2293, 1.442695
        %v2716 = vpow.pop %v2715
        %v2717 = vmul.f32 %v2294, 1.442695
        %v2718 = vpow.pop %v2717
        %v2719 = vmul.f32 %v2295, 1.442695
        %v2720 = vpow.pop %v2719
        %v2721 = vmul.f32 %v2296, 1.442695
        %v2722 = vpow.pop %v2721
        %v2723 = vmul.f32 %v2297, 1.442695
        %v2724 = vpow.pop %v2723
        %v2725 = vmul.f32 %v2298, 1.442695
        %v2726 = vpow.pop %v2725
        %v2727 = vmul.f32 %v2299, 1.442695
        %v2728 = vpow.pop %v2727
        %v2729 = vmul.f32 %v2300, 1.442695
        %v2730 = vpow.pop %v2729
        %v2731 = vmul.f32 %v2301, 1.442695
        %v2732 = vpow.pop %v2731
        %v2733 = vmul.f32 %v2302, 1.442695
        %v2734 = vpow.pop %v2733
        %v2735 = vmul.f32 %v2303, 1.442695
        %v2736 = vpow.pop %v2735
        %v2737 = vmul.f32 %v2304, 1.442695
        %v2738 = vpow.pop %v2737
        %v2739 = vmul.f32 %v2305, 1.442695
        %v2740 = vpow.pop %v2739
        %v2741 = vmul.f32 %v2306, 1.442695
        %v2742 = vpow.pop %v2741
        %v2743 = vmul.f32 %v2307, 1.442695
        %v2744 = vpow.pop %v2743
        %v2745 = vmul.f32 %v2308, 1.442695
        %v2746 = vpow.pop %v2745
        %v2747 = vmul.f32 %v2309, 1.442695
        %v2748 = vpow.pop %v2747
        %v2749 = vmul.f32 %v2310, 1.442695
        %v2750 = vpow.pop %v2749
        %v2751 = vmul.f32 %v2311, 1.442695
        %v2752 = vpow.pop %v2751
        %v2753 = vmul.f32 %v2312, 1.442695
        %v2754 = vpow.pop %v2753
        %v2755 = vmul.f32 %v2313, 1.442695
        %v2756 = vpow.pop %v2755
        %v2757 = vmul.f32 %v2314, 1.442695
        %v2758 = vpow.pop %v2757
        %v2759 = vmul.f32 %v2315, 1.442695
        %v2760 = vpow.pop %v2759
        %v2761 = vmul.f32 %v2316, 1.442695
        %v2762 = vpow.pop %v2761
        %v2763 = vmul.f32 %v2317, 1.442695
        %v2764 = vpow.pop %v2763
        %v2765 = vmul.f32 %v2318, 1.442695
        %v2766 = vpow.pop %v2765
        %v2767 = vmul.f32 %v2319, 1.442695
        %v2768 = vpow.pop %v2767
        %v2769 = vmul.f32 %v2320, 1.442695
        %v2770 = vpow.pop %v2769
        %v2771 = vmul.f32 %v2321, 1.442695
        %v2772 = vpow.pop %v2771
        %v2773 = vmul.f32 %v2322, 1.442695
        %v2774 = vpow.pop %v2773
        %v2775 = vmul.f32 %v2323, 1.442695
        %v2776 = vpow.pop %v2775
        %v2777 = vmul.f32 %v2324, 1.442695
        %v2778 = vpow.pop %v2777
        %v2779 = vmul.f32 %v2325, 1.442695
        %v2780 = vpow.pop %v2779
        %v2781 = vmul.f32 %v2326, 1.442695
        %v2782 = vpow.pop %v2781
        %v2783 = vmul.f32 %v2327, 1.442695
        %v2784 = vpow.pop %v2783
        %v2785 = vmul.f32 %v2328, 1.442695
        %v2786 = vpow.pop %v2785
        %v2787 = vmul.f32 %v2329, 1.442695
        %v2788 = vpow.pop %v2787
        %v2789 = vmul.f32 %v2330, 1.442695
        %v2790 = vpow.pop %v2789
        %v2791 = vmul.f32 %v2331, 1.442695
        %v2792 = vpow.pop %v2791
        %v2793 = vmul.f32 %v2332, 1.442695
        %v2794 = vpow.pop %v2793
        %v2795 = vmul.f32 %v2333, 1.442695
        %v2796 = vpow.pop %v2795
        %v2797 = vmul.f32 %v2334, 1.442695
        %v2798 = vpow.pop %v2797
        %v2799 = vmul.f32 %v2335, 1.442695
        %v2800 = vpow.pop %v2799
        %v2801 = vmul.f32 %v2336, 1.442695
        %v2802 = vpow.pop %v2801
        %v2803 = vmul.f32 %v2337, 1.442695
        %v2804 = vpow.pop %v2803
        %v2805 = vmul.f32 %v2338, 1.442695
        %v2806 = vpow.pop %v2805
        %v2807 = vmul.f32 %v2339, 1.442695
        %v2808 = vpow.pop %v2807
        %v2809 = vmul.f32 %v2340, 1.442695
        %v2810 = vpow.pop %v2809
        %v2811 = vmul.f32 %v2341, 1.442695
        %v2812 = vpow.pop %v2811
        %v2813 = vmul.f32 %v2342, 1.442695
        %v2814 = vpow.pop %v2813
        %v2815 = vmul.f32 %v2343, 1.442695
        %v2816 = vpow.pop %v2815
        %v2817 = vmul.f32 %v2344, 1.442695
        %v2818 = vpow.pop %v2817
        %v2819 = vmul.f32 %v2345, 1.442695
        %v2820 = vpow.pop %v2819
        %v2821 = vmul.f32 %v2346, 1.442695
        %v2822 = vpow.pop %v2821
        %v2823 = vmul.f32 %v2347, 1.442695
        %v2824 = vpow.pop %v2823
        %v2825 = vmul.f32 %v2348, 1.442695
        %v2826 = vpow.pop %v2825
        %v2827 = vmul.f32 %v2349, 1.442695
        %v2828 = vpow.pop %v2827
        %v2829 = vmul.f32 %v2350, 1.442695
        %v2830 = vpow.pop %v2829
        %v2831 = vmul.f32 %v2351, 1.442695
        %v2832 = vpow.pop %v2831
        %v2833 = vmul.f32 %v2352, 1.442695
        %v2834 = vpow.pop %v2833
        %v2835 = vmul.f32 %v2353, 1.442695
        %v2836 = vpow.pop %v2835
        %v2837 = vmul.f32 %v2354, 1.442695
        %v2838 = vpow.pop %v2837
        %v2839 = vmul.f32 %v2355, 1.442695
        %v2840 = vpow.pop %v2839
        %v2841 = vmul.f32 %v2356, 1.442695
        %v2842 = vpow.pop %v2841
        %v2843 = vmul.f32 %v2357, 1.442695
        %v2844 = vpow.pop %v2843
        %v2845 = vmul.f32 %v2358, 1.442695
        %v2846 = vpow.pop %v2845
        %v2847 = vmul.f32 %v2359, 1.442695
        %v2848 = vpow.pop %v2847
        %v2849 = vmul.f32 %v2360, 1.442695
        %v2850 = vpow.pop %v2849
        %v2851 = vmul.f32 %v2361, 1.442695
        %v2852 = vpow.pop %v2851
        %v2853 = vmul.f32 %v2362, 1.442695
        %v2854 = vpow.pop %v2853
        %v2855 = vmul.f32 %v2363, 1.442695
        %v2856 = vpow.pop %v2855
        %v2857 = vmul.f32 %v2364, 1.442695
        %v2858 = vpow.pop %v2857
        %v2859 = vmul.f32 %v2365, 1.442695
        %v2860 = vpow.pop %v2859
        %v2861 = vmul.f32 %v2366, 1.442695
        %v2862 = vpow.pop %v2861
        %v2863 = vmul.f32 %v2367, 1.442695
        %v2864 = vpow.pop %v2863
        %v2865 = vmul.f32 %v2368, 1.442695
        %v2866 = vpow.pop %v2865
        %v2867 = vmul.f32 %v2369, 1.442695
        %v2868 = vpow.pop %v2867
        %v2869 = vmul.f32 %v2370, 1.442695
        %v2870 = vpow.pop %v2869
        %v2871 = vmul.f32 %v2371, 1.442695
        %v2872 = vpow.pop %v2871
        %v2873 = vmul.f32 %v2372, 1.442695
        %v2874 = vpow.pop %v2873
        %v2875 = vmul.f32 %v2373, 1.442695
        %v2876 = vpow.pop %v2875
        %v2877 = vmul.f32 %v2374, 1.442695
        %v2878 = vpow.pop %v2877
        %v2879 = vmul.f32 %v2375, 1.442695
        %v2880 = vpow.pop %v2879
        %v2881 = vmul.f32 %v2376, 1.442695
        %v2882 = vpow.pop %v2881
        %v2883 = vmul.f32 %v2377, 1.442695
        %v2884 = vpow.pop %v2883
        %v2885 = vmul.f32 %v2378, 1.442695
        %v2886 = vpow.pop %v2885
        %v2887 = vmul.f32 %v2379, 1.442695
        %v2888 = vpow.pop %v2887
        %v2889 = vmul.f32 %v2380, 1.442695
        %v2890 = vpow.pop %v2889
        %v2891 = vmul.f32 %v2381, 1.442695
        %v2892 = vpow.pop %v2891
        %v2893 = vmul.f32 %v2382, 1.442695
        %v2894 = vpow.pop %v2893
        %v2895 = vpack.c.bf16 %v2386, %v2384
        %v2896 = vpack.c.bf16 %v2390, %v2388
        %v2897 = vpack.c.bf16 %v2394, %v2392
        %v2898 = vpack.c.bf16 %v2398, %v2396
        %v2899 = vpack.c.bf16 %v2402, %v2400
        %v2900 = vpack.c.bf16 %v2406, %v2404
        %v2901 = vpack.c.bf16 %v2410, %v2408
        %v2902 = vpack.c.bf16 %v2414, %v2412
        %v2903 = vpack.c.bf16 %v2418, %v2416
        %v2904 = vpack.c.bf16 %v2422, %v2420
        %v2905 = vpack.c.bf16 %v2426, %v2424
        %v2906 = vpack.c.bf16 %v2430, %v2428
        %v2907 = vpack.c.bf16 %v2434, %v2432
        %v2908 = vpack.c.bf16 %v2438, %v2436
        %v2909 = vpack.c.bf16 %v2442, %v2440
        %v2910 = vpack.c.bf16 %v2446, %v2444
        %v2911 = vpack.c.bf16 %v2450, %v2448
        %v2912 = vpack.c.bf16 %v2454, %v2452
        %v2913 = vpack.c.bf16 %v2458, %v2456
        %v2914 = vpack.c.bf16 %v2462, %v2460
        %v2915 = vpack.c.bf16 %v2466, %v2464
        %v2916 = vpack.c.bf16 %v2470, %v2468
        %v2917 = vpack.c.bf16 %v2474, %v2472
        %v2918 = vpack.c.bf16 %v2478, %v2476
        %v2919 = vpack.c.bf16 %v2482, %v2480
        %v2920 = vpack.c.bf16 %v2486, %v2484
        %v2921 = vpack.c.bf16 %v2490, %v2488
        %v2922 = vpack.c.bf16 %v2494, %v2492
        %v2923 = vpack.c.bf16 %v2498, %v2496
        %v2924 = vpack.c.bf16 %v2502, %v2500
        %v2925 = vpack.c.bf16 %v2506, %v2504
        %v2926 = vpack.c.bf16 %v2510, %v2508
        %v2927 = vpack.c.bf16 %v2514, %v2512
        %v2928 = vpack.c.bf16 %v2518, %v2516
        %v2929 = vpack.c.bf16 %v2522, %v2520
        %v2930 = vpack.c.bf16 %v2526, %v2524
        %v2931 = vpack.c.bf16 %v2530, %v2528
        %v2932 = vpack.c.bf16 %v2534, %v2532
        %v2933 = vpack.c.bf16 %v2538, %v2536
        %v2934 = vpack.c.bf16 %v2542, %v2540
        %v2935 = vpack.c.bf16 %v2546, %v2544
        %v2936 = vpack.c.bf16 %v2550, %v2548
        %v2937 = vpack.c.bf16 %v2554, %v2552
        %v2938 = vpack.c.bf16 %v2558, %v2556
        %v2939 = vpack.c.bf16 %v2562, %v2560
        %v2940 = vpack.c.bf16 %v2566, %v2564
        %v2941 = vpack.c.bf16 %v2570, %v2568
        %v2942 = vpack.c.bf16 %v2574, %v2572
        %v2943 = vpack.c.bf16 %v2578, %v2576
        %v2944 = vpack.c.bf16 %v2582, %v2580
        %v2945 = vpack.c.bf16 %v2586, %v2584
        %v2946 = vpack.c.bf16 %v2590, %v2588
        %v2947 = vpack.c.bf16 %v2594, %v2592
        %v2948 = vpack.c.bf16 %v2598, %v2596
        %v2949 = vpack.c.bf16 %v2602, %v2600
        %v2950 = vpack.c.bf16 %v2606, %v2604
        %v2951 = vpack.c.bf16 %v2610, %v2608
        %v2952 = vpack.c.bf16 %v2614, %v2612
        %v2953 = vpack.c.bf16 %v2618, %v2616
        %v2954 = vpack.c.bf16 %v2622, %v2620
        %v2955 = vpack.c.bf16 %v2626, %v2624
        %v2956 = vpack.c.bf16 %v2630, %v2628
        %v2957 = vpack.c.bf16 %v2634, %v2632
        %v2958 = vpack.c.bf16 %v2638, %v2636
        %v2959 = vpack.c.bf16 %v2642, %v2640
        %v2960 = vpack.c.bf16 %v2646, %v2644
        %v2961 = vpack.c.bf16 %v2650, %v2648
        %v2962 = vpack.c.bf16 %v2654, %v2652
        %v2963 = vpack.c.bf16 %v2658, %v2656
        %v2964 = vpack.c.bf16 %v2662, %v2660
        %v2965 = vpack.c.bf16 %v2666, %v2664
        %v2966 = vpack.c.bf16 %v2670, %v2668
        %v2967 = vpack.c.bf16 %v2674, %v2672
        %v2968 = vpack.c.bf16 %v2678, %v2676
        %v2969 = vpack.c.bf16 %v2682, %v2680
        %v2970 = vpack.c.bf16 %v2686, %v2684
        %v2971 = vpack.c.bf16 %v2690, %v2688
        %v2972 = vpack.c.bf16 %v2694, %v2692
        %v2973 = vpack.c.bf16 %v2698, %v2696
        %v2974 = vpack.c.bf16 %v2702, %v2700
        %v2975 = vpack.c.bf16 %v2706, %v2704
        %v2976 = vpack.c.bf16 %v2710, %v2708
        %v2977 = vpack.c.bf16 %v2714, %v2712
        %v2978 = vpack.c.bf16 %v2718, %v2716
        %v2979 = vpack.c.bf16 %v2722, %v2720
        %v2980 = vpack.c.bf16 %v2726, %v2724
        %v2981 = vpack.c.bf16 %v2730, %v2728
        %v2982 = vpack.c.bf16 %v2734, %v2732
        %v2983 = vpack.c.bf16 %v2738, %v2736
        %v2984 = vpack.c.bf16 %v2742, %v2740
        %v2985 = vpack.c.bf16 %v2746, %v2744
        %v2986 = vpack.c.bf16 %v2750, %v2748
        %v2987 = vpack.c.bf16 %v2754, %v2752
        %v2988 = vpack.c.bf16 %v2758, %v2756
        %v2989 = vpack.c.bf16 %v2762, %v2760
        %v2990 = vpack.c.bf16 %v2766, %v2764
        %v2991 = vpack.c.bf16 %v2770, %v2768
        %v2992 = vpack.c.bf16 %v2774, %v2772
        %v2993 = vpack.c.bf16 %v2778, %v2776
        %v2994 = vpack.c.bf16 %v2782, %v2780
        %v2995 = vpack.c.bf16 %v2786, %v2784
        %v2996 = vpack.c.bf16 %v2790, %v2788
        %v2997 = vpack.c.bf16 %v2794, %v2792
        %v2998 = vpack.c.bf16 %v2798, %v2796
        %v2999 = vpack.c.bf16 %v2802, %v2800
        %v3000 = vpack.c.bf16 %v2806, %v2804
        %v3001 = vpack.c.bf16 %v2810, %v2808
        %v3002 = vpack.c.bf16 %v2814, %v2812
        %v3003 = vpack.c.bf16 %v2818, %v2816
        %v3004 = vpack.c.bf16 %v2822, %v2820
        %v3005 = vpack.c.bf16 %v2826, %v2824
        %v3006 = vpack.c.bf16 %v2830, %v2828
        %v3007 = vpack.c.bf16 %v2834, %v2832
        %v3008 = vpack.c.bf16 %v2838, %v2836
        %v3009 = vpack.c.bf16 %v2842, %v2840
        %v3010 = vpack.c.bf16 %v2846, %v2844
        %v3011 = vpack.c.bf16 %v2850, %v2848
        %v3012 = vpack.c.bf16 %v2854, %v2852
        %v3013 = vpack.c.bf16 %v2858, %v2856
        %v3014 = vpack.c.bf16 %v2862, %v2860
        %v3015 = vpack.c.bf16 %v2866, %v2864
        %v3016 = vpack.c.bf16 %v2870, %v2868
        %v3017 = vpack.c.bf16 %v2874, %v2872
        %v3018 = vpack.c.bf16 %v2878, %v2876
        %v3019 = vpack.c.bf16 %v2882, %v2880
        %v3020 = vpack.c.bf16 %v2886, %v2884
        %v3021 = vpack.c.bf16 %v2890, %v2888
        %v3022 = vpack.c.bf16 %v2894, %v2892
        %3023 = vst [vmem:[#allocation1] ss:$9 sm:$0xff] %v382
        %v3024 = vld [vmem:[#allocation1] sm:$0xff]
        %v3025 = vld [vmem:[#allocation1 + $0x9] sm:$0xff]
        %3027 = vst [vmem:[#allocation1] ss:$9 sm:$0xff] %v385
        %v3028 = vld [vmem:[#allocation1] sm:$0xff]
        %v3029 = vld [vmem:[#allocation1 + $0x9] sm:$0xff]
        %3031 = vst [vmem:[#allocation1] ss:$9 sm:$0xff] %v388
        %v3032 = vld [vmem:[#allocation1] sm:$0xff]
        %v3033 = vld [vmem:[#allocation1 + $0x9] sm:$0xff]
        %3035 = vst [vmem:[#allocation1] ss:$9 sm:$0xff] %v391
        %v3036 = vld [vmem:[#allocation1] sm:$0xff]
        %v3037 = vld [vmem:[#allocation1 + $0x9] sm:$0xff]
        %v3039 = vsel %vm346, %v3024, 1065369472
        %v3041 = vsel %vm346, %v3025, 1065369472
        %v3043 = vsel %vm346, %v3028, 1065369472
        %v3045 = vsel %vm346, %v3029, 1065369472
        %v3047 = vsel %vm346, %v3032, 1065369472
        %v3049 = vsel %vm346, %v3033, 1065369472
        %v3051 = vsel %vm346, %v3036, 1065369472
        %v3053 = vsel %vm346, %v3037, 1065369472
        %v3087 = vunpack.c.l.b16 %v2895
        %v3088 = vunpack.c.h.b16 %v2895
        %v3089 = vunpack.c.l.b16 %v2896
        %v3090 = vunpack.c.h.b16 %v2896
        %v3091 = vunpack.c.l.b16 %v2897
        %v3092 = vunpack.c.h.b16 %v2897
        %v3093 = vunpack.c.l.b16 %v2898
        %v3094 = vunpack.c.h.b16 %v2898
        %v3095 = vunpack.c.l.b16 %v2899
        %v3096 = vunpack.c.h.b16 %v2899
        %v3097 = vunpack.c.l.b16 %v2900
        %v3098 = vunpack.c.h.b16 %v2900
        %v3099 = vunpack.c.l.b16 %v2901
        %v3100 = vunpack.c.h.b16 %v2901
        %v3101 = vunpack.c.l.b16 %v2902
        %v3102 = vunpack.c.h.b16 %v2902
        %v3103 = vunpack.c.l.b16 %v2903
        %v3104 = vunpack.c.h.b16 %v2903
        %v3105 = vunpack.c.l.b16 %v2904
        %v3106 = vunpack.c.h.b16 %v2904
        %v3107 = vunpack.c.l.b16 %v2905
        %v3108 = vunpack.c.h.b16 %v2905
        %v3109 = vunpack.c.l.b16 %v2906
        %v3110 = vunpack.c.h.b16 %v2906
        %v3111 = vunpack.c.l.b16 %v2907
        %v3112 = vunpack.c.h.b16 %v2907
        %v3113 = vunpack.c.l.b16 %v2908
        %v3114 = vunpack.c.h.b16 %v2908
        %v3115 = vunpack.c.l.b16 %v2909
        %v3116 = vunpack.c.h.b16 %v2909
        %v3117 = vunpack.c.l.b16 %v2910
        %v3118 = vunpack.c.h.b16 %v2910
        %v3119 = vunpack.c.l.b16 %v2911
        %v3120 = vunpack.c.h.b16 %v2911
        %v3121 = vunpack.c.l.b16 %v2912
        %v3122 = vunpack.c.h.b16 %v2912
        %v3123 = vunpack.c.l.b16 %v2913
        %v3124 = vunpack.c.h.b16 %v2913
        %v3125 = vunpack.c.l.b16 %v2914
        %v3126 = vunpack.c.h.b16 %v2914
        %v3127 = vunpack.c.l.b16 %v2915
        %v3128 = vunpack.c.h.b16 %v2915
        %v3129 = vunpack.c.l.b16 %v2916
        %v3130 = vunpack.c.h.b16 %v2916
        %v3131 = vunpack.c.l.b16 %v2917
        %v3132 = vunpack.c.h.b16 %v2917
        %v3133 = vunpack.c.l.b16 %v2918
        %v3134 = vunpack.c.h.b16 %v2918
        %v3135 = vunpack.c.l.b16 %v2919
        %v3136 = vunpack.c.h.b16 %v2919
        %v3137 = vunpack.c.l.b16 %v2920
        %v3138 = vunpack.c.h.b16 %v2920
        %v3139 = vunpack.c.l.b16 %v2921
        %v3140 = vunpack.c.h.b16 %v2921
        %v3141 = vunpack.c.l.b16 %v2922
        %v3142 = vunpack.c.h.b16 %v2922
        %v3143 = vunpack.c.l.b16 %v2923
        %v3144 = vunpack.c.h.b16 %v2923
        %v3145 = vunpack.c.l.b16 %v2924
        %v3146 = vunpack.c.h.b16 %v2924
        %v3147 = vunpack.c.l.b16 %v2925
        %v3148 = vunpack.c.h.b16 %v2925
        %v3149 = vunpack.c.l.b16 %v2926
        %v3150 = vunpack.c.h.b16 %v2926
        %v3151 = vpack.c.b16 %v3089, %v3087
        %v3152 = vpack.c.b16 %v3090, %v3088
        %v3153 = vpack.c.b16 %v3093, %v3091
        %v3154 = vpack.c.b16 %v3094, %v3092
        %v3155 = vpack.c.b16 %v3097, %v3095
        %v3156 = vpack.c.b16 %v3098, %v3096
        %v3157 = vpack.c.b16 %v3101, %v3099
        %v3158 = vpack.c.b16 %v3102, %v3100
        %v3159 = vpack.c.b16 %v3105, %v3103
        %v3160 = vpack.c.b16 %v3106, %v3104
        %v3161 = vpack.c.b16 %v3109, %v3107
        %v3162 = vpack.c.b16 %v3110, %v3108
        %v3163 = vpack.c.b16 %v3113, %v3111
        %v3164 = vpack.c.b16 %v3114, %v3112
        %v3165 = vpack.c.b16 %v3117, %v3115
        %v3166 = vpack.c.b16 %v3118, %v3116
        %v3167 = vpack.c.b16 %v3121, %v3119
        %v3168 = vpack.c.b16 %v3122, %v3120
        %v3169 = vpack.c.b16 %v3125, %v3123
        %v3170 = vpack.c.b16 %v3126, %v3124
        %v3171 = vpack.c.b16 %v3129, %v3127
        %v3172 = vpack.c.b16 %v3130, %v3128
        %v3173 = vpack.c.b16 %v3133, %v3131
        %v3174 = vpack.c.b16 %v3134, %v3132
        %v3175 = vpack.c.b16 %v3137, %v3135
        %v3176 = vpack.c.b16 %v3138, %v3136
        %v3177 = vpack.c.b16 %v3141, %v3139
        %v3178 = vpack.c.b16 %v3142, %v3140
        %v3179 = vpack.c.b16 %v3145, %v3143
        %v3180 = vpack.c.b16 %v3146, %v3144
        %v3181 = vpack.c.b16 %v3149, %v3147
        %v3182 = vpack.c.b16 %v3150, %v3148
        %3215 = vmatpush.bf16.msra.mxu0 %v3165
        %3216 = vmatpush.bf16.msra.mxu0 %v3163
        %3217 = vmatpush.bf16.msra.mxu0 %v3161
        %3218 = vmatpush.bf16.msra.mxu0 %v3159
        %3219 = vmatpush.bf16.msra.mxu0 %v3157
        %3220 = vmatpush.bf16.msra.mxu0 %v3155
        %3221 = vmatpush.bf16.msra.mxu0 %v3153
        %3222 = vmatpush.bf16.msra.mxu0 %v3151
        %3223 = vmatmul.bf16.gmra.mxu0 %v3039
        %v3224 = vpop.f32.mrf.mxu0
        %v3225 = vadd.f32 0.0, %v3224
        %v3226 = vpop.f32.mrf.mxu0
        %3227 = vdwg.mxu0
        %3228 = vmatpush.bf16.msra.mxu0 %v3181
        %3229 = vmatpush.bf16.msra.mxu0 %v3179
        %3230 = vmatpush.bf16.msra.mxu0 %v3177
        %3231 = vmatpush.bf16.msra.mxu0 %v3175
        %3232 = vmatpush.bf16.msra.mxu0 %v3173
        %3233 = vmatpush.bf16.msra.mxu0 %v3171
        %3234 = vmatpush.bf16.msra.mxu0 %v3169
        %3235 = vmatpush.bf16.msra.mxu0 %v3167
        %3236 = vmatmul.bf16.gmra.mxu0 %v3041
        %v3237 = vpop.f32.mrf.mxu0
        %v3238 = vadd.f32 %v3225, %v3237
        %v3239 = vpop.f32.mrf.mxu0
        %3240 = vdwg.mxu0
        %3241 = vmatpush.bf16.msra.mxu0 %v3166
        %3242 = vmatpush.bf16.msra.mxu0 %v3164
        %3243 = vmatpush.bf16.msra.mxu0 %v3162
        %3244 = vmatpush.bf16.msra.mxu0 %v3160
        %3245 = vmatpush.bf16.msra.mxu0 %v3158
        %3246 = vmatpush.bf16.msra.mxu0 %v3156
        %3247 = vmatpush.bf16.msra.mxu0 %v3154
        %3248 = vmatpush.bf16.msra.mxu0 %v3152
        %3249 = vmatmul.bf16.gmra.mxu0 %v3039
        %v3250 = vpop.f32.mrf.mxu0
        %v3251 = vadd.f32 0.0, %v3250
        %v3252 = vpop.f32.mrf.mxu0
        %3253 = vdwg.mxu0
        %3254 = vmatpush.bf16.msra.mxu0 %v3182
        %3255 = vmatpush.bf16.msra.mxu0 %v3180
        %3256 = vmatpush.bf16.msra.mxu0 %v3178
        %3257 = vmatpush.bf16.msra.mxu0 %v3176
        %3258 = vmatpush.bf16.msra.mxu0 %v3174
        %3259 = vmatpush.bf16.msra.mxu0 %v3172
        %3260 = vmatpush.bf16.msra.mxu0 %v3170
        %3261 = vmatpush.bf16.msra.mxu0 %v3168
        %3262 = vmatmul.bf16.gmra.mxu0 %v3041
        %v3263 = vpop.f32.mrf.mxu0
        %v3264 = vadd.f32 %v3251, %v3263
        %v3265 = vpop.f32.mrf.mxu0
        %3266 = vdwg.mxu0
        %v3299 = vunpack.c.l.b16 %v2927
        %v3300 = vunpack.c.h.b16 %v2927
        %v3301 = vunpack.c.l.b16 %v2928
        %v3302 = vunpack.c.h.b16 %v2928
        %v3303 = vunpack.c.l.b16 %v2929
        %v3304 = vunpack.c.h.b16 %v2929
        %v3305 = vunpack.c.l.b16 %v2930
        %v3306 = vunpack.c.h.b16 %v2930
        %v3307 = vunpack.c.l.b16 %v2931
        %v3308 = vunpack.c.h.b16 %v2931
        %v3309 = vunpack.c.l.b16 %v2932
        %v3310 = vunpack.c.h.b16 %v2932
        %v3311 = vunpack.c.l.b16 %v2933
        %v3312 = vunpack.c.h.b16 %v2933
        %v3313 = vunpack.c.l.b16 %v2934
        %v3314 = vunpack.c.h.b16 %v2934
        %v3315 = vunpack.c.l.b16 %v2935
        %v3316 = vunpack.c.h.b16 %v2935
        %v3317 = vunpack.c.l.b16 %v2936
        %v3318 = vunpack.c.h.b16 %v2936
        %v3319 = vunpack.c.l.b16 %v2937
        %v3320 = vunpack.c.h.b16 %v2937
        %v3321 = vunpack.c.l.b16 %v2938
        %v3322 = vunpack.c.h.b16 %v2938
        %v3323 = vunpack.c.l.b16 %v2939
        %v3324 = vunpack.c.h.b16 %v2939
        %v3325 = vunpack.c.l.b16 %v2940
        %v3326 = vunpack.c.h.b16 %v2940
        %v3327 = vunpack.c.l.b16 %v2941
        %v3328 = vunpack.c.h.b16 %v2941
        %v3329 = vunpack.c.l.b16 %v2942
        %v3330 = vunpack.c.h.b16 %v2942
        %v3331 = vunpack.c.l.b16 %v2943
        %v3332 = vunpack.c.h.b16 %v2943
        %v3333 = vunpack.c.l.b16 %v2944
        %v3334 = vunpack.c.h.b16 %v2944
        %v3335 = vunpack.c.l.b16 %v2945
        %v3336 = vunpack.c.h.b16 %v2945
        %v3337 = vunpack.c.l.b16 %v2946
        %v3338 = vunpack.c.h.b16 %v2946
        %v3339 = vunpack.c.l.b16 %v2947
        %v3340 = vunpack.c.h.b16 %v2947
        %v3341 = vunpack.c.l.b16 %v2948
        %v3342 = vunpack.c.h.b16 %v2948
        %v3343 = vunpack.c.l.b16 %v2949
        %v3344 = vunpack.c.h.b16 %v2949
        %v3345 = vunpack.c.l.b16 %v2950
        %v3346 = vunpack.c.h.b16 %v2950
        %v3347 = vunpack.c.l.b16 %v2951
        %v3348 = vunpack.c.h.b16 %v2951
        %v3349 = vunpack.c.l.b16 %v2952
        %v3350 = vunpack.c.h.b16 %v2952
        %v3351 = vunpack.c.l.b16 %v2953
        %v3352 = vunpack.c.h.b16 %v2953
        %v3353 = vunpack.c.l.b16 %v2954
        %v3354 = vunpack.c.h.b16 %v2954
        %v3355 = vunpack.c.l.b16 %v2955
        %v3356 = vunpack.c.h.b16 %v2955
        %v3357 = vunpack.c.l.b16 %v2956
        %v3358 = vunpack.c.h.b16 %v2956
        %v3359 = vunpack.c.l.b16 %v2957
        %v3360 = vunpack.c.h.b16 %v2957
        %v3361 = vunpack.c.l.b16 %v2958
        %v3362 = vunpack.c.h.b16 %v2958
        %v3363 = vpack.c.b16 %v3301, %v3299
        %v3364 = vpack.c.b16 %v3302, %v3300
        %v3365 = vpack.c.b16 %v3305, %v3303
        %v3366 = vpack.c.b16 %v3306, %v3304
        %v3367 = vpack.c.b16 %v3309, %v3307
        %v3368 = vpack.c.b16 %v3310, %v3308
        %v3369 = vpack.c.b16 %v3313, %v3311
        %v3370 = vpack.c.b16 %v3314, %v3312
        %v3371 = vpack.c.b16 %v3317, %v3315
        %v3372 = vpack.c.b16 %v3318, %v3316
        %v3373 = vpack.c.b16 %v3321, %v3319
        %v3374 = vpack.c.b16 %v3322, %v3320
        %v3375 = vpack.c.b16 %v3325, %v3323
        %v3376 = vpack.c.b16 %v3326, %v3324
        %v3377 = vpack.c.b16 %v3329, %v3327
        %v3378 = vpack.c.b16 %v3330, %v3328
        %v3379 = vpack.c.b16 %v3333, %v3331
        %v3380 = vpack.c.b16 %v3334, %v3332
        %v3381 = vpack.c.b16 %v3337, %v3335
        %v3382 = vpack.c.b16 %v3338, %v3336
        %v3383 = vpack.c.b16 %v3341, %v3339
        %v3384 = vpack.c.b16 %v3342, %v3340
        %v3385 = vpack.c.b16 %v3345, %v3343
        %v3386 = vpack.c.b16 %v3346, %v3344
        %v3387 = vpack.c.b16 %v3349, %v3347
        %v3388 = vpack.c.b16 %v3350, %v3348
        %v3389 = vpack.c.b16 %v3353, %v3351
        %v3390 = vpack.c.b16 %v3354, %v3352
        %v3391 = vpack.c.b16 %v3357, %v3355
        %v3392 = vpack.c.b16 %v3358, %v3356
        %v3393 = vpack.c.b16 %v3361, %v3359
        %v3394 = vpack.c.b16 %v3362, %v3360
        %3427 = vmatpush.bf16.msra.mxu0 %v3377
        %3428 = vmatpush.bf16.msra.mxu0 %v3375
        %3429 = vmatpush.bf16.msra.mxu0 %v3373
        %3430 = vmatpush.bf16.msra.mxu0 %v3371
        %3431 = vmatpush.bf16.msra.mxu0 %v3369
        %3432 = vmatpush.bf16.msra.mxu0 %v3367
        %3433 = vmatpush.bf16.msra.mxu0 %v3365
        %3434 = vmatpush.bf16.msra.mxu0 %v3363
        %3435 = vmatmul.bf16.gmra.mxu0 %v3043
        %v3436 = vpop.f32.mrf.mxu0
        %v3437 = vadd.f32 0.0, %v3436
        %v3438 = vpop.f32.mrf.mxu0
        %3439 = vdwg.mxu0
        %3440 = vmatpush.bf16.msra.mxu0 %v3393
        %3441 = vmatpush.bf16.msra.mxu0 %v3391
        %3442 = vmatpush.bf16.msra.mxu0 %v3389
        %3443 = vmatpush.bf16.msra.mxu0 %v3387
        %3444 = vmatpush.bf16.msra.mxu0 %v3385
        %3445 = vmatpush.bf16.msra.mxu0 %v3383
        %3446 = vmatpush.bf16.msra.mxu0 %v3381
        %3447 = vmatpush.bf16.msra.mxu0 %v3379
        %3448 = vmatmul.bf16.gmra.mxu0 %v3045
        %v3449 = vpop.f32.mrf.mxu0
        %v3450 = vadd.f32 %v3437, %v3449
        %v3451 = vpop.f32.mrf.mxu0
        %3452 = vdwg.mxu0
        %3453 = vmatpush.bf16.msra.mxu0 %v3378
        %3454 = vmatpush.bf16.msra.mxu0 %v3376
        %3455 = vmatpush.bf16.msra.mxu0 %v3374
        %3456 = vmatpush.bf16.msra.mxu0 %v3372
        %3457 = vmatpush.bf16.msra.mxu0 %v3370
        %3458 = vmatpush.bf16.msra.mxu0 %v3368
        %3459 = vmatpush.bf16.msra.mxu0 %v3366
        %3460 = vmatpush.bf16.msra.mxu0 %v3364
        %3461 = vmatmul.bf16.gmra.mxu0 %v3043
        %v3462 = vpop.f32.mrf.mxu0
        %v3463 = vadd.f32 0.0, %v3462
        %v3464 = vpop.f32.mrf.mxu0
        %3465 = vdwg.mxu0
        %3466 = vmatpush.bf16.msra.mxu0 %v3394
        %3467 = vmatpush.bf16.msra.mxu0 %v3392
        %3468 = vmatpush.bf16.msra.mxu0 %v3390
        %3469 = vmatpush.bf16.msra.mxu0 %v3388
        %3470 = vmatpush.bf16.msra.mxu0 %v3386
        %3471 = vmatpush.bf16.msra.mxu0 %v3384
        %3472 = vmatpush.bf16.msra.mxu0 %v3382
        %3473 = vmatpush.bf16.msra.mxu0 %v3380
        %3474 = vmatmul.bf16.gmra.mxu0 %v3045
        %v3475 = vpop.f32.mrf.mxu0
        %v3476 = vadd.f32 %v3463, %v3475
        %v3477 = vpop.f32.mrf.mxu0
        %3478 = vdwg.mxu0
        %v3511 = vunpack.c.l.b16 %v2959
        %v3512 = vunpack.c.h.b16 %v2959
        %v3513 = vunpack.c.l.b16 %v2960
        %v3514 = vunpack.c.h.b16 %v2960
        %v3515 = vunpack.c.l.b16 %v2961
        %v3516 = vunpack.c.h.b16 %v2961
        %v3517 = vunpack.c.l.b16 %v2962
        %v3518 = vunpack.c.h.b16 %v2962
        %v3519 = vunpack.c.l.b16 %v2963
        %v3520 = vunpack.c.h.b16 %v2963
        %v3521 = vunpack.c.l.b16 %v2964
        %v3522 = vunpack.c.h.b16 %v2964
        %v3523 = vunpack.c.l.b16 %v2965
        %v3524 = vunpack.c.h.b16 %v2965
        %v3525 = vunpack.c.l.b16 %v2966
        %v3526 = vunpack.c.h.b16 %v2966
        %v3527 = vunpack.c.l.b16 %v2967
        %v3528 = vunpack.c.h.b16 %v2967
        %v3529 = vunpack.c.l.b16 %v2968
        %v3530 = vunpack.c.h.b16 %v2968
        %v3531 = vunpack.c.l.b16 %v2969
        %v3532 = vunpack.c.h.b16 %v2969
        %v3533 = vunpack.c.l.b16 %v2970
        %v3534 = vunpack.c.h.b16 %v2970
        %v3535 = vunpack.c.l.b16 %v2971
        %v3536 = vunpack.c.h.b16 %v2971
        %v3537 = vunpack.c.l.b16 %v2972
        %v3538 = vunpack.c.h.b16 %v2972
        %v3539 = vunpack.c.l.b16 %v2973
        %v3540 = vunpack.c.h.b16 %v2973
        %v3541 = vunpack.c.l.b16 %v2974
        %v3542 = vunpack.c.h.b16 %v2974
        %v3543 = vunpack.c.l.b16 %v2975
        %v3544 = vunpack.c.h.b16 %v2975
        %v3545 = vunpack.c.l.b16 %v2976
        %v3546 = vunpack.c.h.b16 %v2976
        %v3547 = vunpack.c.l.b16 %v2977
        %v3548 = vunpack.c.h.b16 %v2977
        %v3549 = vunpack.c.l.b16 %v2978
        %v3550 = vunpack.c.h.b16 %v2978
        %v3551 = vunpack.c.l.b16 %v2979
        %v3552 = vunpack.c.h.b16 %v2979
        %v3553 = vunpack.c.l.b16 %v2980
        %v3554 = vunpack.c.h.b16 %v2980
        %v3555 = vunpack.c.l.b16 %v2981
        %v3556 = vunpack.c.h.b16 %v2981
        %v3557 = vunpack.c.l.b16 %v2982
        %v3558 = vunpack.c.h.b16 %v2982
        %v3559 = vunpack.c.l.b16 %v2983
        %v3560 = vunpack.c.h.b16 %v2983
        %v3561 = vunpack.c.l.b16 %v2984
        %v3562 = vunpack.c.h.b16 %v2984
        %v3563 = vunpack.c.l.b16 %v2985
        %v3564 = vunpack.c.h.b16 %v2985
        %v3565 = vunpack.c.l.b16 %v2986
        %v3566 = vunpack.c.h.b16 %v2986
        %v3567 = vunpack.c.l.b16 %v2987
        %v3568 = vunpack.c.h.b16 %v2987
        %v3569 = vunpack.c.l.b16 %v2988
        %v3570 = vunpack.c.h.b16 %v2988
        %v3571 = vunpack.c.l.b16 %v2989
        %v3572 = vunpack.c.h.b16 %v2989
        %v3573 = vunpack.c.l.b16 %v2990
        %v3574 = vunpack.c.h.b16 %v2990
        %v3575 = vpack.c.b16 %v3513, %v3511
        %v3576 = vpack.c.b16 %v3514, %v3512
        %v3577 = vpack.c.b16 %v3517, %v3515
        %v3578 = vpack.c.b16 %v3518, %v3516
        %v3579 = vpack.c.b16 %v3521, %v3519
        %v3580 = vpack.c.b16 %v3522, %v3520
        %v3581 = vpack.c.b16 %v3525, %v3523
        %v3582 = vpack.c.b16 %v3526, %v3524
        %v3583 = vpack.c.b16 %v3529, %v3527
        %v3584 = vpack.c.b16 %v3530, %v3528
        %v3585 = vpack.c.b16 %v3533, %v3531
        %v3586 = vpack.c.b16 %v3534, %v3532
        %v3587 = vpack.c.b16 %v3537, %v3535
        %v3588 = vpack.c.b16 %v3538, %v3536
        %v3589 = vpack.c.b16 %v3541, %v3539
        %v3590 = vpack.c.b16 %v3542, %v3540
        %v3591 = vpack.c.b16 %v3545, %v3543
        %v3592 = vpack.c.b16 %v3546, %v3544
        %v3593 = vpack.c.b16 %v3549, %v3547
        %v3594 = vpack.c.b16 %v3550, %v3548
        %v3595 = vpack.c.b16 %v3553, %v3551
        %v3596 = vpack.c.b16 %v3554, %v3552
        %v3597 = vpack.c.b16 %v3557, %v3555
        %v3598 = vpack.c.b16 %v3558, %v3556
        %v3599 = vpack.c.b16 %v3561, %v3559
        %v3600 = vpack.c.b16 %v3562, %v3560
        %v3601 = vpack.c.b16 %v3565, %v3563
        %v3602 = vpack.c.b16 %v3566, %v3564
        %v3603 = vpack.c.b16 %v3569, %v3567
        %v3604 = vpack.c.b16 %v3570, %v3568
        %v3605 = vpack.c.b16 %v3573, %v3571
        %v3606 = vpack.c.b16 %v3574, %v3572
        %3639 = vmatpush.bf16.msra.mxu0 %v3589
        %3640 = vmatpush.bf16.msra.mxu0 %v3587
        %3641 = vmatpush.bf16.msra.mxu0 %v3585
        %3642 = vmatpush.bf16.msra.mxu0 %v3583
        %3643 = vmatpush.bf16.msra.mxu0 %v3581
        %3644 = vmatpush.bf16.msra.mxu0 %v3579
        %3645 = vmatpush.bf16.msra.mxu0 %v3577
        %3646 = vmatpush.bf16.msra.mxu0 %v3575
        %3647 = vmatmul.bf16.gmra.mxu0 %v3047
        %v3648 = vpop.f32.mrf.mxu0
        %v3649 = vadd.f32 0.0, %v3648
        %v3650 = vpop.f32.mrf.mxu0
        %3651 = vdwg.mxu0
        %3652 = vmatpush.bf16.msra.mxu0 %v3605
        %3653 = vmatpush.bf16.msra.mxu0 %v3603
        %3654 = vmatpush.bf16.msra.mxu0 %v3601
        %3655 = vmatpush.bf16.msra.mxu0 %v3599
        %3656 = vmatpush.bf16.msra.mxu0 %v3597
        %3657 = vmatpush.bf16.msra.mxu0 %v3595
        %3658 = vmatpush.bf16.msra.mxu0 %v3593
        %3659 = vmatpush.bf16.msra.mxu0 %v3591
        %3660 = vmatmul.bf16.gmra.mxu0 %v3049
        %v3661 = vpop.f32.mrf.mxu0
        %v3662 = vadd.f32 %v3649, %v3661
        %v3663 = vpop.f32.mrf.mxu0
        %3664 = vdwg.mxu0
        %3665 = vmatpush.bf16.msra.mxu0 %v3590
        %3666 = vmatpush.bf16.msra.mxu0 %v3588
        %3667 = vmatpush.bf16.msra.mxu0 %v3586
        %3668 = vmatpush.bf16.msra.mxu0 %v3584
        %3669 = vmatpush.bf16.msra.mxu0 %v3582
        %3670 = vmatpush.bf16.msra.mxu0 %v3580
        %3671 = vmatpush.bf16.msra.mxu0 %v3578
        %3672 = vmatpush.bf16.msra.mxu0 %v3576
        %3673 = vmatmul.bf16.gmra.mxu0 %v3047
        %v3674 = vpop.f32.mrf.mxu0
        %v3675 = vadd.f32 0.0, %v3674
        %v3676 = vpop.f32.mrf.mxu0
        %3677 = vdwg.mxu0
        %3678 = vmatpush.bf16.msra.mxu0 %v3606
        %3679 = vmatpush.bf16.msra.mxu0 %v3604
        %3680 = vmatpush.bf16.msra.mxu0 %v3602
        %3681 = vmatpush.bf16.msra.mxu0 %v3600
        %3682 = vmatpush.bf16.msra.mxu0 %v3598
        %3683 = vmatpush.bf16.msra.mxu0 %v3596
        %3684 = vmatpush.bf16.msra.mxu0 %v3594
        %3685 = vmatpush.bf16.msra.mxu0 %v3592
        %3686 = vmatmul.bf16.gmra.mxu0 %v3049
        %v3687 = vpop.f32.mrf.mxu0
        %v3688 = vadd.f32 %v3675, %v3687
        %v3689 = vpop.f32.mrf.mxu0
        %3690 = vdwg.mxu0
        %v3723 = vunpack.c.l.b16 %v2991
        %v3724 = vunpack.c.h.b16 %v2991
        %v3725 = vunpack.c.l.b16 %v2992
        %v3726 = vunpack.c.h.b16 %v2992
        %v3727 = vunpack.c.l.b16 %v2993
        %v3728 = vunpack.c.h.b16 %v2993
        %v3729 = vunpack.c.l.b16 %v2994
        %v3730 = vunpack.c.h.b16 %v2994
        %v3731 = vunpack.c.l.b16 %v2995
        %v3732 = vunpack.c.h.b16 %v2995
        %v3733 = vunpack.c.l.b16 %v2996
        %v3734 = vunpack.c.h.b16 %v2996
        %v3735 = vunpack.c.l.b16 %v2997
        %v3736 = vunpack.c.h.b16 %v2997
        %v3737 = vunpack.c.l.b16 %v2998
        %v3738 = vunpack.c.h.b16 %v2998
        %v3739 = vunpack.c.l.b16 %v2999
        %v3740 = vunpack.c.h.b16 %v2999
        %v3741 = vunpack.c.l.b16 %v3000
        %v3742 = vunpack.c.h.b16 %v3000
        %v3743 = vunpack.c.l.b16 %v3001
        %v3744 = vunpack.c.h.b16 %v3001
        %v3745 = vunpack.c.l.b16 %v3002
        %v3746 = vunpack.c.h.b16 %v3002
        %v3747 = vunpack.c.l.b16 %v3003
        %v3748 = vunpack.c.h.b16 %v3003
        %v3749 = vunpack.c.l.b16 %v3004
        %v3750 = vunpack.c.h.b16 %v3004
        %v3751 = vunpack.c.l.b16 %v3005
        %v3752 = vunpack.c.h.b16 %v3005
        %v3753 = vunpack.c.l.b16 %v3006
        %v3754 = vunpack.c.h.b16 %v3006
        %v3755 = vunpack.c.l.b16 %v3007
        %v3756 = vunpack.c.h.b16 %v3007
        %v3757 = vunpack.c.l.b16 %v3008
        %v3758 = vunpack.c.h.b16 %v3008
        %v3759 = vunpack.c.l.b16 %v3009
        %v3760 = vunpack.c.h.b16 %v3009
        %v3761 = vunpack.c.l.b16 %v3010
        %v3762 = vunpack.c.h.b16 %v3010
        %v3763 = vunpack.c.l.b16 %v3011
        %v3764 = vunpack.c.h.b16 %v3011
        %v3765 = vunpack.c.l.b16 %v3012
        %v3766 = vunpack.c.h.b16 %v3012
        %v3767 = vunpack.c.l.b16 %v3013
        %v3768 = vunpack.c.h.b16 %v3013
        %v3769 = vunpack.c.l.b16 %v3014
        %v3770 = vunpack.c.h.b16 %v3014
        %v3771 = vunpack.c.l.b16 %v3015
        %v3772 = vunpack.c.h.b16 %v3015
        %v3773 = vunpack.c.l.b16 %v3016
        %v3774 = vunpack.c.h.b16 %v3016
        %v3775 = vunpack.c.l.b16 %v3017
        %v3776 = vunpack.c.h.b16 %v3017
        %v3777 = vunpack.c.l.b16 %v3018
        %v3778 = vunpack.c.h.b16 %v3018
        %v3779 = vunpack.c.l.b16 %v3019
        %v3780 = vunpack.c.h.b16 %v3019
        %v3781 = vunpack.c.l.b16 %v3020
        %v3782 = vunpack.c.h.b16 %v3020
        %v3783 = vunpack.c.l.b16 %v3021
        %v3784 = vunpack.c.h.b16 %v3021
        %v3785 = vunpack.c.l.b16 %v3022
        %v3786 = vunpack.c.h.b16 %v3022
        %v3787 = vpack.c.b16 %v3725, %v3723
        %v3788 = vpack.c.b16 %v3726, %v3724
        %v3789 = vpack.c.b16 %v3729, %v3727
        %v3790 = vpack.c.b16 %v3730, %v3728
        %v3791 = vpack.c.b16 %v3733, %v3731
        %v3792 = vpack.c.b16 %v3734, %v3732
        %v3793 = vpack.c.b16 %v3737, %v3735
        %v3794 = vpack.c.b16 %v3738, %v3736
        %v3795 = vpack.c.b16 %v3741, %v3739
        %v3796 = vpack.c.b16 %v3742, %v3740
        %v3797 = vpack.c.b16 %v3745, %v3743
        %v3798 = vpack.c.b16 %v3746, %v3744
        %v3799 = vpack.c.b16 %v3749, %v3747
        %v3800 = vpack.c.b16 %v3750, %v3748
        %v3801 = vpack.c.b16 %v3753, %v3751
        %v3802 = vpack.c.b16 %v3754, %v3752
        %v3803 = vpack.c.b16 %v3757, %v3755
        %v3804 = vpack.c.b16 %v3758, %v3756
        %v3805 = vpack.c.b16 %v3761, %v3759
        %v3806 = vpack.c.b16 %v3762, %v3760
        %v3807 = vpack.c.b16 %v3765, %v3763
        %v3808 = vpack.c.b16 %v3766, %v3764
        %v3809 = vpack.c.b16 %v3769, %v3767
        %v3810 = vpack.c.b16 %v3770, %v3768
        %v3811 = vpack.c.b16 %v3773, %v3771
        %v3812 = vpack.c.b16 %v3774, %v3772
        %v3813 = vpack.c.b16 %v3777, %v3775
        %v3814 = vpack.c.b16 %v3778, %v3776
        %v3815 = vpack.c.b16 %v3781, %v3779
        %v3816 = vpack.c.b16 %v3782, %v3780
        %v3817 = vpack.c.b16 %v3785, %v3783
        %v3818 = vpack.c.b16 %v3786, %v3784
        %3851 = vmatpush.bf16.msra.mxu0 %v3801
        %3852 = vmatpush.bf16.msra.mxu0 %v3799
        %3853 = vmatpush.bf16.msra.mxu0 %v3797
        %3854 = vmatpush.bf16.msra.mxu0 %v3795
        %3855 = vmatpush.bf16.msra.mxu0 %v3793
        %3856 = vmatpush.bf16.msra.mxu0 %v3791
        %3857 = vmatpush.bf16.msra.mxu0 %v3789
        %3858 = vmatpush.bf16.msra.mxu0 %v3787
        %3859 = vmatmul.bf16.gmra.mxu0 %v3051
        %v3860 = vpop.f32.mrf.mxu0
        %v3861 = vadd.f32 0.0, %v3860
        %v3862 = vpop.f32.mrf.mxu0
        %3863 = vdwg.mxu0
        %3864 = vmatpush.bf16.msra.mxu0 %v3817
        %3865 = vmatpush.bf16.msra.mxu0 %v3815
        %3866 = vmatpush.bf16.msra.mxu0 %v3813
        %3867 = vmatpush.bf16.msra.mxu0 %v3811
        %3868 = vmatpush.bf16.msra.mxu0 %v3809
        %3869 = vmatpush.bf16.msra.mxu0 %v3807
        %3870 = vmatpush.bf16.msra.mxu0 %v3805
        %3871 = vmatpush.bf16.msra.mxu0 %v3803
        %3872 = vmatmul.bf16.gmra.mxu0 %v3053
        %v3873 = vpop.f32.mrf.mxu0
        %v3874 = vadd.f32 %v3861, %v3873
        %v3875 = vpop.f32.mrf.mxu0
        %3876 = vdwg.mxu0
        %3877 = vmatpush.bf16.msra.mxu0 %v3802
        %3878 = vmatpush.bf16.msra.mxu0 %v3800
        %3879 = vmatpush.bf16.msra.mxu0 %v3798
        %3880 = vmatpush.bf16.msra.mxu0 %v3796
        %3881 = vmatpush.bf16.msra.mxu0 %v3794
        %3882 = vmatpush.bf16.msra.mxu0 %v3792
        %3883 = vmatpush.bf16.msra.mxu0 %v3790
        %3884 = vmatpush.bf16.msra.mxu0 %v3788
        %3885 = vmatmul.bf16.gmra.mxu0 %v3051
        %v3886 = vpop.f32.mrf.mxu0
        %v3887 = vadd.f32 0.0, %v3886
        %v3888 = vpop.f32.mrf.mxu0
        %3889 = vdwg.mxu0
        %3890 = vmatpush.bf16.msra.mxu0 %v3818
        %3891 = vmatpush.bf16.msra.mxu0 %v3816
        %3892 = vmatpush.bf16.msra.mxu0 %v3814
        %3893 = vmatpush.bf16.msra.mxu0 %v3812
        %3894 = vmatpush.bf16.msra.mxu0 %v3810
        %3895 = vmatpush.bf16.msra.mxu0 %v3808
        %3896 = vmatpush.bf16.msra.mxu0 %v3806
        %3897 = vmatpush.bf16.msra.mxu0 %v3804
        %3898 = vmatmul.bf16.gmra.mxu0 %v3053
        %v3899 = vpop.f32.mrf.mxu0
        %v3900 = vadd.f32 %v3887, %v3899
        %v3901 = vpop.f32.mrf.mxu0
        %3902 = vdwg.mxu0
        %v3903 = vrcp.pop %v3238
        %v3904 = vrcp.pop %v3264
        %v3905 = vrcp.pop %v3450
        %v3906 = vrcp.pop %v3476
        %v3907 = vrcp.pop %v3662
        %v3908 = vrcp.pop %v3688
        %v3909 = vrcp.pop %v3874
        %v3910 = vrcp.pop %v3900
        %v3911 = vperm.slane %v3903, 2
        %v3912 = vperm.slane %v3904, 2
        %v3913 = vperm.slane %v3905, 2
        %v3914 = vperm.slane %v3906, 2
        %v3915 = vperm.slane %v3907, 2
        %v3916 = vperm.slane %v3908, 2
        %v3917 = vperm.slane %v3909, 2
        %v3918 = vperm.slane %v3910, 2
        %v3919 = vmul.f32 %v3238, %v3911
        %v3920 = vmul.f32 %v3264, %v3912
        %v3921 = vmul.f32 %v3450, %v3913
        %v3922 = vmul.f32 %v3476, %v3914
        %v3923 = vmul.f32 %v3662, %v3915
        %v3924 = vmul.f32 %v3688, %v3916
        %v3925 = vmul.f32 %v3874, %v3917
        %v3926 = vmul.f32 %v3900, %v3918
        %v3935 = vrot.slane %v3920, 6
        %v3936 = vrot.slane %v3922, 6
        %v3937 = vrot.slane %v3924, 6
        %v3938 = vrot.slane %v3926, 6
        %vm3939 = vcmask 1041408
        %v3940 = vsel %vm3939, %v3919, %v3935
        %v3941 = vsel %vm3939, %v3921, %v3936
        %v3942 = vsel %vm3939, %v3923, %v3937
        %v3943 = vsel %vm3939, %v3925, %v3938
        %v3944 = vld [vmem:[%s4] sm:$0xff]
        %v3945 = vld [vmem:[%s4 + $0x8] sm:$0xff]
        %v3946 = vld [vmem:[%s5] sm:$0xff]
        %v3947 = vld [vmem:[%s5 + $0x8] sm:$0xff]
        %3949 = vset.pattern.permute.xlu0 0
        %3950 = vperm.xlu0 %3949, %v3946
        %v3951 = vpop.permute.xlu0 %3950
        %3954 = vset.pattern.permute.xlu0 0
        %3955 = vperm.xlu0 %3954, %v3947
        %v3956 = vpop.permute.xlu0 %3955
        %3958 = vst [vmem:[#allocation1] ss:$4 sm:$0xff] %v3940
        %s3959 = scalar_lea.vmem [#allocation1], 1
        %3960 = vst [vmem:[%s3959] ss:$4 sm:$0xff] %v3941
        %s3961 = scalar_lea.vmem [#allocation1], 2
        %3962 = vst [vmem:[%s3961] ss:$4 sm:$0xff] %v3942
        %s3963 = scalar_lea.vmem [#allocation1], 3
        %3964 = vst [vmem:[%s3963] ss:$4 sm:$0xff] %v3943
        %v3965 = vld.sshfl [vmem:[#allocation1] sm:$0xff pattern:$0x73625140]
        %v3966 = vld.sshfl [vmem:[#allocation1 + $0x8] sm:$0xff pattern:$0x73625140]
        %v3970 = vsel %vm279, %v3944, 0
        %v3973 = vsel %vm279, %v3945, 0
        %3975 = vmatpush.msra.mxu0 0.0
        %3976 = vmatpush.msra.mxu0 0.0
        %3977 = vmatpush.msra.mxu0 0.0
        %3978 = vmatpush.msra.mxu0 0.0
        %3979 = vmatpush.msra.mxu0 0.0
        %3980 = vmatpush.msra.mxu0 0.0
        %3981 = vmatpush.msra.mxu0 0.0
        %3982 = vmatpush.msra.mxu0 0.0
        %3983 = vmatpush.msra.mxu0 0.0
        %3984 = vmatpush.msra.mxu0 0.0
        %3985 = vmatpush.msra.mxu0 0.0
        %3986 = vmatpush.msra.mxu0 0.0
        %3987 = vmatpush.msra.mxu0 0.0
        %3988 = vmatpush.msra.mxu0 0.0
        %3989 = vmatpush.msra.mxu0 0.0
        %3990 = vmatpush.msra.mxu0 %v3965
        %3991 = vmatmul.f32.gmra.mxu0 %v3970
        %v3992 = vpop.f32.mrf.mxu0
        %v3993 = vadd.f32 %v3951, %v3992
        %3994 = vmatmul.f32.gmra.mxu0 %v3973
        %v3995 = vpop.f32.mrf.mxu0
        %v3996 = vadd.f32 %v3956, %v3995
        %3997 = vdwg.mxu0
        %3998 = vmatpush.msra.mxu0 0.0
        %3999 = vmatpush.msra.mxu0 0.0
        %4000 = vmatpush.msra.mxu0 0.0
        %4001 = vmatpush.msra.mxu0 0.0
        %4002 = vmatpush.msra.mxu0 0.0
        %4003 = vmatpush.msra.mxu0 0.0
        %4004 = vmatpush.msra.mxu0 0.0
        %4005 = vmatpush.msra.mxu0 0.0
        %4006 = vmatpush.msra.mxu0 0.0
        %4007 = vmatpush.msra.mxu0 0.0
        %4008 = vmatpush.msra.mxu0 0.0
        %4009 = vmatpush.msra.mxu0 0.0
        %4010 = vmatpush.msra.mxu0 0.0
        %4011 = vmatpush.msra.mxu0 0.0
        %4012 = vmatpush.msra.mxu0 0.0
        %4013 = vmatpush.msra.mxu0 %v3966
        %4014 = vmatmul.f32.gmra.mxu0 %v3970
        %v4015 = vpop.f32.mrf.mxu0
        %v4016 = vadd.f32 %v3951, %v4015
        %4017 = vmatmul.f32.gmra.mxu0 %v3973
        %v4018 = vpop.f32.mrf.mxu0
        %v4019 = vadd.f32 %v3956, %v4018
        %4020 = vdwg.mxu0
        %v4021 = vxor.u32 %v3996, 2147483648
        %v4022 = vxor.u32 %v4019, 2147483648
        %v4023 = vmul.f32 %v4021, 1.442695
        %v4024 = vpow.pop %v4023
        %v4025 = vmul.f32 %v4022, 1.442695
        %v4026 = vpow.pop %v4025
        %v4027 = vadd.f32 %v4024, 1.0
        %v4028 = vadd.f32 %v4026, 1.0
        %v4029 = vrcp.pop %v4027
        %v4030 = vmul.f32 %v4027, %v4029
        %v4031 = vsub.f32 1.0, %v4030
        %v4032 = vmul.f32 %v4029, %v4031
        %v4033 = vadd.f32 %v4029, %v4032
        %vm4034 = vweird.f32 %v4027
        %vm4035 = vweird.f32 %v4029
        %vm4036 = vmor %vm4034, %vm4035
        %v4037 = vsel %vm4036, %v4029, %v4033
        %v4038 = vand.u32 2147483647, %v4027
        %vm4039 = vcmp.eq.f32.partialorder %v4038, 8.507059e+37
        %v4040 = vand.u32 %v4027, 2147483648
        %v4041 = vor.u32 1.1754944e-38, %v4040
        %v4042 = vsel %vm4039, %v4041, %v4037
        %v4043 = vmul.f32 1.0, %v4042
        %v4044 = vrcp.pop %v4028
        %v4045 = vmul.f32 %v4028, %v4044
        %v4046 = vsub.f32 1.0, %v4045
        %v4047 = vmul.f32 %v4044, %v4046
        %v4048 = vadd.f32 %v4044, %v4047
        %vm4049 = vweird.f32 %v4028
        %vm4050 = vweird.f32 %v4044
        %vm4051 = vmor %vm4049, %vm4050
        %v4052 = vsel %vm4051, %v4044, %v4048
        %v4053 = vand.u32 2147483647, %v4028
        %vm4054 = vcmp.eq.f32.partialorder %v4053, 8.507059e+37
        %v4055 = vand.u32 %v4028, 2147483648
        %v4056 = vor.u32 1.1754944e-38, %v4055
        %v4057 = vsel %vm4054, %v4056, %v4052
        %v4058 = vmul.f32 1.0, %v4057
        %v4059 = vmul.f32 %v3993, %v4043
        %v4060 = vmul.f32 %v4016, %v4058
        %v4061 = vadd.f32 %v252, %v4059
        %v4062 = vadd.f32 %v253, %v4060
        %4063 = vst [vmem:[%s244] sm:$0xff] %v4061
        %4064 = vst [vmem:[%s244 + $0x8] sm:$0xff] %v4062
        %s4065 = sand.u32 %s159, 1
        %s4066 = scalar_lea.sflag [#allocation3], %s4065
        %s4067 = sand.u32 %s159, 1
        %s4068 = smul.addr %s4067, 16
        %s4069 = scalar_lea.vmem [#allocation2], %s4068
        // Predicated region
        $region45: #{tpu_custom_call.1} parent=43 // pred_check
          %p4070 = pneg %p169
        $region46: #{tpu_custom_call.1} parent=43 // pred_check_branch
          %4072 = sbr.rel (%p4070) target = $region48
        $region47: #{tpu_custom_call.1} parent=43 // pred_region
          %4074 = vsyncadd %s4066, 0
          %s4075 = smul.addr %s20, 2
          %s4076 = smul.addr %s4075, 8
          %s4077 = scalar_lea.hbm %s6, %s4076
          %s4079 = sshll.u32 %s4069, 4
          %s4080 = int_to_ptr.vmem [resolvable:$true] %s4079
          %s4081 = sshll.u32 %s4077, 4
          %s4082 = int_to_ptr.hbm [resolvable:$true] %s4081
          %4084 = dma.vmem_to_hbm [thread:$0]  %s4080, 256, %s4082, %s4066
        $region48: #{tpu_custom_call.1} parent=43 // pred_fallthru
          _
      $region44: #{tpu_custom_call.1} parent=5 // pred_fallthru
        _
      %p4085 = scmp.le.s32.totalorder 2, %s15
      // Predicated region
      $region49: #{tpu_custom_call.1} parent=5 // pred_check
        %p4086 = pneg %p4085
      $region50: #{tpu_custom_call.1} parent=5 // pred_check_branch
        %4088 = sbr.rel (%p4086) target = $region52
      $region51: #{tpu_custom_call.1} parent=5 // pred_region
        %s4089 = ssub.s32 %s15, 2
        // Predicated region
        $region53: #{tpu_custom_call.1} parent=51 // pred_check
          %p4090 = pneg %p175
        $region54: #{tpu_custom_call.1} parent=51 // pred_check_branch
          %4092 = sbr.rel (%p4090) target = $region56
        $region55: #{tpu_custom_call.1} parent=51 // pred_region
          %s4093 = sand.u32 %s160, 1
          %s4094 = scalar_lea.sflag [#allocation3], %s4093
          %s4095 = sand.u32 %s160, 1
          %s4096 = smul.addr %s4095, 16
          %s4097 = scalar_lea.vmem [#allocation2], %s4096
          %4099 = dma.done %s4094, 256
        $region56: #{tpu_custom_call.1} parent=51 // pred_fallthru
          _
      $region52: #{tpu_custom_call.1} parent=5 // pred_fallthru
        _
    $region6: #{tpu_custom_call.1} parent=1 // loop_footer
      %s19 = sadd.s32 1, %s15
    $region7: #{tpu_custom_call.1} parent=1 // loop_footer_branch
      %14 = sbr.rel target = $region3
    $region8: #{tpu_custom_call.1} parent=1 // loop_exit
      _
    %4100 = vsyncpa [#allocation3], 1
    %s4101 = scalar_lea.sflag [#allocation3], 1
    %4102 = vsyncpa %s4101, 1

</llo_original>
